<compile_context>
chip_gen: v6e
topology: v6e:2x2x1
jax: 0.10.0
libtpu: 0.0.40
codegen_flags: <defaults>
</compile_context>

<pallas_src>
import functools
import math

import jax
import jax.numpy as jnp
import numpy as np
from jax import lax
from jax.experimental import pallas as pl
from jax.experimental.pallas import tpu as pltpu


def _round_up(x, m):
    return ((x + m - 1) // m) * m


# ------------------------------------------------------------------ kernel ---
def _grouped_mhsa_kernel(x_ref, wqkv_ref, w0_ref, o_ref, ocat_ref, *,
                         num_heads, head_dim, l_pad, l_valid):
    """One grid step = TG position-groups.

    x block is (TG, L*D) (lane-dense) or (TG, L, D) bf16; wqkv (D, 3D) bf16 with
    the 1/sqrt(Dh) scale folded into the Wq columns; w0 (D, D) bf16; o block has
    the same layout as x, bf16.  `l_valid` is the reference's max_count; key
    slots >= l_valid exist only for tiling and are masked out.  Key slots
    < l_valid (including the reference's own zero padding) participate in the
    softmax, matching the PyTorch module which applies no mask.
    """
    TG = x_ref.shape[0]
    D = num_heads * head_dim
    L = l_pad

    # Fused QKV projection: one (TG*L, D) x (D, 3D) MXU pass, f32 accumulation,
    # then a single cast so every later matmul runs with bf16 operands.
    x2 = x_ref[...].reshape(TG * L, D)
    qkv = jnp.dot(x2, wqkv_ref[...], preferred_element_type=jnp.float32)
    qkv = qkv.astype(jnp.bfloat16)                                # (TG*L, 3D)

    if l_valid < L:
        key_keep = lax.broadcasted_iota(jnp.int32, (1, 1, L), 2) < l_valid

    # TODO(synk): heads stay a static python loop; folding them into the einsum
    # batch axis needs a (TG, L, H, Dh) -> (TG, H, L, Dh) cross-sublane transpose.
    for h in range(num_heads):
        qh = qkv[:, h * head_dim:(h + 1) * head_dim].reshape(TG, L, head_dim)
        kh = qkv[:, D + h * head_dim:D + (h + 1) * head_dim].reshape(TG, L, head_dim)
        vh = qkv[:, 2 * D + h * head_dim:2 * D + (h + 1) * head_dim].reshape(TG, L, head_dim)

        s = jnp.einsum("gld,gmd->glm", qh, kh,
                       preferred_element_type=jnp.float32)        # (TG, L, L) f32
        if l_valid < L:
            s = jnp.where(key_keep, s, -1e30)

        m = jnp.max(s, axis=-1, keepdims=True)
        e = jnp.exp(s - m)
        denom = jnp.sum(e, axis=-1, keepdims=True)
        oh = jnp.einsum("glm,gmd->gld", e.astype(jnp.bfloat16), vh,
                        preferred_element_type=jnp.float32)       # (TG, L, Dh)
        # normalize after PV: L*Dh multiplies instead of L*L, via the EUP
        oh = oh * pl.reciprocal(denom, approx=True)
        ocat_ref[:, :, h * head_dim:(h + 1) * head_dim] = oh.astype(jnp.bfloat16)

    # Single W0 matmul with contraction K = D (instead of H matmuls with K = Dh).
    out = jnp.dot(ocat_ref[...].reshape(TG * L, D), w0_ref[...],
                  preferred_element_type=jnp.float32)
    o_ref[...] = out.astype(o_ref.dtype).reshape(o_ref.shape)


def _vmem_limit_bytes(tg, l_pad, d):
    tile = tg * l_pad * d
    est = (4 * tile * 2                 # x + out tiles, double-buffered, bf16
           + (3 * d * d + d * d) * 2    # fused qkv + w0 weights, bf16
           + tile * 2                   # head-concat scratch, bf16
           + 3 * tile * 4               # qkv, f32
           + tg * l_pad * l_pad * 4     # per-head score tile, f32
           + 2 * tile * 4)              # misc f32 temporaries
    # raise v5e's 16 MiB default; stay well under v7x's 64 MiB physical VMEM
    return int(min(100 * 2**20, max(32 * 2**20, 2 * est)))


def grouped_self_attention(x_grouped, wqkv, w0, num_heads, *, l_valid, tg,
                           flat_io=True, single_buffer_weights=True):
    """Pallas MHSA + W0 over (G_pad, L_pad, D) grouped embeddings -> bf16 output."""
    G_pad, L, D = x_grouped.shape
    assert G_pad % tg == 0
    head_dim = D // num_heads
    kernel = functools.partial(_grouped_mhsa_kernel, num_heads=num_heads,
                               head_dim=head_dim, l_pad=L, l_valid=l_valid)

    # Weights never change across grid steps -> single buffer frees VMEM.
    wkw = {"pipeline_mode": pl.Buffered(1)} if single_buffer_weights else {}

    if flat_io:
        # Lane-dense boundary: flatten (L, D) into one last dim (multiple of 128).
        x_in = x_grouped.reshape(G_pad, L * D)
        data_block, data_map = (tg, L * D), (lambda g: (g, 0))
        out_shape = jax.ShapeDtypeStruct((G_pad, L * D), jnp.bfloat16)
    else:
        x_in = x_grouped
        data_block, data_map = (tg, L, D), (lambda g: (g, 0, 0))
        out_shape = jax.ShapeDtypeStruct((G_pad, L, D), jnp.bfloat16)

    out = pl.pallas_call(
        kernel,
        out_shape=out_shape,
        grid=(G_pad // tg,),
        in_specs=[
            pl.BlockSpec(data_block, data_map),
            pl.BlockSpec((D, 3 * D), lambda g: (0, 0), **wkw),
            pl.BlockSpec((D, D), lambda g: (0, 0), **wkw),
        ],
        out_specs=pl.BlockSpec(data_block, data_map),
        scratch_shapes=[pltpu.VMEM((tg, L, D), jnp.bfloat16)],
        compiler_params=pltpu.CompilerParams(
            dimension_semantics=("parallel",),
            vmem_limit_bytes=_vmem_limit_bytes(tg, L, D)),
    )(x_in, wqkv, w0)
    return out.reshape(G_pad, L, D)


# ---------------------------------------------------------- host-side glue ---
_GROUPING_CACHE = {}


def _build_group_indices(pos):
    """Vectorized port of the reference's index bookkeeping (positions only)."""
    B, S = pos.shape
    valid = pos != -1
    b_idx, s_idx = np.nonzero(valid)                 # row-major == reference scan
    g_idx = np.zeros((B, S), np.int32)
    j_idx = np.zeros((B, S), np.int32)
    if b_idx.size == 0:
        return g_idx, j_idx, valid, 0, 1

    p_val = pos[b_idx, s_idx].astype(np.int64)
    p_min = int(p_val.min())
    key = b_idx.astype(np.int64) * np.int64(int(p_val.max()) - p_min + 1) + (p_val - p_min)
    _, first_idx, inverse = np.unique(key, return_index=True, return_inverse=True)
    inverse = inverse.reshape(-1)
    # group ids in order of first appearance (matches the reference's combos dict)
    order = np.argsort(first_idx, kind="stable")
    rank = np.empty_like(order)
    rank[order] = np.arange(order.size)
    group_id = rank[inverse]

    # slot within group = running occurrence count in scan order
    by_group = np.argsort(group_id, kind="stable")
    gsorted = group_id[by_group]
    occ_sorted = np.arange(gsorted.size) - np.searchsorted(gsorted, gsorted, side="left")
    slot = np.empty_like(occ_sorted)
    slot[by_group] = occ_sorted

    G = int(order.size)
    L = int(slot.max()) + 1
    g_idx[b_idx, s_idx] = group_id
    j_idx[b_idx, s_idx] = slot
    return g_idx, j_idx, valid, G, L


def _group_indices(positions_np):
    key = (positions_np.shape, positions_np.dtype.str, positions_np.tobytes())
    hit = _GROUPING_CACHE.get(key)
    if hit is None:
        hit = _build_group_indices(positions_np)
        _GROUPING_CACHE[key] = hit
    return hit


def _choose_tg(g8):
    """Groups per grid step: amortize per-step cost; keep >=2 steps (v7x 2 TCs)."""
    tg = min(64, g8)
    if g8 >= 16 and g8 // tg < 2:
        tg = 8 * max(1, (g8 // 2) // 8)
    return tg


def positionwise_self_attention(embeddings, positions, params, num_heads):
    """Full forward: group by position -> Pallas MHSA + W0 -> scatter back."""
    emb = jnp.asarray(embeddings, jnp.float32)       # stays on device
    B, S, D = emb.shape
    assert D % num_heads == 0
    pos_np = np.asarray(positions)
    g_idx, j_idx, valid, G, L = _group_indices(pos_np)
    if G == 0:
        return jnp.zeros((B, S, D), jnp.float32), None, None

    L_pad = _round_up(L, 8)
    G8 = _round_up(G, 8)
    TG = _choose_tg(G8)
    G_pad = _round_up(G8, TG)

    # Device-side grouping: valid (b, s) tokens scatter to row g*L_pad + slot of
    # a flat (G_pad*L_pad, D) tensor; invalid tokens go to a dump row (dropped).
    dump = G_pad * L_pad
    tgt = np.where(valid, g_idx * L_pad + j_idx, dump).reshape(-1).astype(np.int32)
    emb_flat = emb.reshape(B * S, D).astype(jnp.bfloat16)
    grouped_flat = jnp.zeros((dump + 1, D), jnp.bfloat16).at[jnp.asarray(tgt)].set(emb_flat)
    x_grouped = grouped_flat[:dump].reshape(G_pad, L_pad, D)

    # bf16 weights; fold the 1/sqrt(head_dim) attention scale into Wq's columns.
    scale = 1.0 / math.sqrt(D // num_heads)
    wqkv = jnp.concatenate([params["wq"] * scale, params["wk"], params["wv"]],
                           axis=1).astype(jnp.bfloat16)
    w0 = params["w0"].astype(jnp.bfloat16)

    # Try the fully optimized config (lane-dense flattened blocks + single-buffered
    # weights) first; fall back to progressively safer configs on lowering failure.
    attn, last_err = None, None
    for flat_io, single_buf in ((True, True), (True, False), (False, False)):
        try:
            attn = grouped_self_attention(x_grouped, wqkv, w0, num_heads,
                                          l_valid=L, tg=TG, flat_io=flat_io,
                                          single_buffer_weights=single_buf)
            break
        except Exception as e:                       # noqa: BLE001
            attn, last_err = None, e
    if attn is None:
        raise last_err

    # Scatter back to (B, S, D); tokens with position == -1 stay exactly zero.
    attn_flat = attn.reshape(G_pad * L_pad, D)
    gather_idx = np.where(valid, g_idx * L_pad + j_idx, 0).astype(np.int32)
    gathered = attn_flat[jnp.asarray(gather_idx)]                  # (B, S, D) bf16
    output = jnp.where(jnp.asarray(valid)[..., None], gathered, 0).astype(jnp.float32)

    attn_g = attn[:G, :L].astype(jnp.float32)
    grouped_g = x_grouped[:G, :L].astype(jnp.float32)
    return output, attn_g, grouped_g


# -------------------------------------------------------- pure-JAX reference ---
def _ref_grouped_attention(x, wq, wk, wv, w0, num_heads):
    G, L, D = x.shape
    Dh = D // num_heads
    q = (x @ wq).reshape(G, L, num_heads, Dh)
    k = (x @ wk).reshape(G, L, num_heads, Dh)
    v = (x @ wv).reshape(G, L, num_heads, Dh)
    s = jnp.einsum("glhd,gmhd->ghlm", q, k) / math.sqrt(Dh)
    p = jax.nn.softmax(s, axis=-1)
    o = jnp.einsum("ghlm,gmhd->glhd", p, v).reshape(G, L, D)
    return o @ w0


# --------------------------------------------------------------------- main ---
if __name__ == "__main__":
    B, S, D, H = 2, 8, 32, 4
    key = jax.random.PRNGKey(0)
    k_emb, k_q, k_k, k_v, k_0 = jax.random.split(key, 5)

    embeddings = jax.random.normal(k_emb, (B, S, D), dtype=jnp.float32)
    # deterministic positions with repeats and -1 padding
    positions = jnp.array([[0, 0, 1, 1, 2, -1, 2, 0],
                           [5, 5, 5, -1, 7, 7, 0, -1]], dtype=jnp.int32)

    # MultiHeadSelfAttention assumed to be bias-free x @ Wq/Wk/Wv scaled-dot-product
    # attention with no internal output projection (W0 is the only output proj).
    # TODO(synk): exact MultiHeadSelfAttention definition not provided by the spec.
    lin_bound = 1.0 / math.sqrt(D)          # nn.Linear-style init for Wq/Wk/Wv
    kaiming_bound = math.sqrt(6.0 / D)      # kaiming_uniform_ for W0
    params = {
        "wq": jax.random.uniform(k_q, (D, D), jnp.float32, -lin_bound, lin_bound),
        "wk": jax.random.uniform(k_k, (D, D), jnp.float32, -lin_bound, lin_bound),
        "wv": jax.random.uniform(k_v, (D, D), jnp.float32, -lin_bound, lin_bound),
        "w0": jax.random.uniform(k_0, (D, D), jnp.float32,
                                 -kaiming_bound, kaiming_bound),
    }

    output, attn_kernel, grouped = positionwise_self_attention(
        embeddings, positions, params, H)
    output = jax.block_until_ready(output)

    # Correctness: pure-JAX f32 reference on the unpadded grouped tensor, fed the
    # same bf16-rounded inputs the kernel consumes (kernel matmuls run in bf16
    # with f32 accumulation; output is bf16, so tolerances are bf16-scale).
    def _bf16_round(a):
        return jnp.asarray(a, jnp.float32).astype(jnp.bfloat16).astype(jnp.float32)

    attn_ref = _ref_grouped_attention(grouped,               # already bf16-rounded
                                      _bf16_round(params["wq"]),
                                      _bf16_round(params["wk"]),
                                      _bf16_round(params["wv"]),
                                      _bf16_round(params["w0"]), H)
    np.testing.assert_allclose(np.asarray(attn_kernel, dtype=np.float32),
                               np.asarray(attn_ref, dtype=np.float32),
                               rtol=3e-2, atol=3e-2)
    assert output.shape == (B, S, D)
    # tokens with position == -1 must be exactly zero
    assert float(jnp.abs(output[0, 5]).max()) == 0.0
    assert float(jnp.abs(output[1, 3]).max()) == 0.0

    print("KERNEL_OK")
</pallas_src>

<mosaic_0001>
module attributes {stable_mosaic.version = 11 : i64} {
  func.func @_grouped_mhsa_kernel(%arg0: i32, %arg1: memref<8x256xbf16, #tpu.memory_space<vmem>>, %arg2: memref<32x96xbf16, #tpu.memory_space<vmem>>, %arg3: memref<32x32xbf16, #tpu.memory_space<vmem>>, %arg4: memref<8x256xbf16, #tpu.memory_space<vmem>>, %arg5: memref<8x8x32xbf16, #tpu.memory_space<vmem>>) attributes {dimension_semantics = [#tpu.dimension_semantics<parallel>], iteration_bounds = array<i64: 1>, scalar_prefetch = 0 : i64, scratch_operands = 1 : i64, tpu.core_type = #tpu.core_type<tc>, window_params = [{transform_indices = @transform_0, window_bounds = array<i64: 8, 256>}, {pipeline_mode = #tpu.pipeline_mode<synchronous>, transform_indices = @transform_1, window_bounds = array<i64: 32, 96>}, {pipeline_mode = #tpu.pipeline_mode<synchronous>, transform_indices = @transform_2, window_bounds = array<i64: 32, 32>}, {transform_indices = @transform_3, window_bounds = array<i64: 8, 256>}]} {
    %c0 = arith.constant 0 : index
    %c0_0 = arith.constant 0 : index
    %0 = vector.load %arg1[%c0, %c0_0] : memref<8x256xbf16, #tpu.memory_space<vmem>>, vector<8x256xbf16>
    %1 = vector.shape_cast %0 : vector<8x256xbf16> to vector<64x32xbf16>
    %c0_1 = arith.constant 0 : index
    %c0_2 = arith.constant 0 : index
    %2 = vector.load %arg2[%c0_1, %c0_2] : memref<32x96xbf16, #tpu.memory_space<vmem>>, vector<32x96xbf16>
    %cst = arith.constant dense<0.000000e+00> : vector<64x96xf32>
    %3 = tpu.matmul %1, %2, %cst {dimension_numbers = #tpu.dot_dimension_numbers<[1], [0], [0], [1], [0, 0, 1, 1], [], []>} : vector<64x32xbf16>, vector<32x96xbf16>, vector<64x96xf32> -> vector<64x96xf32>
    %4 = arith.truncf %3 : vector<64x96xf32> to vector<64x96xbf16>
    %5 = tpu.iota {dimensions = array<i32: 2>} : vector<1x1x8xi32>
    %c3_i32 = arith.constant 3 : i32
    %6 = vector.broadcast %c3_i32 : i32 to vector<1x1x8xi32>
    %7 = arith.cmpi slt, %5, %6 : vector<1x1x8xi32>
    %8 = vector.extract_strided_slice %4 {offsets = [0, 0], sizes = [64, 8], strides = [1, 1]} : vector<64x96xbf16> to vector<64x8xbf16>
    %9 = vector.shape_cast %8 : vector<64x8xbf16> to vector<8x8x8xbf16>
    %10 = vector.extract_strided_slice %4 {offsets = [0, 32], sizes = [64, 8], strides = [1, 1]} : vector<64x96xbf16> to vector<64x8xbf16>
    %11 = vector.shape_cast %10 : vector<64x8xbf16> to vector<8x8x8xbf16>
    %12 = vector.extract_strided_slice %4 {offsets = [0, 64], sizes = [64, 8], strides = [1, 1]} : vector<64x96xbf16> to vector<64x8xbf16>
    %13 = vector.shape_cast %12 : vector<64x8xbf16> to vector<8x8x8xbf16>
    "tpu.trace_start"() <{level = 10 : i32, message = "gld,gmd->glm"}> : () -> ()
    %cst_3 = arith.constant dense<0.000000e+00> : vector<8x8x8xf32>
    %14 = tpu.matmul %9, %11, %cst_3 {dimension_numbers = #tpu.dot_dimension_numbers<[2], [2], [1], [1], [0, 0, 0, 1, 1, 1], [0], [0]>} : vector<8x8x8xbf16>, vector<8x8x8xbf16>, vector<8x8x8xf32> -> vector<8x8x8xf32>
    %cst_4 = arith.constant -1.000000e+30 : f32
    "tpu.trace_stop"() : () -> ()
    %15 = vector.shape_cast %7 : vector<1x1x8xi1> to vector<1x1x8xi1>
    %16 = vector.broadcast %15 : vector<1x1x8xi1> to vector<8x8x8xi1>
    %17 = vector.broadcast %cst_4 : f32 to vector<8x8x8xf32>
    %18 = arith.select %16, %14, %17 : vector<8x8x8xi1>, vector<8x8x8xf32>
    %cst_5 = arith.constant dense<0xFF800000> : vector<8x8xf32>
    %19 = vector.multi_reduction <maximumf>, %18, %cst_5 [2] : vector<8x8x8xf32> to vector<8x8xf32>
    %20 = vector.shape_cast %19 : vector<8x8xf32> to vector<8x8x1xf32>
    %21 = vector.broadcast %20 : vector<8x8x1xf32> to vector<8x8x8xf32>
    %22 = arith.subf %18, %21 : vector<8x8x8xf32>
    %23 = math.exp %22 : vector<8x8x8xf32>
    %cst_6 = arith.constant dense<0.000000e+00> : vector<8x8xf32>
    %24 = vector.multi_reduction <add>, %23, %cst_6 [2] : vector<8x8x8xf32> to vector<8x8xf32>
    %25 = vector.shape_cast %24 : vector<8x8xf32> to vector<8x8x1xf32>
    %26 = arith.truncf %23 : vector<8x8x8xf32> to vector<8x8x8xbf16>
    "tpu.trace_start"() <{level = 10 : i32, message = "glm,gmd->gld"}> : () -> ()
    %cst_7 = arith.constant dense<0.000000e+00> : vector<8x8x8xf32>
    %27 = tpu.matmul %26, %13, %cst_7 {dimension_numbers = #tpu.dot_dimension_numbers<[2], [1], [1], [2], [0, 0, 0, 1, 1, 2], [0], [0]>} : vector<8x8x8xbf16>, vector<8x8x8xbf16>, vector<8x8x8xf32> -> vector<8x8x8xf32>
    "tpu.trace_stop"() : () -> ()
    %28 = tpu.reciprocal %25 {approx = true} : vector<8x8x1xf32> -> vector<8x8x1xf32>
    %29 = vector.broadcast %28 : vector<8x8x1xf32> to vector<8x8x8xf32>
    %30 = arith.mulf %27, %29 : vector<8x8x8xf32>
    %31 = arith.truncf %30 : vector<8x8x8xf32> to vector<8x8x8xbf16>
    %c0_8 = arith.constant 0 : index
    %c0_9 = arith.constant 0 : index
    %c0_10 = arith.constant 0 : index
    %32 = vector.load %arg5[%c0_8, %c0_9, %c0_10] : memref<8x8x32xbf16, #tpu.memory_space<vmem>>, vector<8x8x8xbf16>
    tpu.vector_store %arg5[%c0_8, %c0_9, %c0_10], %31 {strides = array<i32>} : memref<8x8x32xbf16, #tpu.memory_space<vmem>>, vector<8x8x8xbf16>,
    %33 = vector.extract_strided_slice %4 {offsets = [0, 8], sizes = [64, 8], strides = [1, 1]} : vector<64x96xbf16> to vector<64x8xbf16>
    %34 = vector.shape_cast %33 : vector<64x8xbf16> to vector<8x8x8xbf16>
    %35 = vector.extract_strided_slice %4 {offsets = [0, 40], sizes = [64, 8], strides = [1, 1]} : vector<64x96xbf16> to vector<64x8xbf16>
    %36 = vector.shape_cast %35 : vector<64x8xbf16> to vector<8x8x8xbf16>
    %37 = vector.extract_strided_slice %4 {offsets = [0, 72], sizes = [64, 8], strides = [1, 1]} : vector<64x96xbf16> to vector<64x8xbf16>
    %38 = vector.shape_cast %37 : vector<64x8xbf16> to vector<8x8x8xbf16>
    "tpu.trace_start"() <{level = 10 : i32, message = "gld,gmd->glm"}> : () -> ()
    %cst_11 = arith.constant dense<0.000000e+00> : vector<8x8x8xf32>
    %39 = tpu.matmul %34, %36, %cst_11 {dimension_numbers = #tpu.dot_dimension_numbers<[2], [2], [1], [1], [0, 0, 0, 1, 1, 1], [0], [0]>} : vector<8x8x8xbf16>, vector<8x8x8xbf16>, vector<8x8x8xf32> -> vector<8x8x8xf32>
    %cst_12 = arith.constant -1.000000e+30 : f32
    "tpu.trace_stop"() : () -> ()
    %40 = vector.shape_cast %7 : vector<1x1x8xi1> to vector<1x1x8xi1>
    %41 = vector.broadcast %40 : vector<1x1x8xi1> to vector<8x8x8xi1>
    %42 = vector.broadcast %cst_12 : f32 to vector<8x8x8xf32>
    %43 = arith.select %41, %39, %42 : vector<8x8x8xi1>, vector<8x8x8xf32>
    %cst_13 = arith.constant dense<0xFF800000> : vector<8x8xf32>
    %44 = vector.multi_reduction <maximumf>, %43, %cst_13 [2] : vector<8x8x8xf32> to vector<8x8xf32>
    %45 = vector.shape_cast %44 : vector<8x8xf32> to vector<8x8x1xf32>
    %46 = vector.broadcast %45 : vector<8x8x1xf32> to vector<8x8x8xf32>
    %47 = arith.subf %43, %46 : vector<8x8x8xf32>
    %48 = math.exp %47 : vector<8x8x8xf32>
    %cst_14 = arith.constant dense<0.000000e+00> : vector<8x8xf32>
    %49 = vector.multi_reduction <add>, %48, %cst_14 [2] : vector<8x8x8xf32> to vector<8x8xf32>
    %50 = vector.shape_cast %49 : vector<8x8xf32> to vector<8x8x1xf32>
    %51 = arith.truncf %48 : vector<8x8x8xf32> to vector<8x8x8xbf16>
    "tpu.trace_start"() <{level = 10 : i32, message = "glm,gmd->gld"}> : () -> ()
    %cst_15 = arith.constant dense<0.000000e+00> : vector<8x8x8xf32>
    %52 = tpu.matmul %51, %38, %cst_15 {dimension_numbers = #tpu.dot_dimension_numbers<[2], [1], [1], [2], [0, 0, 0, 1, 1, 2], [0], [0]>} : vector<8x8x8xbf16>, vector<8x8x8xbf16>, vector<8x8x8xf32> -> vector<8x8x8xf32>
    "tpu.trace_stop"() : () -> ()
    %53 = tpu.reciprocal %50 {approx = true} : vector<8x8x1xf32> -> vector<8x8x1xf32>
    %54 = vector.broadcast %53 : vector<8x8x1xf32> to vector<8x8x8xf32>
    %55 = arith.mulf %52, %54 : vector<8x8x8xf32>
    %56 = arith.truncf %55 : vector<8x8x8xf32> to vector<8x8x8xbf16>
    %c0_16 = arith.constant 0 : index
    %c0_17 = arith.constant 0 : index
    %c8 = arith.constant 8 : index
    %57 = vector.load %arg5[%c0_16, %c0_17, %c8] : memref<8x8x32xbf16, #tpu.memory_space<vmem>>, vector<8x8x8xbf16>
    tpu.vector_store %arg5[%c0_16, %c0_17, %c8], %56 {strides = array<i32>} : memref<8x8x32xbf16, #tpu.memory_space<vmem>>, vector<8x8x8xbf16>,
    %58 = vector.extract_strided_slice %4 {offsets = [0, 16], sizes = [64, 8], strides = [1, 1]} : vector<64x96xbf16> to vector<64x8xbf16>
    %59 = vector.shape_cast %58 : vector<64x8xbf16> to vector<8x8x8xbf16>
    %60 = vector.extract_strided_slice %4 {offsets = [0, 48], sizes = [64, 8], strides = [1, 1]} : vector<64x96xbf16> to vector<64x8xbf16>
    %61 = vector.shape_cast %60 : vector<64x8xbf16> to vector<8x8x8xbf16>
    %62 = vector.extract_strided_slice %4 {offsets = [0, 80], sizes = [64, 8], strides = [1, 1]} : vector<64x96xbf16> to vector<64x8xbf16>
    %63 = vector.shape_cast %62 : vector<64x8xbf16> to vector<8x8x8xbf16>
    "tpu.trace_start"() <{level = 10 : i32, message = "gld,gmd->glm"}> : () -> ()
    %cst_18 = arith.constant dense<0.000000e+00> : vector<8x8x8xf32>
    %64 = tpu.matmul %59, %61, %cst_18 {dimension_numbers = #tpu.dot_dimension_numbers<[2], [2], [1], [1], [0, 0, 0, 1, 1, 1], [0], [0]>} : vector<8x8x8xbf16>, vector<8x8x8xbf16>, vector<8x8x8xf32> -> vector<8x8x8xf32>
    %cst_19 = arith.constant -1.000000e+30 : f32
    "tpu.trace_stop"() : () -> ()
    %65 = vector.shape_cast %7 : vector<1x1x8xi1> to vector<1x1x8xi1>
    %66 = vector.broadcast %65 : vector<1x1x8xi1> to vector<8x8x8xi1>
    %67 = vector.broadcast %cst_19 : f32 to vector<8x8x8xf32>
    %68 = arith.select %66, %64, %67 : vector<8x8x8xi1>, vector<8x8x8xf32>
    %cst_20 = arith.constant dense<0xFF800000> : vector<8x8xf32>
    %69 = vector.multi_reduction <maximumf>, %68, %cst_20 [2] : vector<8x8x8xf32> to vector<8x8xf32>
    %70 = vector.shape_cast %69 : vector<8x8xf32> to vector<8x8x1xf32>
    %71 = vector.broadcast %70 : vector<8x8x1xf32> to vector<8x8x8xf32>
    %72 = arith.subf %68, %71 : vector<8x8x8xf32>
    %73 = math.exp %72 : vector<8x8x8xf32>
    %cst_21 = arith.constant dense<0.000000e+00> : vector<8x8xf32>
    %74 = vector.multi_reduction <add>, %73, %cst_21 [2] : vector<8x8x8xf32> to vector<8x8xf32>
    %75 = vector.shape_cast %74 : vector<8x8xf32> to vector<8x8x1xf32>
    %76 = arith.truncf %73 : vector<8x8x8xf32> to vector<8x8x8xbf16>
    "tpu.trace_start"() <{level = 10 : i32, message = "glm,gmd->gld"}> : () -> ()
    %cst_22 = arith.constant dense<0.000000e+00> : vector<8x8x8xf32>
    %77 = tpu.matmul %76, %63, %cst_22 {dimension_numbers = #tpu.dot_dimension_numbers<[2], [1], [1], [2], [0, 0, 0, 1, 1, 2], [0], [0]>} : vector<8x8x8xbf16>, vector<8x8x8xbf16>, vector<8x8x8xf32> -> vector<8x8x8xf32>
    "tpu.trace_stop"() : () -> ()
    %78 = tpu.reciprocal %75 {approx = true} : vector<8x8x1xf32> -> vector<8x8x1xf32>
    %79 = vector.broadcast %78 : vector<8x8x1xf32> to vector<8x8x8xf32>
    %80 = arith.mulf %77, %79 : vector<8x8x8xf32>
    %81 = arith.truncf %80 : vector<8x8x8xf32> to vector<8x8x8xbf16>
    %c0_23 = arith.constant 0 : index
    %c0_24 = arith.constant 0 : index
    %c16 = arith.constant 16 : index
    %82 = vector.load %arg5[%c0_23, %c0_24, %c16] : memref<8x8x32xbf16, #tpu.memory_space<vmem>>, vector<8x8x8xbf16>
    tpu.vector_store %arg5[%c0_23, %c0_24, %c16], %81 {strides = array<i32>} : memref<8x8x32xbf16, #tpu.memory_space<vmem>>, vector<8x8x8xbf16>,
    %83 = vector.extract_strided_slice %4 {offsets = [0, 24], sizes = [64, 8], strides = [1, 1]} : vector<64x96xbf16> to vector<64x8xbf16>
    %84 = vector.shape_cast %83 : vector<64x8xbf16> to vector<8x8x8xbf16>
    %85 = vector.extract_strided_slice %4 {offsets = [0, 56], sizes = [64, 8], strides = [1, 1]} : vector<64x96xbf16> to vector<64x8xbf16>
    %86 = vector.shape_cast %85 : vector<64x8xbf16> to vector<8x8x8xbf16>
    %87 = vector.extract_strided_slice %4 {offsets = [0, 88], sizes = [64, 8], strides = [1, 1]} : vector<64x96xbf16> to vector<64x8xbf16>
    %88 = vector.shape_cast %87 : vector<64x8xbf16> to vector<8x8x8xbf16>
    "tpu.trace_start"() <{level = 10 : i32, message = "gld,gmd->glm"}> : () -> ()
    %cst_25 = arith.constant dense<0.000000e+00> : vector<8x8x8xf32>
    %89 = tpu.matmul %84, %86, %cst_25 {dimension_numbers = #tpu.dot_dimension_numbers<[2], [2], [1], [1], [0, 0, 0, 1, 1, 1], [0], [0]>} : vector<8x8x8xbf16>, vector<8x8x8xbf16>, vector<8x8x8xf32> -> vector<8x8x8xf32>
    %cst_26 = arith.constant -1.000000e+30 : f32
    "tpu.trace_stop"() : () -> ()
    %90 = vector.shape_cast %7 : vector<1x1x8xi1> to vector<1x1x8xi1>
    %91 = vector.broadcast %90 : vector<1x1x8xi1> to vector<8x8x8xi1>
    %92 = vector.broadcast %cst_26 : f32 to vector<8x8x8xf32>
    %93 = arith.select %91, %89, %92 : vector<8x8x8xi1>, vector<8x8x8xf32>
    %cst_27 = arith.constant dense<0xFF800000> : vector<8x8xf32>
    %94 = vector.multi_reduction <maximumf>, %93, %cst_27 [2] : vector<8x8x8xf32> to vector<8x8xf32>
    %95 = vector.shape_cast %94 : vector<8x8xf32> to vector<8x8x1xf32>
    %96 = vector.broadcast %95 : vector<8x8x1xf32> to vector<8x8x8xf32>
    %97 = arith.subf %93, %96 : vector<8x8x8xf32>
    %98 = math.exp %97 : vector<8x8x8xf32>
    %cst_28 = arith.constant dense<0.000000e+00> : vector<8x8xf32>
    %99 = vector.multi_reduction <add>, %98, %cst_28 [2] : vector<8x8x8xf32> to vector<8x8xf32>
    %100 = vector.shape_cast %99 : vector<8x8xf32> to vector<8x8x1xf32>
    %101 = arith.truncf %98 : vector<8x8x8xf32> to vector<8x8x8xbf16>
    "tpu.trace_start"() <{level = 10 : i32, message = "glm,gmd->gld"}> : () -> ()
    %cst_29 = arith.constant dense<0.000000e+00> : vector<8x8x8xf32>
    %102 = tpu.matmul %101, %88, %cst_29 {dimension_numbers = #tpu.dot_dimension_numbers<[2], [1], [1], [2], [0, 0, 0, 1, 1, 2], [0], [0]>} : vector<8x8x8xbf16>, vector<8x8x8xbf16>, vector<8x8x8xf32> -> vector<8x8x8xf32>
    "tpu.trace_stop"() : () -> ()
    %103 = tpu.reciprocal %100 {approx = true} : vector<8x8x1xf32> -> vector<8x8x1xf32>
    %104 = vector.broadcast %103 : vector<8x8x1xf32> to vector<8x8x8xf32>
    %105 = arith.mulf %102, %104 : vector<8x8x8xf32>
    %106 = arith.truncf %105 : vector<8x8x8xf32> to vector<8x8x8xbf16>
    %c0_30 = arith.constant 0 : index
    %c0_31 = arith.constant 0 : index
    %c24 = arith.constant 24 : index
    %107 = vector.load %arg5[%c0_30, %c0_31, %c24] : memref<8x8x32xbf16, #tpu.memory_space<vmem>>, vector<8x8x8xbf16>
    tpu.vector_store %arg5[%c0_30, %c0_31, %c24], %106 {strides = array<i32>} : memref<8x8x32xbf16, #tpu.memory_space<vmem>>, vector<8x8x8xbf16>,
    %c0_32 = arith.constant 0 : index
    %c0_33 = arith.constant 0 : index
    %c0_34 = arith.constant 0 : index
    %108 = vector.load %arg5[%c0_32, %c0_33, %c0_34] : memref<8x8x32xbf16, #tpu.memory_space<vmem>>, vector<8x8x32xbf16>
    %109 = vector.shape_cast %108 : vector<8x8x32xbf16> to vector<64x32xbf16>
    %c0_35 = arith.constant 0 : index
    %c0_36 = arith.constant 0 : index
    %110 = vector.load %arg3[%c0_35, %c0_36] : memref<32x32xbf16, #tpu.memory_space<vmem>>, vector<32x32xbf16>
    %cst_37 = arith.constant dense<0.000000e+00> : vector<64x32xf32>
    %111 = tpu.matmul %109, %110, %cst_37 {dimension_numbers = #tpu.dot_dimension_numbers<[1], [0], [0], [1], [0, 0, 1, 1], [], []>} : vector<64x32xbf16>, vector<32x32xbf16>, vector<64x32xf32> -> vector<64x32xf32>
    %112 = arith.truncf %111 : vector<64x32xf32> to vector<64x32xbf16>
    %113 = vector.shape_cast %112 : vector<64x32xbf16> to vector<8x256xbf16>
    %c0_38 = arith.constant 0 : index
    %c0_39 = arith.constant 0 : index
    %114 = vector.load %arg4[%c0_38, %c0_39] : memref<8x256xbf16, #tpu.memory_space<vmem>>, vector<8x256xbf16>
    tpu.vector_store %arg4[%c0_38, %c0_39], %113 {strides = array<i32>} : memref<8x256xbf16, #tpu.memory_space<vmem>>, vector<8x256xbf16>,
    return
  }
  func.func @transform_0(%arg0: i32) -> (i32, i32) {
    %c0_i32 = arith.constant 0 : i32
    %c0_i32_0 = arith.constant 0 : i32
    return %arg0, %c0_i32 : i32, i32
  }
  func.func @transform_1(%arg0: i32) -> (i32, i32) {
    %c0_i32 = arith.constant 0 : i32
    %c0_i32_0 = arith.constant 0 : i32
    %c0_i32_1 = arith.constant 0 : i32
    return %c0_i32, %c0_i32_0 : i32, i32
  }
  func.func @transform_2(%arg0: i32) -> (i32, i32) {
    %c0_i32 = arith.constant 0 : i32
    %c0_i32_0 = arith.constant 0 : i32
    %c0_i32_1 = arith.constant 0 : i32
    return %c0_i32, %c0_i32_0 : i32, i32
  }
  func.func @transform_3(%arg0: i32) -> (i32, i32) {
    %c0_i32 = arith.constant 0 : i32
    %c0_i32_0 = arith.constant 0 : i32
    return %arg0, %c0_i32 : i32, i32
  }
}

module attributes {stable_mosaic.version = 11 : i64} {
  func.func @_grouped_mhsa_kernel(%arg0: i32, %arg1: memref<8x256xbf16, #tpu.memory_space<vmem>>, %arg2: memref<32x96xbf16, #tpu.memory_space<vmem>>, %arg3: memref<32x32xbf16, #tpu.memory_space<vmem>>, %arg4: memref<8x256xbf16, #tpu.memory_space<vmem>>, %arg5: memref<8x8x32xbf16, #tpu.memory_space<vmem>>) attributes {dimension_semantics = [#tpu.dimension_semantics<parallel>], iteration_bounds = array<i64: 1>, scalar_prefetch = 0 : i64, scratch_operands = 1 : i64, tpu.core_type = #tpu.core_type<tc>, window_params = [{transform_indices = @transform_0, window_bounds = array<i64: 8, 256>}, {pipeline_mode = #tpu.pipeline_mode<synchronous>, transform_indices = @transform_1, window_bounds = array<i64: 32, 96>}, {pipeline_mode = #tpu.pipeline_mode<synchronous>, transform_indices = @transform_2, window_bounds = array<i64: 32, 32>}, {transform_indices = @transform_3, window_bounds = array<i64: 8, 256>}]} {
    %c0 = arith.constant 0 : index
    %c0_0 = arith.constant 0 : index
    %0 = vector.load %arg1[%c0, %c0_0] : memref<8x256xbf16, #tpu.memory_space<vmem>>, vector<8x256xbf16>
    %1 = vector.shape_cast %0 : vector<8x256xbf16> to vector<64x32xbf16>
    %c0_1 = arith.constant 0 : index
    %c0_2 = arith.constant 0 : index
    %2 = vector.load %arg2[%c0_1, %c0_2] : memref<32x96xbf16, #tpu.memory_space<vmem>>, vector<32x96xbf16>
    %cst = arith.constant dense<0.000000e+00> : vector<64x96xf32>
    %3 = tpu.matmul %1, %2, %cst {dimension_numbers = #tpu.dot_dimension_numbers<[1], [0], [0], [1], [0, 0, 1, 1], [], []>} : vector<64x32xbf16>, vector<32x96xbf16>, vector<64x96xf32> -> vector<64x96xf32>
    %4 = arith.truncf %3 : vector<64x96xf32> to vector<64x96xbf16>
    %5 = tpu.iota {dimensions = array<i32: 2>} : vector<1x1x8xi32>
    %c3_i32 = arith.constant 3 : i32
    %6 = vector.broadcast %c3_i32 : i32 to vector<1x1x8xi32>
    %7 = arith.cmpi slt, %5, %6 : vector<1x1x8xi32>
    %8 = vector.extract_strided_slice %4 {offsets = [0, 0], sizes = [64, 8], strides = [1, 1]} : vector<64x96xbf16> to vector<64x8xbf16>
    %9 = vector.shape_cast %8 : vector<64x8xbf16> to vector<8x8x8xbf16>
    %10 = vector.extract_strided_slice %4 {offsets = [0, 32], sizes = [64, 8], strides = [1, 1]} : vector<64x96xbf16> to vector<64x8xbf16>
    %11 = vector.shape_cast %10 : vector<64x8xbf16> to vector<8x8x8xbf16>
    %12 = vector.extract_strided_slice %4 {offsets = [0, 64], sizes = [64, 8], strides = [1, 1]} : vector<64x96xbf16> to vector<64x8xbf16>
    %13 = vector.shape_cast %12 : vector<64x8xbf16> to vector<8x8x8xbf16>
    "tpu.trace_start"() <{level = 10 : i32, message = "gld,gmd->glm"}> : () -> ()
    %cst_3 = arith.constant dense<0.000000e+00> : vector<8x8x8xf32>
    %14 = tpu.matmul %9, %11, %cst_3 {dimension_numbers = #tpu.dot_dimension_numbers<[2], [2], [1], [1], [0, 0, 0, 1, 1, 1], [0], [0]>} : vector<8x8x8xbf16>, vector<8x8x8xbf16>, vector<8x8x8xf32> -> vector<8x8x8xf32>
    %cst_4 = arith.constant -1.000000e+30 : f32
    "tpu.trace_stop"() : () -> ()
    %15 = vector.shape_cast %7 : vector<1x1x8xi1> to vector<1x1x8xi1>
    %16 = vector.broadcast %15 : vector<1x1x8xi1> to vector<8x8x8xi1>
    %17 = vector.broadcast %cst_4 : f32 to vector<8x8x8xf32>
    %18 = arith.select %16, %14, %17 : vector<8x8x8xi1>, vector<8x8x8xf32>
    %cst_5 = arith.constant dense<0xFF800000> : vector<8x8xf32>
    %19 = vector.multi_reduction <maximumf>, %18, %cst_5 [2] : vector<8x8x8xf32> to vector<8x8xf32>
    %20 = vector.shape_cast %19 : vector<8x8xf32> to vector<8x8x1xf32>
    %21 = vector.broadcast %20 : vector<8x8x1xf32> to vector<8x8x8xf32>
    %22 = arith.subf %18, %21 : vector<8x8x8xf32>
    %23 = math.exp %22 : vector<8x8x8xf32>
    %cst_6 = arith.constant dense<0.000000e+00> : vector<8x8xf32>
    %24 = vector.multi_reduction <add>, %23, %cst_6 [2] : vector<8x8x8xf32> to vector<8x8xf32>
    %25 = vector.shape_cast %24 : vector<8x8xf32> to vector<8x8x1xf32>
    %26 = arith.truncf %23 : vector<8x8x8xf32> to vector<8x8x8xbf16>
    "tpu.trace_start"() <{level = 10 : i32, message = "glm,gmd->gld"}> : () -> ()
    %cst_7 = arith.constant dense<0.000000e+00> : vector<8x8x8xf32>
    %27 = tpu.matmul %26, %13, %cst_7 {dimension_numbers = #tpu.dot_dimension_numbers<[2], [1], [1], [2], [0, 0, 0, 1, 1, 2], [0], [0]>} : vector<8x8x8xbf16>, vector<8x8x8xbf16>, vector<8x8x8xf32> -> vector<8x8x8xf32>
    "tpu.trace_stop"() : () -> ()
    %28 = tpu.reciprocal %25 {approx = true} : vector<8x8x1xf32> -> vector<8x8x1xf32>
    %29 = vector.broadcast %28 : vector<8x8x1xf32> to vector<8x8x8xf32>
    %30 = arith.mulf %27, %29 : vector<8x8x8xf32>
    %31 = arith.truncf %30 : vector<8x8x8xf32> to vector<8x8x8xbf16>
    %c0_8 = arith.constant 0 : index
    %c0_9 = arith.constant 0 : index
    %c0_10 = arith.constant 0 : index
    %32 = vector.load %arg5[%c0_8, %c0_9, %c0_10] : memref<8x8x32xbf16, #tpu.memory_space<vmem>>, vector<8x8x8xbf16>
    tpu.vector_store %arg5[%c0_8, %c0_9, %c0_10], %31 {strides = array<i32>} : memref<8x8x32xbf16, #tpu.memory_space<vmem>>, vector<8x8x8xbf16>,
    %33 = vector.extract_strided_slice %4 {offsets = [0, 8], sizes = [64, 8], strides = [1, 1]} : vector<64x96xbf16> to vector<64x8xbf16>
    %34 = vector.shape_cast %33 : vector<64x8xbf16> to vector<8x8x8xbf16>
    %35 = vector.extract_strided_slice %4 {offsets = [0, 40], sizes = [64, 8], strides = [1, 1]} : vector<64x96xbf16> to vector<64x8xbf16>
    %36 = vector.shape_cast %35 : vector<64x8xbf16> to vector<8x8x8xbf16>
    %37 = vector.extract_strided_slice %4 {offsets = [0, 72], sizes = [64, 8], strides = [1, 1]} : vector<64x96xbf16> to vector<64x8xbf16>
    %38 = vector.shape_cast %37 : vector<64x8xbf16> to vector<8x8x8xbf16>
    "tpu.trace_start"() <{level = 10 : i32, message = "gld,gmd->glm"}> : () -> ()
    %cst_11 = arith.constant dense<0.000000e+00> : vector<8x8x8xf32>
    %39 = tpu.matmul %34, %36, %cst_11 {dimension_numbers = #tpu.dot_dimension_numbers<[2], [2], [1], [1], [0, 0, 0, 1, 1, 1], [0], [0]>} : vector<8x8x8xbf16>, vector<8x8x8xbf16>, vector<8x8x8xf32> -> vector<8x8x8xf32>
    %cst_12 = arith.constant -1.000000e+30 : f32
    "tpu.trace_stop"() : () -> ()
    %40 = vector.shape_cast %7 : vector<1x1x8xi1> to vector<1x1x8xi1>
    %41 = vector.broadcast %40 : vector<1x1x8xi1> to vector<8x8x8xi1>
    %42 = vector.broadcast %cst_12 : f32 to vector<8x8x8xf32>
    %43 = arith.select %41, %39, %42 : vector<8x8x8xi1>, vector<8x8x8xf32>
    %cst_13 = arith.constant dense<0xFF800000> : vector<8x8xf32>
    %44 = vector.multi_reduction <maximumf>, %43, %cst_13 [2] : vector<8x8x8xf32> to vector<8x8xf32>
    %45 = vector.shape_cast %44 : vector<8x8xf32> to vector<8x8x1xf32>
    %46 = vector.broadcast %45 : vector<8x8x1xf32> to vector<8x8x8xf32>
    %47 = arith.subf %43, %46 : vector<8x8x8xf32>
    %48 = math.exp %47 : vector<8x8x8xf32>
    %cst_14 = arith.constant dense<0.000000e+00> : vector<8x8xf32>
    %49 = vector.multi_reduction <add>, %48, %cst_14 [2] : vector<8x8x8xf32> to vector<8x8xf32>
    %50 = vector.shape_cast %49 : vector<8x8xf32> to vector<8x8x1xf32>
    %51 = arith.truncf %48 : vector<8x8x8xf32> to vector<8x8x8xbf16>
    "tpu.trace_start"() <{level = 10 : i32, message = "glm,gmd->gld"}> : () -> ()
    %cst_15 = arith.constant dense<0.000000e+00> : vector<8x8x8xf32>
    %52 = tpu.matmul %51, %38, %cst_15 {dimension_numbers = #tpu.dot_dimension_numbers<[2], [1], [1], [2], [0, 0, 0, 1, 1, 2], [0], [0]>} : vector<8x8x8xbf16>, vector<8x8x8xbf16>, vector<8x8x8xf32> -> vector<8x8x8xf32>
    "tpu.trace_stop"() : () -> ()
    %53 = tpu.reciprocal %50 {approx = true} : vector<8x8x1xf32> -> vector<8x8x1xf32>
    %54 = vector.broadcast %53 : vector<8x8x1xf32> to vector<8x8x8xf32>
    %55 = arith.mulf %52, %54 : vector<8x8x8xf32>
    %56 = arith.truncf %55 : vector<8x8x8xf32> to vector<8x8x8xbf16>
    %c0_16 = arith.constant 0 : index
    %c0_17 = arith.constant 0 : index
    %c8 = arith.constant 8 : index
    %57 = vector.load %arg5[%c0_16, %c0_17, %c8] : memref<8x8x32xbf16, #tpu.memory_space<vmem>>, vector<8x8x8xbf16>
    tpu.vector_store %arg5[%c0_16, %c0_17, %c8], %56 {strides = array<i32>} : memref<8x8x32xbf16, #tpu.memory_space<vmem>>, vector<8x8x8xbf16>,
    %58 = vector.extract_strided_slice %4 {offsets = [0, 16], sizes = [64, 8], strides = [1, 1]} : vector<64x96xbf16> to vector<64x8xbf16>
    %59 = vector.shape_cast %58 : vector<64x8xbf16> to vector<8x8x8xbf16>
    %60 = vector.extract_strided_slice %4 {offsets = [0, 48], sizes = [64, 8], strides = [1, 1]} : vector<64x96xbf16> to vector<64x8xbf16>
    %61 = vector.shape_cast %60 : vector<64x8xbf16> to vector<8x8x8xbf16>
    %62 = vector.extract_strided_slice %4 {offsets = [0, 80], sizes = [64, 8], strides = [1, 1]} : vector<64x96xbf16> to vector<64x8xbf16>
    %63 = vector.shape_cast %62 : vector<64x8xbf16> to vector<8x8x8xbf16>
    "tpu.trace_start"() <{level = 10 : i32, message = "gld,gmd->glm"}> : () -> ()
    %cst_18 = arith.constant dense<0.000000e+00> : vector<8x8x8xf32>
    %64 = tpu.matmul %59, %61, %cst_18 {dimension_numbers = #tpu.dot_dimension_numbers<[2], [2], [1], [1], [0, 0, 0, 1, 1, 1], [0], [0]>} : vector<8x8x8xbf16>, vector<8x8x8xbf16>, vector<8x8x8xf32> -> vector<8x8x8xf32>
    %cst_19 = arith.constant -1.000000e+30 : f32
    "tpu.trace_stop"() : () -> ()
    %65 = vector.shape_cast %7 : vector<1x1x8xi1> to vector<1x1x8xi1>
    %66 = vector.broadcast %65 : vector<1x1x8xi1> to vector<8x8x8xi1>
    %67 = vector.broadcast %cst_19 : f32 to vector<8x8x8xf32>
    %68 = arith.select %66, %64, %67 : vector<8x8x8xi1>, vector<8x8x8xf32>
    %cst_20 = arith.constant dense<0xFF800000> : vector<8x8xf32>
    %69 = vector.multi_reduction <maximumf>, %68, %cst_20 [2] : vector<8x8x8xf32> to vector<8x8xf32>
    %70 = vector.shape_cast %69 : vector<8x8xf32> to vector<8x8x1xf32>
    %71 = vector.broadcast %70 : vector<8x8x1xf32> to vector<8x8x8xf32>
    %72 = arith.subf %68, %71 : vector<8x8x8xf32>
    %73 = math.exp %72 : vector<8x8x8xf32>
    %cst_21 = arith.constant dense<0.000000e+00> : vector<8x8xf32>
    %74 = vector.multi_reduction <add>, %73, %cst_21 [2] : vector<8x8x8xf32> to vector<8x8xf32>
    %75 = vector.shape_cast %74 : vector<8x8xf32> to vector<8x8x1xf32>
    %76 = arith.truncf %73 : vector<8x8x8xf32> to vector<8x8x8xbf16>
    "tpu.trace_start"() <{level = 10 : i32, message = "glm,gmd->gld"}> : () -> ()
    %cst_22 = arith.constant dense<0.000000e+00> : vector<8x8x8xf32>
    %77 = tpu.matmul %76, %63, %cst_22 {dimension_numbers = #tpu.dot_dimension_numbers<[2], [1], [1], [2], [0, 0, 0, 1, 1, 2], [0], [0]>} : vector<8x8x8xbf16>, vector<8x8x8xbf16>, vector<8x8x8xf32> -> vector<8x8x8xf32>
    "tpu.trace_stop"() : () -> ()
    %78 = tpu.reciprocal %75 {approx = true} : vector<8x8x1xf32> -> vector<8x8x1xf32>
    %79 = vector.broadcast %78 : vector<8x8x1xf32> to vector<8x8x8xf32>
    %80 = arith.mulf %77, %79 : vector<8x8x8xf32>
    %81 = arith.truncf %80 : vector<8x8x8xf32> to vector<8x8x8xbf16>
    %c0_23 = arith.constant 0 : index
    %c0_24 = arith.constant 0 : index
    %c16 = arith.constant 16 : index
    %82 = vector.load %arg5[%c0_23, %c0_24, %c16] : memref<8x8x32xbf16, #tpu.memory_space<vmem>>, vector<8x8x8xbf16>
    tpu.vector_store %arg5[%c0_23, %c0_24, %c16], %81 {strides = array<i32>} : memref<8x8x32xbf16, #tpu.memory_space<vmem>>, vector<8x8x8xbf16>,
    %83 = vector.extract_strided_slice %4 {offsets = [0, 24], sizes = [64, 8], strides = [1, 1]} : vector<64x96xbf16> to vector<64x8xbf16>
    %84 = vector.shape_cast %83 : vector<64x8xbf16> to vector<8x8x8xbf16>
    %85 = vector.extract_strided_slice %4 {offsets = [0, 56], sizes = [64, 8], strides = [1, 1]} : vector<64x96xbf16> to vector<64x8xbf16>
    %86 = vector.shape_cast %85 : vector<64x8xbf16> to vector<8x8x8xbf16>
    %87 = vector.extract_strided_slice %4 {offsets = [0, 88], sizes = [64, 8], strides = [1, 1]} : vector<64x96xbf16> to vector<64x8xbf16>
    %88 = vector.shape_cast %87 : vector<64x8xbf16> to vector<8x8x8xbf16>
    "tpu.trace_start"() <{level = 10 : i32, message = "gld,gmd->glm"}> : () -> ()
    %cst_25 = arith.constant dense<0.000000e+00> : vector<8x8x8xf32>
    %89 = tpu.matmul %84, %86, %cst_25 {dimension_numbers = #tpu.dot_dimension_numbers<[2], [2], [1], [1], [0, 0, 0, 1, 1, 1], [0], [0]>} : vector<8x8x8xbf16>, vector<8x8x8xbf16>, vector<8x8x8xf32> -> vector<8x8x8xf32>
    %cst_26 = arith.constant -1.000000e+30 : f32
    "tpu.trace_stop"() : () -> ()
    %90 = vector.shape_cast %7 : vector<1x1x8xi1> to vector<1x1x8xi1>
    %91 = vector.broadcast %90 : vector<1x1x8xi1> to vector<8x8x8xi1>
    %92 = vector.broadcast %cst_26 : f32 to vector<8x8x8xf32>
    %93 = arith.select %91, %89, %92 : vector<8x8x8xi1>, vector<8x8x8xf32>
    %cst_27 = arith.constant dense<0xFF800000> : vector<8x8xf32>
    %94 = vector.multi_reduction <maximumf>, %93, %cst_27 [2] : vector<8x8x8xf32> to vector<8x8xf32>
    %95 = vector.shape_cast %94 : vector<8x8xf32> to vector<8x8x1xf32>
    %96 = vector.broadcast %95 : vector<8x8x1xf32> to vector<8x8x8xf32>
    %97 = arith.subf %93, %96 : vector<8x8x8xf32>
    %98 = math.exp %97 : vector<8x8x8xf32>
    %cst_28 = arith.constant dense<0.000000e+00> : vector<8x8xf32>
    %99 = vector.multi_reduction <add>, %98, %cst_28 [2] : vector<8x8x8xf32> to vector<8x8xf32>
    %100 = vector.shape_cast %99 : vector<8x8xf32> to vector<8x8x1xf32>
    %101 = arith.truncf %98 : vector<8x8x8xf32> to vector<8x8x8xbf16>
    "tpu.trace_start"() <{level = 10 : i32, message = "glm,gmd->gld"}> : () -> ()
    %cst_29 = arith.constant dense<0.000000e+00> : vector<8x8x8xf32>
    %102 = tpu.matmul %101, %88, %cst_29 {dimension_numbers = #tpu.dot_dimension_numbers<[2], [1], [1], [2], [0, 0, 0, 1, 1, 2], [0], [0]>} : vector<8x8x8xbf16>, vector<8x8x8xbf16>, vector<8x8x8xf32> -> vector<8x8x8xf32>
    "tpu.trace_stop"() : () -> ()
    %103 = tpu.reciprocal %100 {approx = true} : vector<8x8x1xf32> -> vector<8x8x1xf32>
    %104 = vector.broadcast %103 : vector<8x8x1xf32> to vector<8x8x8xf32>
    %105 = arith.mulf %102, %104 : vector<8x8x8xf32>
    %106 = arith.truncf %105 : vector<8x8x8xf32> to vector<8x8x8xbf16>
    %c0_30 = arith.constant 0 : index
    %c0_31 = arith.constant 0 : index
    %c24 = arith.constant 24 : index
    %107 = vector.load %arg5[%c0_30, %c0_31, %c24] : memref<8x8x32xbf16, #tpu.memory_space<vmem>>, vector<8x8x8xbf16>
    tpu.vector_store %arg5[%c0_30, %c0_31, %c24], %106 {strides = array<i32>} : memref<8x8x32xbf16, #tpu.memory_space<vmem>>, vector<8x8x8xbf16>,
    %c0_32 = arith.constant 0 : index
    %c0_33 = arith.constant 0 : index
    %c0_34 = arith.constant 0 : index
    %108 = vector.load %arg5[%c0_32, %c0_33, %c0_34] : memref<8x8x32xbf16, #tpu.memory_space<vmem>>, vector<8x8x32xbf16>
    %109 = vector.shape_cast %108 : vector<8x8x32xbf16> to vector<64x32xbf16>
    %c0_35 = arith.constant 0 : index
    %c0_36 = arith.constant 0 : index
    %110 = vector.load %arg3[%c0_35, %c0_36] : memref<32x32xbf16, #tpu.memory_space<vmem>>, vector<32x32xbf16>
    %cst_37 = arith.constant dense<0.000000e+00> : vector<64x32xf32>
    %111 = tpu.matmul %109, %110, %cst_37 {dimension_numbers = #tpu.dot_dimension_numbers<[1], [0], [0], [1], [0, 0, 1, 1], [], []>} : vector<64x32xbf16>, vector<32x32xbf16>, vector<64x32xf32> -> vector<64x32xf32>
    %112 = arith.truncf %111 : vector<64x32xf32> to vector<64x32xbf16>
    %113 = vector.shape_cast %112 : vector<64x32xbf16> to vector<8x256xbf16>
    %c0_38 = arith.constant 0 : index
    %c0_39 = arith.constant 0 : index
    %114 = vector.load %arg4[%c0_38, %c0_39] : memref<8x256xbf16, #tpu.memory_space<vmem>>, vector<8x256xbf16>
    tpu.vector_store %arg4[%c0_38, %c0_39], %113 {strides = array<i32>} : memref<8x256xbf16, #tpu.memory_space<vmem>>, vector<8x256xbf16>,
    return
  }
  func.func @transform_0(%arg0: i32) -> (i32, i32) {
    %c0_i32 = arith.constant 0 : i32
    %c0_i32_0 = arith.constant 0 : i32
    return %arg0, %c0_i32 : i32, i32
  }
  func.func @transform_1(%arg0: i32) -> (i32, i32) {
    %c0_i32 = arith.constant 0 : i32
    %c0_i32_0 = arith.constant 0 : i32
    %c0_i32_1 = arith.constant 0 : i32
    return %c0_i32, %c0_i32_0 : i32, i32
  }
  func.func @transform_2(%arg0: i32) -> (i32, i32) {
    %c0_i32 = arith.constant 0 : i32
    %c0_i32_0 = arith.constant 0 : i32
    %c0_i32_1 = arith.constant 0 : i32
    return %c0_i32, %c0_i32_0 : i32, i32
  }
  func.func @transform_3(%arg0: i32) -> (i32, i32) {
    %c0_i32 = arith.constant 0 : i32
    %c0_i32_0 = arith.constant 0 : i32
    return %arg0, %c0_i32 : i32, i32
  }
}

module attributes {stable_mosaic.version = 11 : i64} {
  func.func @_grouped_mhsa_kernel(%arg0: i32, %arg1: memref<8x8x32xbf16, #tpu.memory_space<vmem>>, %arg2: memref<32x96xbf16, #tpu.memory_space<vmem>>, %arg3: memref<32x32xbf16, #tpu.memory_space<vmem>>, %arg4: memref<8x8x32xbf16, #tpu.memory_space<vmem>>, %arg5: memref<8x8x32xbf16, #tpu.memory_space<vmem>>) attributes {dimension_semantics = [#tpu.dimension_semantics<parallel>], iteration_bounds = array<i64: 1>, scalar_prefetch = 0 : i64, scratch_operands = 1 : i64, tpu.core_type = #tpu.core_type<tc>, window_params = [{transform_indices = @transform_0, window_bounds = array<i64: 8, 8, 32>}, {pipeline_mode = #tpu.pipeline_mode<synchronous>, transform_indices = @transform_1, window_bounds = array<i64: 32, 96>}, {pipeline_mode = #tpu.pipeline_mode<synchronous>, transform_indices = @transform_2, window_bounds = array<i64: 32, 32>}, {transform_indices = @transform_3, window_bounds = array<i64: 8, 8, 32>}]} {
    %c0 = arith.constant 0 : index
    %c0_0 = arith.constant 0 : index
    %c0_1 = arith.constant 0 : index
    %0 = vector.load %arg1[%c0, %c0_0, %c0_1] : memref<8x8x32xbf16, #tpu.memory_space<vmem>>, vector<8x8x32xbf16>
    %1 = vector.shape_cast %0 : vector<8x8x32xbf16> to vector<64x32xbf16>
    %c0_2 = arith.constant 0 : index
    %c0_3 = arith.constant 0 : index
    %2 = vector.load %arg2[%c0_2, %c0_3] : memref<32x96xbf16, #tpu.memory_space<vmem>>, vector<32x96xbf16>
    %cst = arith.constant dense<0.000000e+00> : vector<64x96xf32>
    %3 = tpu.matmul %1, %2, %cst {dimension_numbers = #tpu.dot_dimension_numbers<[1], [0], [0], [1], [0, 0, 1, 1], [], []>} : vector<64x32xbf16>, vector<32x96xbf16>, vector<64x96xf32> -> vector<64x96xf32>
    %4 = arith.truncf %3 : vector<64x96xf32> to vector<64x96xbf16>
    %5 = tpu.iota {dimensions = array<i32: 2>} : vector<1x1x8xi32>
    %c3_i32 = arith.constant 3 : i32
    %6 = vector.broadcast %c3_i32 : i32 to vector<1x1x8xi32>
    %7 = arith.cmpi slt, %5, %6 : vector<1x1x8xi32>
    %8 = vector.extract_strided_slice %4 {offsets = [0, 0], sizes = [64, 8], strides = [1, 1]} : vector<64x96xbf16> to vector<64x8xbf16>
    %9 = vector.shape_cast %8 : vector<64x8xbf16> to vector<8x8x8xbf16>
    %10 = vector.extract_strided_slice %4 {offsets = [0, 32], sizes = [64, 8], strides = [1, 1]} : vector<64x96xbf16> to vector<64x8xbf16>
    %11 = vector.shape_cast %10 : vector<64x8xbf16> to vector<8x8x8xbf16>
    %12 = vector.extract_strided_slice %4 {offsets = [0, 64], sizes = [64, 8], strides = [1, 1]} : vector<64x96xbf16> to vector<64x8xbf16>
    %13 = vector.shape_cast %12 : vector<64x8xbf16> to vector<8x8x8xbf16>
    "tpu.trace_start"() <{level = 10 : i32, message = "gld,gmd->glm"}> : () -> ()
    %cst_4 = arith.constant dense<0.000000e+00> : vector<8x8x8xf32>
    %14 = tpu.matmul %9, %11, %cst_4 {dimension_numbers = #tpu.dot_dimension_numbers<[2], [2], [1], [1], [0, 0, 0, 1, 1, 1], [0], [0]>} : vector<8x8x8xbf16>, vector<8x8x8xbf16>, vector<8x8x8xf32> -> vector<8x8x8xf32>
    %cst_5 = arith.constant -1.000000e+30 : f32
    "tpu.trace_stop"() : () -> ()
    %15 = vector.shape_cast %7 : vector<1x1x8xi1> to vector<1x1x8xi1>
    %16 = vector.broadcast %15 : vector<1x1x8xi1> to vector<8x8x8xi1>
    %17 = vector.broadcast %cst_5 : f32 to vector<8x8x8xf32>
    %18 = arith.select %16, %14, %17 : vector<8x8x8xi1>, vector<8x8x8xf32>
    %cst_6 = arith.constant dense<0xFF800000> : vector<8x8xf32>
    %19 = vector.multi_reduction <maximumf>, %18, %cst_6 [2] : vector<8x8x8xf32> to vector<8x8xf32>
    %20 = vector.shape_cast %19 : vector<8x8xf32> to vector<8x8x1xf32>
    %21 = vector.broadcast %20 : vector<8x8x1xf32> to vector<8x8x8xf32>
    %22 = arith.subf %18, %21 : vector<8x8x8xf32>
    %23 = math.exp %22 : vector<8x8x8xf32>
    %cst_7 = arith.constant dense<0.000000e+00> : vector<8x8xf32>
    %24 = vector.multi_reduction <add>, %23, %cst_7 [2] : vector<8x8x8xf32> to vector<8x8xf32>
    %25 = vector.shape_cast %24 : vector<8x8xf32> to vector<8x8x1xf32>
    %26 = arith.truncf %23 : vector<8x8x8xf32> to vector<8x8x8xbf16>
    "tpu.trace_start"() <{level = 10 : i32, message = "glm,gmd->gld"}> : () -> ()
    %cst_8 = arith.constant dense<0.000000e+00> : vector<8x8x8xf32>
    %27 = tpu.matmul %26, %13, %cst_8 {dimension_numbers = #tpu.dot_dimension_numbers<[2], [1], [1], [2], [0, 0, 0, 1, 1, 2], [0], [0]>} : vector<8x8x8xbf16>, vector<8x8x8xbf16>, vector<8x8x8xf32> -> vector<8x8x8xf32>
    "tpu.trace_stop"() : () -> ()
    %28 = tpu.reciprocal %25 {approx = true} : vector<8x8x1xf32> -> vector<8x8x1xf32>
    %29 = vector.broadcast %28 : vector<8x8x1xf32> to vector<8x8x8xf32>
    %30 = arith.mulf %27, %29 : vector<8x8x8xf32>
    %31 = arith.truncf %30 : vector<8x8x8xf32> to vector<8x8x8xbf16>
    %c0_9 = arith.constant 0 : index
    %c0_10 = arith.constant 0 : index
    %c0_11 = arith.constant 0 : index
    %32 = vector.load %arg5[%c0_9, %c0_10, %c0_11] : memref<8x8x32xbf16, #tpu.memory_space<vmem>>, vector<8x8x8xbf16>
    tpu.vector_store %arg5[%c0_9, %c0_10, %c0_11], %31 {strides = array<i32>} : memref<8x8x32xbf16, #tpu.memory_space<vmem>>, vector<8x8x8xbf16>,
    %33 = vector.extract_strided_slice %4 {offsets = [0, 8], sizes = [64, 8], strides = [1, 1]} : vector<64x96xbf16> to vector<64x8xbf16>
    %34 = vector.shape_cast %33 : vector<64x8xbf16> to vector<8x8x8xbf16>
    %35 = vector.extract_strided_slice %4 {offsets = [0, 40], sizes = [64, 8], strides = [1, 1]} : vector<64x96xbf16> to vector<64x8xbf16>
    %36 = vector.shape_cast %35 : vector<64x8xbf16> to vector<8x8x8xbf16>
    %37 = vector.extract_strided_slice %4 {offsets = [0, 72], sizes = [64, 8], strides = [1, 1]} : vector<64x96xbf16> to vector<64x8xbf16>
    %38 = vector.shape_cast %37 : vector<64x8xbf16> to vector<8x8x8xbf16>
    "tpu.trace_start"() <{level = 10 : i32, message = "gld,gmd->glm"}> : () -> ()
    %cst_12 = arith.constant dense<0.000000e+00> : vector<8x8x8xf32>
    %39 = tpu.matmul %34, %36, %cst_12 {dimension_numbers = #tpu.dot_dimension_numbers<[2], [2], [1], [1], [0, 0, 0, 1, 1, 1], [0], [0]>} : vector<8x8x8xbf16>, vector<8x8x8xbf16>, vector<8x8x8xf32> -> vector<8x8x8xf32>
    %cst_13 = arith.constant -1.000000e+30 : f32
    "tpu.trace_stop"() : () -> ()
    %40 = vector.shape_cast %7 : vector<1x1x8xi1> to vector<1x1x8xi1>
    %41 = vector.broadcast %40 : vector<1x1x8xi1> to vector<8x8x8xi1>
    %42 = vector.broadcast %cst_13 : f32 to vector<8x8x8xf32>
    %43 = arith.select %41, %39, %42 : vector<8x8x8xi1>, vector<8x8x8xf32>
    %cst_14 = arith.constant dense<0xFF800000> : vector<8x8xf32>
    %44 = vector.multi_reduction <maximumf>, %43, %cst_14 [2] : vector<8x8x8xf32> to vector<8x8xf32>
    %45 = vector.shape_cast %44 : vector<8x8xf32> to vector<8x8x1xf32>
    %46 = vector.broadcast %45 : vector<8x8x1xf32> to vector<8x8x8xf32>
    %47 = arith.subf %43, %46 : vector<8x8x8xf32>
    %48 = math.exp %47 : vector<8x8x8xf32>
    %cst_15 = arith.constant dense<0.000000e+00> : vector<8x8xf32>
    %49 = vector.multi_reduction <add>, %48, %cst_15 [2] : vector<8x8x8xf32> to vector<8x8xf32>
    %50 = vector.shape_cast %49 : vector<8x8xf32> to vector<8x8x1xf32>
    %51 = arith.truncf %48 : vector<8x8x8xf32> to vector<8x8x8xbf16>
    "tpu.trace_start"() <{level = 10 : i32, message = "glm,gmd->gld"}> : () -> ()
    %cst_16 = arith.constant dense<0.000000e+00> : vector<8x8x8xf32>
    %52 = tpu.matmul %51, %38, %cst_16 {dimension_numbers = #tpu.dot_dimension_numbers<[2], [1], [1], [2], [0, 0, 0, 1, 1, 2], [0], [0]>} : vector<8x8x8xbf16>, vector<8x8x8xbf16>, vector<8x8x8xf32> -> vector<8x8x8xf32>
    "tpu.trace_stop"() : () -> ()
    %53 = tpu.reciprocal %50 {approx = true} : vector<8x8x1xf32> -> vector<8x8x1xf32>
    %54 = vector.broadcast %53 : vector<8x8x1xf32> to vector<8x8x8xf32>
    %55 = arith.mulf %52, %54 : vector<8x8x8xf32>
    %56 = arith.truncf %55 : vector<8x8x8xf32> to vector<8x8x8xbf16>
    %c0_17 = arith.constant 0 : index
    %c0_18 = arith.constant 0 : index
    %c8 = arith.constant 8 : index
    %57 = vector.load %arg5[%c0_17, %c0_18, %c8] : memref<8x8x32xbf16, #tpu.memory_space<vmem>>, vector<8x8x8xbf16>
    tpu.vector_store %arg5[%c0_17, %c0_18, %c8], %56 {strides = array<i32>} : memref<8x8x32xbf16, #tpu.memory_space<vmem>>, vector<8x8x8xbf16>,
    %58 = vector.extract_strided_slice %4 {offsets = [0, 16], sizes = [64, 8], strides = [1, 1]} : vector<64x96xbf16> to vector<64x8xbf16>
    %59 = vector.shape_cast %58 : vector<64x8xbf16> to vector<8x8x8xbf16>
    %60 = vector.extract_strided_slice %4 {offsets = [0, 48], sizes = [64, 8], strides = [1, 1]} : vector<64x96xbf16> to vector<64x8xbf16>
    %61 = vector.shape_cast %60 : vector<64x8xbf16> to vector<8x8x8xbf16>
    %62 = vector.extract_strided_slice %4 {offsets = [0, 80], sizes = [64, 8], strides = [1, 1]} : vector<64x96xbf16> to vector<64x8xbf16>
    %63 = vector.shape_cast %62 : vector<64x8xbf16> to vector<8x8x8xbf16>
    "tpu.trace_start"() <{level = 10 : i32, message = "gld,gmd->glm"}> : () -> ()
    %cst_19 = arith.constant dense<0.000000e+00> : vector<8x8x8xf32>
    %64 = tpu.matmul %59, %61, %cst_19 {dimension_numbers = #tpu.dot_dimension_numbers<[2], [2], [1], [1], [0, 0, 0, 1, 1, 1], [0], [0]>} : vector<8x8x8xbf16>, vector<8x8x8xbf16>, vector<8x8x8xf32> -> vector<8x8x8xf32>
    %cst_20 = arith.constant -1.000000e+30 : f32
    "tpu.trace_stop"() : () -> ()
    %65 = vector.shape_cast %7 : vector<1x1x8xi1> to vector<1x1x8xi1>
    %66 = vector.broadcast %65 : vector<1x1x8xi1> to vector<8x8x8xi1>
    %67 = vector.broadcast %cst_20 : f32 to vector<8x8x8xf32>
    %68 = arith.select %66, %64, %67 : vector<8x8x8xi1>, vector<8x8x8xf32>
    %cst_21 = arith.constant dense<0xFF800000> : vector<8x8xf32>
    %69 = vector.multi_reduction <maximumf>, %68, %cst_21 [2] : vector<8x8x8xf32> to vector<8x8xf32>
    %70 = vector.shape_cast %69 : vector<8x8xf32> to vector<8x8x1xf32>
    %71 = vector.broadcast %70 : vector<8x8x1xf32> to vector<8x8x8xf32>
    %72 = arith.subf %68, %71 : vector<8x8x8xf32>
    %73 = math.exp %72 : vector<8x8x8xf32>
    %cst_22 = arith.constant dense<0.000000e+00> : vector<8x8xf32>
    %74 = vector.multi_reduction <add>, %73, %cst_22 [2] : vector<8x8x8xf32> to vector<8x8xf32>
    %75 = vector.shape_cast %74 : vector<8x8xf32> to vector<8x8x1xf32>
    %76 = arith.truncf %73 : vector<8x8x8xf32> to vector<8x8x8xbf16>
    "tpu.trace_start"() <{level = 10 : i32, message = "glm,gmd->gld"}> : () -> ()
    %cst_23 = arith.constant dense<0.000000e+00> : vector<8x8x8xf32>
    %77 = tpu.matmul %76, %63, %cst_23 {dimension_numbers = #tpu.dot_dimension_numbers<[2], [1], [1], [2], [0, 0, 0, 1, 1, 2], [0], [0]>} : vector<8x8x8xbf16>, vector<8x8x8xbf16>, vector<8x8x8xf32> -> vector<8x8x8xf32>
    "tpu.trace_stop"() : () -> ()
    %78 = tpu.reciprocal %75 {approx = true} : vector<8x8x1xf32> -> vector<8x8x1xf32>
    %79 = vector.broadcast %78 : vector<8x8x1xf32> to vector<8x8x8xf32>
    %80 = arith.mulf %77, %79 : vector<8x8x8xf32>
    %81 = arith.truncf %80 : vector<8x8x8xf32> to vector<8x8x8xbf16>
    %c0_24 = arith.constant 0 : index
    %c0_25 = arith.constant 0 : index
    %c16 = arith.constant 16 : index
    %82 = vector.load %arg5[%c0_24, %c0_25, %c16] : memref<8x8x32xbf16, #tpu.memory_space<vmem>>, vector<8x8x8xbf16>
    tpu.vector_store %arg5[%c0_24, %c0_25, %c16], %81 {strides = array<i32>} : memref<8x8x32xbf16, #tpu.memory_space<vmem>>, vector<8x8x8xbf16>,
    %83 = vector.extract_strided_slice %4 {offsets = [0, 24], sizes = [64, 8], strides = [1, 1]} : vector<64x96xbf16> to vector<64x8xbf16>
    %84 = vector.shape_cast %83 : vector<64x8xbf16> to vector<8x8x8xbf16>
    %85 = vector.extract_strided_slice %4 {offsets = [0, 56], sizes = [64, 8], strides = [1, 1]} : vector<64x96xbf16> to vector<64x8xbf16>
    %86 = vector.shape_cast %85 : vector<64x8xbf16> to vector<8x8x8xbf16>
    %87 = vector.extract_strided_slice %4 {offsets = [0, 88], sizes = [64, 8], strides = [1, 1]} : vector<64x96xbf16> to vector<64x8xbf16>
    %88 = vector.shape_cast %87 : vector<64x8xbf16> to vector<8x8x8xbf16>
    "tpu.trace_start"() <{level = 10 : i32, message = "gld,gmd->glm"}> : () -> ()
    %cst_26 = arith.constant dense<0.000000e+00> : vector<8x8x8xf32>
    %89 = tpu.matmul %84, %86, %cst_26 {dimension_numbers = #tpu.dot_dimension_numbers<[2], [2], [1], [1], [0, 0, 0, 1, 1, 1], [0], [0]>} : vector<8x8x8xbf16>, vector<8x8x8xbf16>, vector<8x8x8xf32> -> vector<8x8x8xf32>
    %cst_27 = arith.constant -1.000000e+30 : f32
    "tpu.trace_stop"() : () -> ()
    %90 = vector.shape_cast %7 : vector<1x1x8xi1> to vector<1x1x8xi1>
    %91 = vector.broadcast %90 : vector<1x1x8xi1> to vector<8x8x8xi1>
    %92 = vector.broadcast %cst_27 : f32 to vector<8x8x8xf32>
    %93 = arith.select %91, %89, %92 : vector<8x8x8xi1>, vector<8x8x8xf32>
    %cst_28 = arith.constant dense<0xFF800000> : vector<8x8xf32>
    %94 = vector.multi_reduction <maximumf>, %93, %cst_28 [2] : vector<8x8x8xf32> to vector<8x8xf32>
    %95 = vector.shape_cast %94 : vector<8x8xf32> to vector<8x8x1xf32>
    %96 = vector.broadcast %95 : vector<8x8x1xf32> to vector<8x8x8xf32>
    %97 = arith.subf %93, %96 : vector<8x8x8xf32>
    %98 = math.exp %97 : vector<8x8x8xf32>
    %cst_29 = arith.constant dense<0.000000e+00> : vector<8x8xf32>
    %99 = vector.multi_reduction <add>, %98, %cst_29 [2] : vector<8x8x8xf32> to vector<8x8xf32>
    %100 = vector.shape_cast %99 : vector<8x8xf32> to vector<8x8x1xf32>
    %101 = arith.truncf %98 : vector<8x8x8xf32> to vector<8x8x8xbf16>
    "tpu.trace_start"() <{level = 10 : i32, message = "glm,gmd->gld"}> : () -> ()
    %cst_30 = arith.constant dense<0.000000e+00> : vector<8x8x8xf32>
    %102 = tpu.matmul %101, %88, %cst_30 {dimension_numbers = #tpu.dot_dimension_numbers<[2], [1], [1], [2], [0, 0, 0, 1, 1, 2], [0], [0]>} : vector<8x8x8xbf16>, vector<8x8x8xbf16>, vector<8x8x8xf32> -> vector<8x8x8xf32>
    "tpu.trace_stop"() : () -> ()
    %103 = tpu.reciprocal %100 {approx = true} : vector<8x8x1xf32> -> vector<8x8x1xf32>
    %104 = vector.broadcast %103 : vector<8x8x1xf32> to vector<8x8x8xf32>
    %105 = arith.mulf %102, %104 : vector<8x8x8xf32>
    %106 = arith.truncf %105 : vector<8x8x8xf32> to vector<8x8x8xbf16>
    %c0_31 = arith.constant 0 : index
    %c0_32 = arith.constant 0 : index
    %c24 = arith.constant 24 : index
    %107 = vector.load %arg5[%c0_31, %c0_32, %c24] : memref<8x8x32xbf16, #tpu.memory_space<vmem>>, vector<8x8x8xbf16>
    tpu.vector_store %arg5[%c0_31, %c0_32, %c24], %106 {strides = array<i32>} : memref<8x8x32xbf16, #tpu.memory_space<vmem>>, vector<8x8x8xbf16>,
    %c0_33 = arith.constant 0 : index
    %c0_34 = arith.constant 0 : index
    %c0_35 = arith.constant 0 : index
    %108 = vector.load %arg5[%c0_33, %c0_34, %c0_35] : memref<8x8x32xbf16, #tpu.memory_space<vmem>>, vector<8x8x32xbf16>
    %109 = vector.shape_cast %108 : vector<8x8x32xbf16> to vector<64x32xbf16>
    %c0_36 = arith.constant 0 : index
    %c0_37 = arith.constant 0 : index
    %110 = vector.load %arg3[%c0_36, %c0_37] : memref<32x32xbf16, #tpu.memory_space<vmem>>, vector<32x32xbf16>
    %cst_38 = arith.constant dense<0.000000e+00> : vector<64x32xf32>
    %111 = tpu.matmul %109, %110, %cst_38 {dimension_numbers = #tpu.dot_dimension_numbers<[1], [0], [0], [1], [0, 0, 1, 1], [], []>} : vector<64x32xbf16>, vector<32x32xbf16>, vector<64x32xf32> -> vector<64x32xf32>
    %112 = arith.truncf %111 : vector<64x32xf32> to vector<64x32xbf16>
    %113 = vector.shape_cast %112 : vector<64x32xbf16> to vector<8x8x32xbf16>
    %c0_39 = arith.constant 0 : index
    %c0_40 = arith.constant 0 : index
    %c0_41 = arith.constant 0 : index
    %114 = vector.load %arg4[%c0_39, %c0_40, %c0_41] : memref<8x8x32xbf16, #tpu.memory_space<vmem>>, vector<8x8x32xbf16>
    tpu.vector_store %arg4[%c0_39, %c0_40, %c0_41], %113 {strides = array<i32>} : memref<8x8x32xbf16, #tpu.memory_space<vmem>>, vector<8x8x32xbf16>,
    return
  }
  func.func @transform_0(%arg0: i32) -> (i32, i32, i32) {
    %c0_i32 = arith.constant 0 : i32
    %c0_i32_0 = arith.constant 0 : i32
    %c0_i32_1 = arith.constant 0 : i32
    return %arg0, %c0_i32, %c0_i32_0 : i32, i32, i32
  }
  func.func @transform_1(%arg0: i32) -> (i32, i32) {
    %c0_i32 = arith.constant 0 : i32
    %c0_i32_0 = arith.constant 0 : i32
    %c0_i32_1 = arith.constant 0 : i32
    return %c0_i32, %c0_i32_0 : i32, i32
  }
  func.func @transform_2(%arg0: i32) -> (i32, i32) {
    %c0_i32 = arith.constant 0 : i32
    %c0_i32_0 = arith.constant 0 : i32
    %c0_i32_1 = arith.constant 0 : i32
    return %c0_i32, %c0_i32_0 : i32, i32
  }
  func.func @transform_3(%arg0: i32) -> (i32, i32, i32) {
    %c0_i32 = arith.constant 0 : i32
    %c0_i32_0 = arith.constant 0 : i32
    %c0_i32_1 = arith.constant 0 : i32
    return %arg0, %c0_i32, %c0_i32_0 : i32, i32, i32
  }
}

</mosaic_0001>

<llo_original>
// kernel: tpu_custom_call.1
$region0: #{tpu_custom_call.1}
  #allocation0 [shape = 'u32[]', space=smem, size = 0x4, offset = 0x4, fixed_abs, tag = 'smem constant byte address 0x4 - core index']
  #allocation1 [shape = 'u32[144,128]{1,0:T(1,128)}', space=vmem, size = 0x12000, scoped, tag = 'internal scratch']
  #allocation2 [shape = 'bf16[8,8,32]{2,1,0:T(8,128)(2,1)}', space=vmem, size = 0x4000, scoped, tag = 'scratch operand']
  %s0 = inlined_call_operand.hbm [shape: bf16[8,8,32], index: 0, kind: input, shape index: {}]
  %s1 = inlined_call_operand.hbm [shape: bf16[32,96], index: 1, kind: input, shape index: {}]
  %s2 = inlined_call_operand.hbm [shape: bf16[32,32], index: 2, kind: input, shape index: {}]
  %s3 = inlined_call_operand.hbm [shape: bf16[8,8,32], index: 3, kind: output, shape index: {}]
  %s4 = sld [smem:[#allocation0]]
  $region34: #{tpu_custom_call.1} parent=0
    _
  %s6 = ssub.s32 1, %s4
  %s7 = scalar_select 0, %s6, %s4
  $region1: #{tpu_custom_call.1} parent=0
    #allocation3 [shape = 'u8[16384]{0}', space=vmem, size = 0x4000, scoped, tag = 'input window, operand 0, single buffered']
    #allocation4 [shape = 's32[1]{0}', space=sflag, size = 0x4, scoped, tag = 'scoped memory for tpu_custom_call.1']
    #allocation5 [shape = 's32[1]{0}', space=sflag, size = 0x4, scoped, tag = 'scoped memory for tpu_custom_call.1']
    #allocation6 [shape = 'u8[8192]{0}', space=vmem, size = 0x2000, scoped, tag = 'input window, operand 1, single buffered']
    #allocation7 [shape = 's32[1]{0}', space=sflag, size = 0x4, scoped, tag = 'scoped memory for tpu_custom_call.1']
    #allocation8 [shape = 'u8[8192]{0}', space=vmem, size = 0x2000, scoped, tag = 'input window, operand 2, single buffered']
    #allocation9 [shape = 'u8[16384]{0}', space=vmem, size = 0x4000, scoped, tag = 'output window, operand 0, single buffered']
    %8 = vsyncpa [#allocation4], 0
    %9 = vsyncpa [#allocation7], 0
    %10 = vsyncpa [#allocation5], 0
    // Predicated region
    $region2: #{tpu_custom_call.1} parent=1 // pred_check
      _
    $region3: #{tpu_custom_call.1} parent=1 // pred_check_branch
      %12 = sbr.rel (0) target = $region5
    $region4: #{tpu_custom_call.1} parent=1 // pred_region
      %s14 = ssub.s32 512, 512
      %15 = vsyncadd [#allocation4], %s14
      %s16 = sshll.u32 [#allocation3], 4
      %s17 = int_to_ptr.vmem [resolvable:$true] %s16
      %22 = dma.hbm_to_vmem [thread:$0]  %s0, 512, %s17, [#allocation4], 64, 64, 4
    $region5: #{tpu_custom_call.1} parent=1 // pred_fallthru
      _
    // Predicated region
    $region6: #{tpu_custom_call.1} parent=1 // pred_check
      _
    $region7: #{tpu_custom_call.1} parent=1 // pred_check_branch
      %24 = sbr.rel (0) target = $region9
    $region8: #{tpu_custom_call.1} parent=1 // pred_region
      %s26 = ssub.s32 256, 256
      %27 = vsyncadd [#allocation7], %s26
      %s28 = sshll.u32 [#allocation6], 4
      %s29 = int_to_ptr.vmem [resolvable:$true] %s28
      %34 = dma.hbm_to_vmem [thread:$0]  %s1, 256, %s29, [#allocation7], 64, 64, 4
    $region9: #{tpu_custom_call.1} parent=1 // pred_fallthru
      _
    // Predicated region
    $region10: #{tpu_custom_call.1} parent=1 // pred_check
      _
    $region11: #{tpu_custom_call.1} parent=1 // pred_check_branch
      %36 = sbr.rel (0) target = $region13
    $region12: #{tpu_custom_call.1} parent=1 // pred_region
      %s38 = ssub.s32 256, 256
      %39 = vsyncadd [#allocation7], %s38
      %s40 = sshll.u32 [#allocation8], 4
      %s41 = int_to_ptr.vmem [resolvable:$true] %s40
      %46 = dma.hbm_to_vmem [thread:$0]  %s2, 256, %s41, [#allocation7], 64, 64, 4
    $region13: #{tpu_custom_call.1} parent=1 // pred_fallthru
      _
    // Predicated region
    $region14: #{tpu_custom_call.1} parent=1 // pred_check
      _
    $region15: #{tpu_custom_call.1} parent=1 // pred_check_branch
      %48 = sbr.rel (0) target = $region17
    $region16: #{tpu_custom_call.1} parent=1 // pred_region
      %49 = dma.done [#allocation4], 512
    $region17: #{tpu_custom_call.1} parent=1 // pred_fallthru
      _
    // Predicated region
    $region18: #{tpu_custom_call.1} parent=1 // pred_check
      _
    $region19: #{tpu_custom_call.1} parent=1 // pred_check_branch
      %51 = sbr.rel (0) target = $region21
    $region20: #{tpu_custom_call.1} parent=1 // pred_region
      %52 = dma.done [#allocation7], 256
    $region21: #{tpu_custom_call.1} parent=1 // pred_fallthru
      _
    // Predicated region
    $region22: #{tpu_custom_call.1} parent=1 // pred_check
      _
    $region23: #{tpu_custom_call.1} parent=1 // pred_check_branch
      %54 = sbr.rel (0) target = $region25
    $region24: #{tpu_custom_call.1} parent=1 // pred_region
      %55 = dma.done [#allocation7], 256
    $region25: #{tpu_custom_call.1} parent=1 // pred_fallthru
      _
    %v57 = vld [vmem:[#allocation3] sm:$0xf]
    %v58 = vld [vmem:[#allocation3 + $0x4] sm:$0xf]
    %v59 = vld [vmem:[#allocation3 + $0x8] sm:$0xf]
    %v60 = vld [vmem:[#allocation3 + $0xc] sm:$0xf]
    %v61 = vld [vmem:[#allocation3 + $0x10] sm:$0xf]
    %v62 = vld [vmem:[#allocation3 + $0x14] sm:$0xf]
    %v63 = vld [vmem:[#allocation3 + $0x18] sm:$0xf]
    %v64 = vld [vmem:[#allocation3 + $0x1c] sm:$0xf]
    %v65 = vld [vmem:[#allocation6] sm:$0xf]
    %v66 = vld [vmem:[#allocation6 + $0x4] sm:$0xf]
    %v67 = vld [vmem:[#allocation6 + $0x8] sm:$0xf]
    %v68 = vld [vmem:[#allocation6 + $0xc] sm:$0xf]
    %v77 = vunpack.c.l.b16 %v57
    %v78 = vunpack.c.l.b16 %v58
    %v79 = vunpack.c.l.b16 %v59
    %v80 = vunpack.c.l.b16 %v60
    %v81 = vunpack.c.l.b16 %v61
    %v82 = vunpack.c.l.b16 %v62
    %v83 = vunpack.c.l.b16 %v63
    %v84 = vunpack.c.l.b16 %v64
    %v85 = vpack.c.b16 %v78, %v77
    %v86 = vpack.c.b16 %v80, %v79
    %v87 = vpack.c.b16 %v82, %v81
    %v88 = vpack.c.b16 %v84, %v83
    %v93 = vunpack.c.l.b16 %v65
    %v94 = vunpack.c.l.b16 %v66
    %v95 = vunpack.c.l.b16 %v67
    %v96 = vunpack.c.l.b16 %v68
    %v97 = vpack.c.b16 %v94, %v93
    %v98 = vpack.c.b16 %v96, %v95
    %vm101 = vcmask 261120
    %v103 = vsel %vm101, %v85, 0
    %v106 = vsel %vm101, %v86, 0
    %v109 = vsel %vm101, %v87, 0
    %v112 = vsel %vm101, %v88, 0
    %114 = vmatprep.subr.bf16.mxu0 0
    %115 = vmatpush1.bf16.msra.mxu0 0
    %116 = vmatprep.subr.bf16.mxu0 0
    %117 = vmatpush1.bf16.msra.mxu0 0
    %118 = vmatprep.subr.bf16.mxu0 0
    %119 = vmatpush1.bf16.msra.mxu0 0
    %120 = vmatprep.subr.bf16.mxu0 0
    %121 = vmatpush1.bf16.msra.mxu0 0
    %122 = vmatprep.subr.bf16.mxu0 0
    %123 = vmatpush1.bf16.msra.mxu0 0
    %124 = vmatprep.subr.bf16.mxu0 0
    %125 = vmatpush1.bf16.msra.mxu0 0
    %126 = vmatprep.subr.bf16.mxu0 0
    %127 = vmatpush1.bf16.msra.mxu0 %v98
    %128 = vmatprep.subr.bf16.mxu0 0
    %129 = vmatpush1.bf16.msra.mxu0 %v97
    %130 = vmatprep.subr.bf16.mxu0 0
    %131 = vmatpush2.bf16.msra.mxu0 0
    %132 = vmatprep.subr.bf16.mxu0 0
    %133 = vmatpush2.bf16.msra.mxu0 0
    %134 = vmatprep.subr.bf16.mxu0 0
    %135 = vmatpush2.bf16.msra.mxu0 0
    %136 = vmatprep.subr.bf16.mxu0 0
    %137 = vmatpush2.bf16.msra.mxu0 0
    %138 = vmatprep.subr.bf16.mxu0 0
    %139 = vmatpush2.bf16.msra.mxu0 0
    %140 = vmatprep.subr.bf16.mxu0 0
    %141 = vmatpush2.bf16.msra.mxu0 0
    %142 = vmatprep.subr.bf16.mxu0 0
    %143 = vmatpush2.bf16.msra.mxu0 0
    %144 = vmatprep.subr.bf16.mxu0 0
    %145 = vmatpush2.bf16.msra.mxu0 0
    %146 = vmatprep.mubr.bf16.mxu0 0
    %147 = vmatmul.mubr.bf16.gmra.mxu0 %v103
    %v148 = vpop.f32.mrf.mxu0
    %v149 = vadd.f32 0.0, %v148
    %v150 = vpop.f32.mrf.mxu0
    %v151 = vpop.f32.mrf.mxu0
    %v152 = vadd.f32 0.0, %v151
    %v153 = vpop.f32.mrf.mxu0
    %154 = vmatprep.mubr.bf16.mxu0 0
    %155 = vmatmul.mubr.bf16.gmra.mxu0 %v106
    %v156 = vpop.f32.mrf.mxu0
    %v157 = vadd.f32 0.0, %v156
    %v158 = vpop.f32.mrf.mxu0
    %v159 = vpop.f32.mrf.mxu0
    %v160 = vadd.f32 0.0, %v159
    %v161 = vpop.f32.mrf.mxu0
    %162 = vmatprep.mubr.bf16.mxu0 0
    %163 = vmatmul.mubr.bf16.gmra.mxu0 %v109
    %v164 = vpop.f32.mrf.mxu0
    %v165 = vadd.f32 0.0, %v164
    %v166 = vpop.f32.mrf.mxu0
    %v167 = vpop.f32.mrf.mxu0
    %v168 = vadd.f32 0.0, %v167
    %v169 = vpop.f32.mrf.mxu0
    %170 = vmatprep.mubr.bf16.mxu0 0
    %171 = vmatmul.mubr.bf16.gmra.mxu0 %v112
    %v172 = vpop.f32.mrf.mxu0
    %v173 = vadd.f32 0.0, %v172
    %v174 = vpop.f32.mrf.mxu0
    %v175 = vpop.f32.mrf.mxu0
    %v176 = vadd.f32 0.0, %v175
    %v177 = vpop.f32.mrf.mxu0
    %178 = vdwg.mxu0
    %v179 = vpack.c.bf16 %v152, %v149
    %v180 = vpack.c.bf16 %v160, %v157
    %v181 = vpack.c.bf16 %v168, %v165
    %v182 = vpack.c.bf16 %v176, %v173
    %v183 = vlaneseq
    %v184 = vand.u32 %v183, 127
    %vm185 = vcmp.lt.s32.totalorder %v184, 3
    %v190 = vunpack.c.l.b16 %v179
    %v191 = vunpack.c.h.b16 %v179
    %v192 = vunpack.c.l.b16 %v180
    %v193 = vunpack.c.h.b16 %v180
    %v194 = vunpack.c.l.b16 %v181
    %v195 = vunpack.c.h.b16 %v181
    %v196 = vunpack.c.l.b16 %v182
    %v197 = vunpack.c.h.b16 %v182
    %v198 = vpack.c.b16 %v190, %v190
    %v199 = vpack.c.b16 %v191, %v191
    %v200 = vpack.c.b16 %v192, %v192
    %v201 = vpack.c.b16 %v193, %v193
    %v202 = vpack.c.b16 %v194, %v194
    %v203 = vpack.c.b16 %v195, %v195
    %v204 = vpack.c.b16 %v196, %v196
    %v205 = vpack.c.b16 %v197, %v197
    %206 = vrot.lane.b32.xlu0 %v198, 96
    %v207 = vpop.permute.xlu0 %206
    %vm208 = vcmask 64512
    %v210 = vsel %vm208, %v198, 0
    %v213 = vsel %vm208, %v207, 0
    %215 = vmatprep.subr.bf16.mxu0 0
    %216 = vmatpush1.bf16.xpose.msra.mxu0 0
    %217 = vmatprep.subr.bf16.mxu0 0
    %218 = vmatpush1.bf16.xpose.msra.mxu0 0
    %219 = vmatprep.subr.bf16.mxu0 0
    %220 = vmatpush1.bf16.xpose.msra.mxu0 0
    %221 = vmatprep.subr.bf16.mxu0 0
    %222 = vmatpush1.bf16.xpose.msra.mxu0 0
    %223 = vmatprep.subr.bf16.mxu0 0
    %224 = vmatpush1.bf16.xpose.msra.mxu0 0
    %225 = vmatprep.subr.bf16.mxu0 0
    %226 = vmatpush1.bf16.xpose.msra.mxu0 0
    %227 = vmatprep.subr.bf16.mxu0 0
    %228 = vmatpush1.bf16.xpose.msra.mxu0 0
    %229 = vmatprep.subr.bf16.mxu0 0
    %230 = vmatpush1.bf16.xpose.msra.mxu0 %v213
    %231 = vmatprep.subr.bf16.mxu0 0
    %232 = vmatpush2.bf16.xpose.msra.mxu0 0
    %233 = vmatprep.subr.bf16.mxu0 0
    %234 = vmatpush2.bf16.xpose.msra.mxu0 0
    %235 = vmatprep.subr.bf16.mxu0 0
    %236 = vmatpush2.bf16.xpose.msra.mxu0 0
    %237 = vmatprep.subr.bf16.mxu0 0
    %238 = vmatpush2.bf16.xpose.msra.mxu0 0
    %239 = vmatprep.subr.bf16.mxu0 0
    %240 = vmatpush2.bf16.xpose.msra.mxu0 0
    %241 = vmatprep.subr.bf16.mxu0 0
    %242 = vmatpush2.bf16.xpose.msra.mxu0 0
    %243 = vmatprep.subr.bf16.mxu0 0
    %244 = vmatpush2.bf16.xpose.msra.mxu0 0
    %245 = vmatprep.subr.bf16.mxu0 0
    %246 = vmatpush2.bf16.xpose.msra.mxu0 0
    %247 = vmatprep.mubr.bf16.mxu0 0
    %248 = vmatmul.mubr.bf16.gmra.mxu0 %v210
    %v249 = vpop.f32.mrf.mxu0
    %v250 = vadd.f32 0.0, %v249
    %v251 = vpop.f32.mrf.mxu0
    %v252 = vpop.f32.mrf.mxu0
    %v253 = vpop.f32.mrf.mxu0
    %254 = vdwg.mxu0
    %255 = vrot.lane.b32.xlu0 %v199, 96
    %v256 = vpop.permute.xlu0 %255
    %v258 = vsel %vm208, %v199, 0
    %v261 = vsel %vm208, %v256, 0
    %263 = vmatprep.subr.bf16.mxu0 0
    %264 = vmatpush1.bf16.xpose.msra.mxu0 0
    %265 = vmatprep.subr.bf16.mxu0 0
    %266 = vmatpush1.bf16.xpose.msra.mxu0 0
    %267 = vmatprep.subr.bf16.mxu0 0
    %268 = vmatpush1.bf16.xpose.msra.mxu0 0
    %269 = vmatprep.subr.bf16.mxu0 0
    %270 = vmatpush1.bf16.xpose.msra.mxu0 0
    %271 = vmatprep.subr.bf16.mxu0 0
    %272 = vmatpush1.bf16.xpose.msra.mxu0 0
    %273 = vmatprep.subr.bf16.mxu0 0
    %274 = vmatpush1.bf16.xpose.msra.mxu0 0
    %275 = vmatprep.subr.bf16.mxu0 0
    %276 = vmatpush1.bf16.xpose.msra.mxu0 0
    %277 = vmatprep.subr.bf16.mxu0 0
    %278 = vmatpush1.bf16.xpose.msra.mxu0 %v261
    %279 = vmatprep.subr.bf16.mxu0 0
    %280 = vmatpush2.bf16.xpose.msra.mxu0 0
    %281 = vmatprep.subr.bf16.mxu0 0
    %282 = vmatpush2.bf16.xpose.msra.mxu0 0
    %283 = vmatprep.subr.bf16.mxu0 0
    %284 = vmatpush2.bf16.xpose.msra.mxu0 0
    %285 = vmatprep.subr.bf16.mxu0 0
    %286 = vmatpush2.bf16.xpose.msra.mxu0 0
    %287 = vmatprep.subr.bf16.mxu0 0
    %288 = vmatpush2.bf16.xpose.msra.mxu0 0
    %289 = vmatprep.subr.bf16.mxu0 0
    %290 = vmatpush2.bf16.xpose.msra.mxu0 0
    %291 = vmatprep.subr.bf16.mxu0 0
    %292 = vmatpush2.bf16.xpose.msra.mxu0 0
    %293 = vmatprep.subr.bf16.mxu0 0
    %294 = vmatpush2.bf16.xpose.msra.mxu0 0
    %295 = vmatprep.mubr.bf16.mxu0 0
    %296 = vmatmul.mubr.bf16.gmra.mxu0 %v258
    %v297 = vpop.f32.mrf.mxu0
    %v298 = vadd.f32 0.0, %v297
    %v299 = vpop.f32.mrf.mxu0
    %v300 = vpop.f32.mrf.mxu0
    %v301 = vpop.f32.mrf.mxu0
    %302 = vdwg.mxu0
    %303 = vrot.lane.b32.xlu0 %v200, 96
    %v304 = vpop.permute.xlu0 %303
    %v306 = vsel %vm208, %v200, 0
    %v309 = vsel %vm208, %v304, 0
    %311 = vmatprep.subr.bf16.mxu0 0
    %312 = vmatpush1.bf16.xpose.msra.mxu0 0
    %313 = vmatprep.subr.bf16.mxu0 0
    %314 = vmatpush1.bf16.xpose.msra.mxu0 0
    %315 = vmatprep.subr.bf16.mxu0 0
    %316 = vmatpush1.bf16.xpose.msra.mxu0 0
    %317 = vmatprep.subr.bf16.mxu0 0
    %318 = vmatpush1.bf16.xpose.msra.mxu0 0
    %319 = vmatprep.subr.bf16.mxu0 0
    %320 = vmatpush1.bf16.xpose.msra.mxu0 0
    %321 = vmatprep.subr.bf16.mxu0 0
    %322 = vmatpush1.bf16.xpose.msra.mxu0 0
    %323 = vmatprep.subr.bf16.mxu0 0
    %324 = vmatpush1.bf16.xpose.msra.mxu0 0
    %325 = vmatprep.subr.bf16.mxu0 0
    %326 = vmatpush1.bf16.xpose.msra.mxu0 %v309
    %327 = vmatprep.subr.bf16.mxu0 0
    %328 = vmatpush2.bf16.xpose.msra.mxu0 0
    %329 = vmatprep.subr.bf16.mxu0 0
    %330 = vmatpush2.bf16.xpose.msra.mxu0 0
    %331 = vmatprep.subr.bf16.mxu0 0
    %332 = vmatpush2.bf16.xpose.msra.mxu0 0
    %333 = vmatprep.subr.bf16.mxu0 0
    %334 = vmatpush2.bf16.xpose.msra.mxu0 0
    %335 = vmatprep.subr.bf16.mxu0 0
    %336 = vmatpush2.bf16.xpose.msra.mxu0 0
    %337 = vmatprep.subr.bf16.mxu0 0
    %338 = vmatpush2.bf16.xpose.msra.mxu0 0
    %339 = vmatprep.subr.bf16.mxu0 0
    %340 = vmatpush2.bf16.xpose.msra.mxu0 0
    %341 = vmatprep.subr.bf16.mxu0 0
    %342 = vmatpush2.bf16.xpose.msra.mxu0 0
    %343 = vmatprep.mubr.bf16.mxu0 0
    %344 = vmatmul.mubr.bf16.gmra.mxu0 %v306
    %v345 = vpop.f32.mrf.mxu0
    %v346 = vadd.f32 0.0, %v345
    %v347 = vpop.f32.mrf.mxu0
    %v348 = vpop.f32.mrf.mxu0
    %v349 = vpop.f32.mrf.mxu0
    %350 = vdwg.mxu0
    %351 = vrot.lane.b32.xlu0 %v201, 96
    %v352 = vpop.permute.xlu0 %351
    %v354 = vsel %vm208, %v201, 0
    %v357 = vsel %vm208, %v352, 0
    %359 = vmatprep.subr.bf16.mxu0 0
    %360 = vmatpush1.bf16.xpose.msra.mxu0 0
    %361 = vmatprep.subr.bf16.mxu0 0
    %362 = vmatpush1.bf16.xpose.msra.mxu0 0
    %363 = vmatprep.subr.bf16.mxu0 0
    %364 = vmatpush1.bf16.xpose.msra.mxu0 0
    %365 = vmatprep.subr.bf16.mxu0 0
    %366 = vmatpush1.bf16.xpose.msra.mxu0 0
    %367 = vmatprep.subr.bf16.mxu0 0
    %368 = vmatpush1.bf16.xpose.msra.mxu0 0
    %369 = vmatprep.subr.bf16.mxu0 0
    %370 = vmatpush1.bf16.xpose.msra.mxu0 0
    %371 = vmatprep.subr.bf16.mxu0 0
    %372 = vmatpush1.bf16.xpose.msra.mxu0 0
    %373 = vmatprep.subr.bf16.mxu0 0
    %374 = vmatpush1.bf16.xpose.msra.mxu0 %v357
    %375 = vmatprep.subr.bf16.mxu0 0
    %376 = vmatpush2.bf16.xpose.msra.mxu0 0
    %377 = vmatprep.subr.bf16.mxu0 0
    %378 = vmatpush2.bf16.xpose.msra.mxu0 0
    %379 = vmatprep.subr.bf16.mxu0 0
    %380 = vmatpush2.bf16.xpose.msra.mxu0 0
    %381 = vmatprep.subr.bf16.mxu0 0
    %382 = vmatpush2.bf16.xpose.msra.mxu0 0
    %383 = vmatprep.subr.bf16.mxu0 0
    %384 = vmatpush2.bf16.xpose.msra.mxu0 0
    %385 = vmatprep.subr.bf16.mxu0 0
    %386 = vmatpush2.bf16.xpose.msra.mxu0 0
    %387 = vmatprep.subr.bf16.mxu0 0
    %388 = vmatpush2.bf16.xpose.msra.mxu0 0
    %389 = vmatprep.subr.bf16.mxu0 0
    %390 = vmatpush2.bf16.xpose.msra.mxu0 0
    %391 = vmatprep.mubr.bf16.mxu0 0
    %392 = vmatmul.mubr.bf16.gmra.mxu0 %v354
    %v393 = vpop.f32.mrf.mxu0
    %v394 = vadd.f32 0.0, %v393
    %v395 = vpop.f32.mrf.mxu0
    %v396 = vpop.f32.mrf.mxu0
    %v397 = vpop.f32.mrf.mxu0
    %398 = vdwg.mxu0
    %399 = vrot.lane.b32.xlu0 %v202, 96
    %v400 = vpop.permute.xlu0 %399
    %v402 = vsel %vm208, %v202, 0
    %v405 = vsel %vm208, %v400, 0
    %407 = vmatprep.subr.bf16.mxu0 0
    %408 = vmatpush1.bf16.xpose.msra.mxu0 0
    %409 = vmatprep.subr.bf16.mxu0 0
    %410 = vmatpush1.bf16.xpose.msra.mxu0 0
    %411 = vmatprep.subr.bf16.mxu0 0
    %412 = vmatpush1.bf16.xpose.msra.mxu0 0
    %413 = vmatprep.subr.bf16.mxu0 0
    %414 = vmatpush1.bf16.xpose.msra.mxu0 0
    %415 = vmatprep.subr.bf16.mxu0 0
    %416 = vmatpush1.bf16.xpose.msra.mxu0 0
    %417 = vmatprep.subr.bf16.mxu0 0
    %418 = vmatpush1.bf16.xpose.msra.mxu0 0
    %419 = vmatprep.subr.bf16.mxu0 0
    %420 = vmatpush1.bf16.xpose.msra.mxu0 0
    %421 = vmatprep.subr.bf16.mxu0 0
    %422 = vmatpush1.bf16.xpose.msra.mxu0 %v405
    %423 = vmatprep.subr.bf16.mxu0 0
    %424 = vmatpush2.bf16.xpose.msra.mxu0 0
    %425 = vmatprep.subr.bf16.mxu0 0
    %426 = vmatpush2.bf16.xpose.msra.mxu0 0
    %427 = vmatprep.subr.bf16.mxu0 0
    %428 = vmatpush2.bf16.xpose.msra.mxu0 0
    %429 = vmatprep.subr.bf16.mxu0 0
    %430 = vmatpush2.bf16.xpose.msra.mxu0 0
    %431 = vmatprep.subr.bf16.mxu0 0
    %432 = vmatpush2.bf16.xpose.msra.mxu0 0
    %433 = vmatprep.subr.bf16.mxu0 0
    %434 = vmatpush2.bf16.xpose.msra.mxu0 0
    %435 = vmatprep.subr.bf16.mxu0 0
    %436 = vmatpush2.bf16.xpose.msra.mxu0 0
    %437 = vmatprep.subr.bf16.mxu0 0
    %438 = vmatpush2.bf16.xpose.msra.mxu0 0
    %439 = vmatprep.mubr.bf16.mxu0 0
    %440 = vmatmul.mubr.bf16.gmra.mxu0 %v402
    %v441 = vpop.f32.mrf.mxu0
    %v442 = vadd.f32 0.0, %v441
    %v443 = vpop.f32.mrf.mxu0
    %v444 = vpop.f32.mrf.mxu0
    %v445 = vpop.f32.mrf.mxu0
    %446 = vdwg.mxu0
    %447 = vrot.lane.b32.xlu0 %v203, 96
    %v448 = vpop.permute.xlu0 %447
    %v450 = vsel %vm208, %v203, 0
    %v453 = vsel %vm208, %v448, 0
    %455 = vmatprep.subr.bf16.mxu0 0
    %456 = vmatpush1.bf16.xpose.msra.mxu0 0
    %457 = vmatprep.subr.bf16.mxu0 0
    %458 = vmatpush1.bf16.xpose.msra.mxu0 0
    %459 = vmatprep.subr.bf16.mxu0 0
    %460 = vmatpush1.bf16.xpose.msra.mxu0 0
    %461 = vmatprep.subr.bf16.mxu0 0
    %462 = vmatpush1.bf16.xpose.msra.mxu0 0
    %463 = vmatprep.subr.bf16.mxu0 0
    %464 = vmatpush1.bf16.xpose.msra.mxu0 0
    %465 = vmatprep.subr.bf16.mxu0 0
    %466 = vmatpush1.bf16.xpose.msra.mxu0 0
    %467 = vmatprep.subr.bf16.mxu0 0
    %468 = vmatpush1.bf16.xpose.msra.mxu0 0
    %469 = vmatprep.subr.bf16.mxu0 0
    %470 = vmatpush1.bf16.xpose.msra.mxu0 %v453
    %471 = vmatprep.subr.bf16.mxu0 0
    %472 = vmatpush2.bf16.xpose.msra.mxu0 0
    %473 = vmatprep.subr.bf16.mxu0 0
    %474 = vmatpush2.bf16.xpose.msra.mxu0 0
    %475 = vmatprep.subr.bf16.mxu0 0
    %476 = vmatpush2.bf16.xpose.msra.mxu0 0
    %477 = vmatprep.subr.bf16.mxu0 0
    %478 = vmatpush2.bf16.xpose.msra.mxu0 0
    %479 = vmatprep.subr.bf16.mxu0 0
    %480 = vmatpush2.bf16.xpose.msra.mxu0 0
    %481 = vmatprep.subr.bf16.mxu0 0
    %482 = vmatpush2.bf16.xpose.msra.mxu0 0
    %483 = vmatprep.subr.bf16.mxu0 0
    %484 = vmatpush2.bf16.xpose.msra.mxu0 0
    %485 = vmatprep.subr.bf16.mxu0 0
    %486 = vmatpush2.bf16.xpose.msra.mxu0 0
    %487 = vmatprep.mubr.bf16.mxu0 0
    %488 = vmatmul.mubr.bf16.gmra.mxu0 %v450
    %v489 = vpop.f32.mrf.mxu0
    %v490 = vadd.f32 0.0, %v489
    %v491 = vpop.f32.mrf.mxu0
    %v492 = vpop.f32.mrf.mxu0
    %v493 = vpop.f32.mrf.mxu0
    %494 = vdwg.mxu0
    %495 = vrot.lane.b32.xlu0 %v204, 96
    %v496 = vpop.permute.xlu0 %495
    %v498 = vsel %vm208, %v204, 0
    %v501 = vsel %vm208, %v496, 0
    %503 = vmatprep.subr.bf16.mxu0 0
    %504 = vmatpush1.bf16.xpose.msra.mxu0 0
    %505 = vmatprep.subr.bf16.mxu0 0
    %506 = vmatpush1.bf16.xpose.msra.mxu0 0
    %507 = vmatprep.subr.bf16.mxu0 0
    %508 = vmatpush1.bf16.xpose.msra.mxu0 0
    %509 = vmatprep.subr.bf16.mxu0 0
    %510 = vmatpush1.bf16.xpose.msra.mxu0 0
    %511 = vmatprep.subr.bf16.mxu0 0
    %512 = vmatpush1.bf16.xpose.msra.mxu0 0
    %513 = vmatprep.subr.bf16.mxu0 0
    %514 = vmatpush1.bf16.xpose.msra.mxu0 0
    %515 = vmatprep.subr.bf16.mxu0 0
    %516 = vmatpush1.bf16.xpose.msra.mxu0 0
    %517 = vmatprep.subr.bf16.mxu0 0
    %518 = vmatpush1.bf16.xpose.msra.mxu0 %v501
    %519 = vmatprep.subr.bf16.mxu0 0
    %520 = vmatpush2.bf16.xpose.msra.mxu0 0
    %521 = vmatprep.subr.bf16.mxu0 0
    %522 = vmatpush2.bf16.xpose.msra.mxu0 0
    %523 = vmatprep.subr.bf16.mxu0 0
    %524 = vmatpush2.bf16.xpose.msra.mxu0 0
    %525 = vmatprep.subr.bf16.mxu0 0
    %526 = vmatpush2.bf16.xpose.msra.mxu0 0
    %527 = vmatprep.subr.bf16.mxu0 0
    %528 = vmatpush2.bf16.xpose.msra.mxu0 0
    %529 = vmatprep.subr.bf16.mxu0 0
    %530 = vmatpush2.bf16.xpose.msra.mxu0 0
    %531 = vmatprep.subr.bf16.mxu0 0
    %532 = vmatpush2.bf16.xpose.msra.mxu0 0
    %533 = vmatprep.subr.bf16.mxu0 0
    %534 = vmatpush2.bf16.xpose.msra.mxu0 0
    %535 = vmatprep.mubr.bf16.mxu0 0
    %536 = vmatmul.mubr.bf16.gmra.mxu0 %v498
    %v537 = vpop.f32.mrf.mxu0
    %v538 = vadd.f32 0.0, %v537
    %v539 = vpop.f32.mrf.mxu0
    %v540 = vpop.f32.mrf.mxu0
    %v541 = vpop.f32.mrf.mxu0
    %542 = vdwg.mxu0
    %543 = vrot.lane.b32.xlu0 %v205, 96
    %v544 = vpop.permute.xlu0 %543
    %v546 = vsel %vm208, %v205, 0
    %v549 = vsel %vm208, %v544, 0
    %551 = vmatprep.subr.bf16.mxu0 0
    %552 = vmatpush1.bf16.xpose.msra.mxu0 0
    %553 = vmatprep.subr.bf16.mxu0 0
    %554 = vmatpush1.bf16.xpose.msra.mxu0 0
    %555 = vmatprep.subr.bf16.mxu0 0
    %556 = vmatpush1.bf16.xpose.msra.mxu0 0
    %557 = vmatprep.subr.bf16.mxu0 0
    %558 = vmatpush1.bf16.xpose.msra.mxu0 0
    %559 = vmatprep.subr.bf16.mxu0 0
    %560 = vmatpush1.bf16.xpose.msra.mxu0 0
    %561 = vmatprep.subr.bf16.mxu0 0
    %562 = vmatpush1.bf16.xpose.msra.mxu0 0
    %563 = vmatprep.subr.bf16.mxu0 0
    %564 = vmatpush1.bf16.xpose.msra.mxu0 0
    %565 = vmatprep.subr.bf16.mxu0 0
    %566 = vmatpush1.bf16.xpose.msra.mxu0 %v549
    %567 = vmatprep.subr.bf16.mxu0 0
    %568 = vmatpush2.bf16.xpose.msra.mxu0 0
    %569 = vmatprep.subr.bf16.mxu0 0
    %570 = vmatpush2.bf16.xpose.msra.mxu0 0
    %571 = vmatprep.subr.bf16.mxu0 0
    %572 = vmatpush2.bf16.xpose.msra.mxu0 0
    %573 = vmatprep.subr.bf16.mxu0 0
    %574 = vmatpush2.bf16.xpose.msra.mxu0 0
    %575 = vmatprep.subr.bf16.mxu0 0
    %576 = vmatpush2.bf16.xpose.msra.mxu0 0
    %577 = vmatprep.subr.bf16.mxu0 0
    %578 = vmatpush2.bf16.xpose.msra.mxu0 0
    %579 = vmatprep.subr.bf16.mxu0 0
    %580 = vmatpush2.bf16.xpose.msra.mxu0 0
    %581 = vmatprep.subr.bf16.mxu0 0
    %582 = vmatpush2.bf16.xpose.msra.mxu0 0
    %583 = vmatprep.mubr.bf16.mxu0 0
    %584 = vmatmul.mubr.bf16.gmra.mxu0 %v546
    %v585 = vpop.f32.mrf.mxu0
    %v586 = vadd.f32 0.0, %v585
    %v587 = vpop.f32.mrf.mxu0
    %v588 = vpop.f32.mrf.mxu0
    %v589 = vpop.f32.mrf.mxu0
    %590 = vdwg.mxu0
    %v591 = vsel %vm185, 1, 0
    %vm592 = vcmp.eq.s32.totalorder %v591, 1
    %v593 = vsel %vm592, %v250, -1e+30
    %v594 = vsel %vm592, %v298, -1e+30
    %v595 = vsel %vm592, %v346, -1e+30
    %v596 = vsel %vm592, %v394, -1e+30
    %v597 = vsel %vm592, %v442, -1e+30
    %v598 = vsel %vm592, %v490, -1e+30
    %v599 = vsel %vm592, %v538, -1e+30
    %v600 = vsel %vm592, %v586, -1e+30
    %v601 = vsel %vm208, %v593, -inf
    %602 = vmax.xlane.f32.xlu0 %v601
    %v603 = vpop.xlane.xlu0 %602
    %v604 = vsel %vm208, %v594, -inf
    %605 = vmax.xlane.f32.xlu0 %v604
    %v606 = vpop.xlane.xlu0 %605
    %v607 = vsel %vm208, %v595, -inf
    %608 = vmax.xlane.f32.xlu0 %v607
    %v609 = vpop.xlane.xlu0 %608
    %v610 = vsel %vm208, %v596, -inf
    %611 = vmax.xlane.f32.xlu0 %v610
    %v612 = vpop.xlane.xlu0 %611
    %v613 = vsel %vm208, %v597, -inf
    %614 = vmax.xlane.f32.xlu0 %v613
    %v615 = vpop.xlane.xlu0 %614
    %v616 = vsel %vm208, %v598, -inf
    %617 = vmax.xlane.f32.xlu0 %v616
    %v618 = vpop.xlane.xlu0 %617
    %v619 = vsel %vm208, %v599, -inf
    %620 = vmax.xlane.f32.xlu0 %v619
    %v621 = vpop.xlane.xlu0 %620
    %v622 = vsel %vm208, %v600, -inf
    %623 = vmax.xlane.f32.xlu0 %v622
    %v624 = vpop.xlane.xlu0 %623
    %v625 = vsub.f32 %v593, %v603
    %v626 = vsub.f32 %v594, %v606
    %v627 = vsub.f32 %v595, %v609
    %v628 = vsub.f32 %v596, %v612
    %v629 = vsub.f32 %v597, %v615
    %v630 = vsub.f32 %v598, %v618
    %v631 = vsub.f32 %v599, %v621
    %v632 = vsub.f32 %v600, %v624
    %v633 = vmul.f32 %v625, 1.442695
    %v634 = vpow.pop %v633
    %v635 = vmul.f32 %v626, 1.442695
    %v636 = vpow.pop %v635
    %v637 = vmul.f32 %v627, 1.442695
    %v638 = vpow.pop %v637
    %v639 = vmul.f32 %v628, 1.442695
    %v640 = vpow.pop %v639
    %v641 = vmul.f32 %v629, 1.442695
    %v642 = vpow.pop %v641
    %v643 = vmul.f32 %v630, 1.442695
    %v644 = vpow.pop %v643
    %v645 = vmul.f32 %v631, 1.442695
    %v646 = vpow.pop %v645
    %v647 = vmul.f32 %v632, 1.442695
    %v648 = vpow.pop %v647
    %v649 = vsel %vm208, %v634, 0.0
    %650 = vadd.xlane.f32.xlu0 %v649
    %v651 = vpop.xlane.xlu0 %650
    %v652 = vsel %vm208, %v636, 0.0
    %653 = vadd.xlane.f32.xlu0 %v652
    %v654 = vpop.xlane.xlu0 %653
    %v655 = vsel %vm208, %v638, 0.0
    %656 = vadd.xlane.f32.xlu0 %v655
    %v657 = vpop.xlane.xlu0 %656
    %v658 = vsel %vm208, %v640, 0.0
    %659 = vadd.xlane.f32.xlu0 %v658
    %v660 = vpop.xlane.xlu0 %659
    %v661 = vsel %vm208, %v642, 0.0
    %662 = vadd.xlane.f32.xlu0 %v661
    %v663 = vpop.xlane.xlu0 %662
    %v664 = vsel %vm208, %v644, 0.0
    %665 = vadd.xlane.f32.xlu0 %v664
    %v666 = vpop.xlane.xlu0 %665
    %v667 = vsel %vm208, %v646, 0.0
    %668 = vadd.xlane.f32.xlu0 %v667
    %v669 = vpop.xlane.xlu0 %668
    %v670 = vsel %vm208, %v648, 0.0
    %671 = vadd.xlane.f32.xlu0 %v670
    %v672 = vpop.xlane.xlu0 %671
    %v673 = vpack.c.bf16 %v634, %v634
    %v674 = vpack.c.bf16 %v636, %v636
    %v675 = vpack.c.bf16 %v638, %v638
    %v676 = vpack.c.bf16 %v640, %v640
    %v677 = vpack.c.bf16 %v642, %v642
    %v678 = vpack.c.bf16 %v644, %v644
    %v679 = vpack.c.bf16 %v646, %v646
    %v680 = vpack.c.bf16 %v648, %v648
    %681 = vrot.lane.b32.xlu0 %v198, 64
    %v682 = vpop.permute.xlu0 %681
    %v684 = vsel %vm208, %v673, 0
    %vm686 = vcmask 1043456
    %v688 = vsel %vm686, %v682, 0
    %690 = vmatprep.subr.bf16.mxu0 0
    %691 = vmatpush1.bf16.msra.mxu0 0
    %692 = vmatprep.subr.bf16.mxu0 0
    %693 = vmatpush1.bf16.msra.mxu0 0
    %694 = vmatprep.subr.bf16.mxu0 0
    %695 = vmatpush1.bf16.msra.mxu0 0
    %696 = vmatprep.subr.bf16.mxu0 0
    %697 = vmatpush1.bf16.msra.mxu0 0
    %698 = vmatprep.subr.bf16.mxu0 0
    %699 = vmatpush1.bf16.msra.mxu0 0
    %700 = vmatprep.subr.bf16.mxu0 0
    %701 = vmatpush1.bf16.msra.mxu0 0
    %702 = vmatprep.subr.bf16.mxu0 0
    %703 = vmatpush1.bf16.msra.mxu0 0
    %704 = vmatprep.subr.bf16.mxu0 0
    %705 = vmatpush1.bf16.msra.mxu0 %v688
    %706 = vmatprep.subr.bf16.mxu0 0
    %707 = vmatpush2.bf16.msra.mxu0 0
    %708 = vmatprep.subr.bf16.mxu0 0
    %709 = vmatpush2.bf16.msra.mxu0 0
    %710 = vmatprep.subr.bf16.mxu0 0
    %711 = vmatpush2.bf16.msra.mxu0 0
    %712 = vmatprep.subr.bf16.mxu0 0
    %713 = vmatpush2.bf16.msra.mxu0 0
    %714 = vmatprep.subr.bf16.mxu0 0
    %715 = vmatpush2.bf16.msra.mxu0 0
    %716 = vmatprep.subr.bf16.mxu0 0
    %717 = vmatpush2.bf16.msra.mxu0 0
    %718 = vmatprep.subr.bf16.mxu0 0
    %719 = vmatpush2.bf16.msra.mxu0 0
    %720 = vmatprep.subr.bf16.mxu0 0
    %721 = vmatpush2.bf16.msra.mxu0 0
    %722 = vmatprep.mubr.bf16.mxu0 0
    %723 = vmatmul.mubr.bf16.gmra.mxu0 %v684
    %v724 = vpop.f32.mrf.mxu0
    %v725 = vadd.f32 0.0, %v724
    %v726 = vpop.f32.mrf.mxu0
    %v727 = vpop.f32.mrf.mxu0
    %v728 = vpop.f32.mrf.mxu0
    %729 = vdwg.mxu0
    %730 = vrot.lane.b32.xlu0 %v199, 64
    %v731 = vpop.permute.xlu0 %730
    %v733 = vsel %vm208, %v674, 0
    %v736 = vsel %vm686, %v731, 0
    %738 = vmatprep.subr.bf16.mxu0 0
    %739 = vmatpush1.bf16.msra.mxu0 0
    %740 = vmatprep.subr.bf16.mxu0 0
    %741 = vmatpush1.bf16.msra.mxu0 0
    %742 = vmatprep.subr.bf16.mxu0 0
    %743 = vmatpush1.bf16.msra.mxu0 0
    %744 = vmatprep.subr.bf16.mxu0 0
    %745 = vmatpush1.bf16.msra.mxu0 0
    %746 = vmatprep.subr.bf16.mxu0 0
    %747 = vmatpush1.bf16.msra.mxu0 0
    %748 = vmatprep.subr.bf16.mxu0 0
    %749 = vmatpush1.bf16.msra.mxu0 0
    %750 = vmatprep.subr.bf16.mxu0 0
    %751 = vmatpush1.bf16.msra.mxu0 0
    %752 = vmatprep.subr.bf16.mxu0 0
    %753 = vmatpush1.bf16.msra.mxu0 %v736
    %754 = vmatprep.subr.bf16.mxu0 0
    %755 = vmatpush2.bf16.msra.mxu0 0
    %756 = vmatprep.subr.bf16.mxu0 0
    %757 = vmatpush2.bf16.msra.mxu0 0
    %758 = vmatprep.subr.bf16.mxu0 0
    %759 = vmatpush2.bf16.msra.mxu0 0
    %760 = vmatprep.subr.bf16.mxu0 0
    %761 = vmatpush2.bf16.msra.mxu0 0
    %762 = vmatprep.subr.bf16.mxu0 0
    %763 = vmatpush2.bf16.msra.mxu0 0
    %764 = vmatprep.subr.bf16.mxu0 0
    %765 = vmatpush2.bf16.msra.mxu0 0
    %766 = vmatprep.subr.bf16.mxu0 0
    %767 = vmatpush2.bf16.msra.mxu0 0
    %768 = vmatprep.subr.bf16.mxu0 0
    %769 = vmatpush2.bf16.msra.mxu0 0
    %770 = vmatprep.mubr.bf16.mxu0 0
    %771 = vmatmul.mubr.bf16.gmra.mxu0 %v733
    %v772 = vpop.f32.mrf.mxu0
    %v773 = vadd.f32 0.0, %v772
    %v774 = vpop.f32.mrf.mxu0
    %v775 = vpop.f32.mrf.mxu0
    %v776 = vpop.f32.mrf.mxu0
    %777 = vdwg.mxu0
    %778 = vrot.lane.b32.xlu0 %v200, 64
    %v779 = vpop.permute.xlu0 %778
    %v781 = vsel %vm208, %v675, 0
    %v784 = vsel %vm686, %v779, 0
    %786 = vmatprep.subr.bf16.mxu0 0
    %787 = vmatpush1.bf16.msra.mxu0 0
    %788 = vmatprep.subr.bf16.mxu0 0
    %789 = vmatpush1.bf16.msra.mxu0 0
    %790 = vmatprep.subr.bf16.mxu0 0
    %791 = vmatpush1.bf16.msra.mxu0 0
    %792 = vmatprep.subr.bf16.mxu0 0
    %793 = vmatpush1.bf16.msra.mxu0 0
    %794 = vmatprep.subr.bf16.mxu0 0
    %795 = vmatpush1.bf16.msra.mxu0 0
    %796 = vmatprep.subr.bf16.mxu0 0
    %797 = vmatpush1.bf16.msra.mxu0 0
    %798 = vmatprep.subr.bf16.mxu0 0
    %799 = vmatpush1.bf16.msra.mxu0 0
    %800 = vmatprep.subr.bf16.mxu0 0
    %801 = vmatpush1.bf16.msra.mxu0 %v784
    %802 = vmatprep.subr.bf16.mxu0 0
    %803 = vmatpush2.bf16.msra.mxu0 0
    %804 = vmatprep.subr.bf16.mxu0 0
    %805 = vmatpush2.bf16.msra.mxu0 0
    %806 = vmatprep.subr.bf16.mxu0 0
    %807 = vmatpush2.bf16.msra.mxu0 0
    %808 = vmatprep.subr.bf16.mxu0 0
    %809 = vmatpush2.bf16.msra.mxu0 0
    %810 = vmatprep.subr.bf16.mxu0 0
    %811 = vmatpush2.bf16.msra.mxu0 0
    %812 = vmatprep.subr.bf16.mxu0 0
    %813 = vmatpush2.bf16.msra.mxu0 0
    %814 = vmatprep.subr.bf16.mxu0 0
    %815 = vmatpush2.bf16.msra.mxu0 0
    %816 = vmatprep.subr.bf16.mxu0 0
    %817 = vmatpush2.bf16.msra.mxu0 0
    %818 = vmatprep.mubr.bf16.mxu0 0
    %819 = vmatmul.mubr.bf16.gmra.mxu0 %v781
    %v820 = vpop.f32.mrf.mxu0
    %v821 = vadd.f32 0.0, %v820
    %v822 = vpop.f32.mrf.mxu0
    %v823 = vpop.f32.mrf.mxu0
    %v824 = vpop.f32.mrf.mxu0
    %825 = vdwg.mxu0
    %826 = vrot.lane.b32.xlu0 %v201, 64
    %v827 = vpop.permute.xlu0 %826
    %v829 = vsel %vm208, %v676, 0
    %v832 = vsel %vm686, %v827, 0
    %834 = vmatprep.subr.bf16.mxu0 0
    %835 = vmatpush1.bf16.msra.mxu0 0
    %836 = vmatprep.subr.bf16.mxu0 0
    %837 = vmatpush1.bf16.msra.mxu0 0
    %838 = vmatprep.subr.bf16.mxu0 0
    %839 = vmatpush1.bf16.msra.mxu0 0
    %840 = vmatprep.subr.bf16.mxu0 0
    %841 = vmatpush1.bf16.msra.mxu0 0
    %842 = vmatprep.subr.bf16.mxu0 0
    %843 = vmatpush1.bf16.msra.mxu0 0
    %844 = vmatprep.subr.bf16.mxu0 0
    %845 = vmatpush1.bf16.msra.mxu0 0
    %846 = vmatprep.subr.bf16.mxu0 0
    %847 = vmatpush1.bf16.msra.mxu0 0
    %848 = vmatprep.subr.bf16.mxu0 0
    %849 = vmatpush1.bf16.msra.mxu0 %v832
    %850 = vmatprep.subr.bf16.mxu0 0
    %851 = vmatpush2.bf16.msra.mxu0 0
    %852 = vmatprep.subr.bf16.mxu0 0
    %853 = vmatpush2.bf16.msra.mxu0 0
    %854 = vmatprep.subr.bf16.mxu0 0
    %855 = vmatpush2.bf16.msra.mxu0 0
    %856 = vmatprep.subr.bf16.mxu0 0
    %857 = vmatpush2.bf16.msra.mxu0 0
    %858 = vmatprep.subr.bf16.mxu0 0
    %859 = vmatpush2.bf16.msra.mxu0 0
    %860 = vmatprep.subr.bf16.mxu0 0
    %861 = vmatpush2.bf16.msra.mxu0 0
    %862 = vmatprep.subr.bf16.mxu0 0
    %863 = vmatpush2.bf16.msra.mxu0 0
    %864 = vmatprep.subr.bf16.mxu0 0
    %865 = vmatpush2.bf16.msra.mxu0 0
    %866 = vmatprep.mubr.bf16.mxu0 0
    %867 = vmatmul.mubr.bf16.gmra.mxu0 %v829
    %v868 = vpop.f32.mrf.mxu0
    %v869 = vadd.f32 0.0, %v868
    %v870 = vpop.f32.mrf.mxu0
    %v871 = vpop.f32.mrf.mxu0
    %v872 = vpop.f32.mrf.mxu0
    %873 = vdwg.mxu0
    %874 = vrot.lane.b32.xlu0 %v202, 64
    %v875 = vpop.permute.xlu0 %874
    %v877 = vsel %vm208, %v677, 0
    %v880 = vsel %vm686, %v875, 0
    %882 = vmatprep.subr.bf16.mxu0 0
    %883 = vmatpush1.bf16.msra.mxu0 0
    %884 = vmatprep.subr.bf16.mxu0 0
    %885 = vmatpush1.bf16.msra.mxu0 0
    %886 = vmatprep.subr.bf16.mxu0 0
    %887 = vmatpush1.bf16.msra.mxu0 0
    %888 = vmatprep.subr.bf16.mxu0 0
    %889 = vmatpush1.bf16.msra.mxu0 0
    %890 = vmatprep.subr.bf16.mxu0 0
    %891 = vmatpush1.bf16.msra.mxu0 0
    %892 = vmatprep.subr.bf16.mxu0 0
    %893 = vmatpush1.bf16.msra.mxu0 0
    %894 = vmatprep.subr.bf16.mxu0 0
    %895 = vmatpush1.bf16.msra.mxu0 0
    %896 = vmatprep.subr.bf16.mxu0 0
    %897 = vmatpush1.bf16.msra.mxu0 %v880
    %898 = vmatprep.subr.bf16.mxu0 0
    %899 = vmatpush2.bf16.msra.mxu0 0
    %900 = vmatprep.subr.bf16.mxu0 0
    %901 = vmatpush2.bf16.msra.mxu0 0
    %902 = vmatprep.subr.bf16.mxu0 0
    %903 = vmatpush2.bf16.msra.mxu0 0
    %904 = vmatprep.subr.bf16.mxu0 0
    %905 = vmatpush2.bf16.msra.mxu0 0
    %906 = vmatprep.subr.bf16.mxu0 0
    %907 = vmatpush2.bf16.msra.mxu0 0
    %908 = vmatprep.subr.bf16.mxu0 0
    %909 = vmatpush2.bf16.msra.mxu0 0
    %910 = vmatprep.subr.bf16.mxu0 0
    %911 = vmatpush2.bf16.msra.mxu0 0
    %912 = vmatprep.subr.bf16.mxu0 0
    %913 = vmatpush2.bf16.msra.mxu0 0
    %914 = vmatprep.mubr.bf16.mxu0 0
    %915 = vmatmul.mubr.bf16.gmra.mxu0 %v877
    %v916 = vpop.f32.mrf.mxu0
    %v917 = vadd.f32 0.0, %v916
    %v918 = vpop.f32.mrf.mxu0
    %v919 = vpop.f32.mrf.mxu0
    %v920 = vpop.f32.mrf.mxu0
    %921 = vdwg.mxu0
    %922 = vrot.lane.b32.xlu0 %v203, 64
    %v923 = vpop.permute.xlu0 %922
    %v925 = vsel %vm208, %v678, 0
    %v928 = vsel %vm686, %v923, 0
    %930 = vmatprep.subr.bf16.mxu0 0
    %931 = vmatpush1.bf16.msra.mxu0 0
    %932 = vmatprep.subr.bf16.mxu0 0
    %933 = vmatpush1.bf16.msra.mxu0 0
    %934 = vmatprep.subr.bf16.mxu0 0
    %935 = vmatpush1.bf16.msra.mxu0 0
    %936 = vmatprep.subr.bf16.mxu0 0
    %937 = vmatpush1.bf16.msra.mxu0 0
    %938 = vmatprep.subr.bf16.mxu0 0
    %939 = vmatpush1.bf16.msra.mxu0 0
    %940 = vmatprep.subr.bf16.mxu0 0
    %941 = vmatpush1.bf16.msra.mxu0 0
    %942 = vmatprep.subr.bf16.mxu0 0
    %943 = vmatpush1.bf16.msra.mxu0 0
    %944 = vmatprep.subr.bf16.mxu0 0
    %945 = vmatpush1.bf16.msra.mxu0 %v928
    %946 = vmatprep.subr.bf16.mxu0 0
    %947 = vmatpush2.bf16.msra.mxu0 0
    %948 = vmatprep.subr.bf16.mxu0 0
    %949 = vmatpush2.bf16.msra.mxu0 0
    %950 = vmatprep.subr.bf16.mxu0 0
    %951 = vmatpush2.bf16.msra.mxu0 0
    %952 = vmatprep.subr.bf16.mxu0 0
    %953 = vmatpush2.bf16.msra.mxu0 0
    %954 = vmatprep.subr.bf16.mxu0 0
    %955 = vmatpush2.bf16.msra.mxu0 0
    %956 = vmatprep.subr.bf16.mxu0 0
    %957 = vmatpush2.bf16.msra.mxu0 0
    %958 = vmatprep.subr.bf16.mxu0 0
    %959 = vmatpush2.bf16.msra.mxu0 0
    %960 = vmatprep.subr.bf16.mxu0 0
    %961 = vmatpush2.bf16.msra.mxu0 0
    %962 = vmatprep.mubr.bf16.mxu0 0
    %963 = vmatmul.mubr.bf16.gmra.mxu0 %v925
    %v964 = vpop.f32.mrf.mxu0
    %v965 = vadd.f32 0.0, %v964
    %v966 = vpop.f32.mrf.mxu0
    %v967 = vpop.f32.mrf.mxu0
    %v968 = vpop.f32.mrf.mxu0
    %969 = vdwg.mxu0
    %970 = vrot.lane.b32.xlu0 %v204, 64
    %v971 = vpop.permute.xlu0 %970
    %v973 = vsel %vm208, %v679, 0
    %v976 = vsel %vm686, %v971, 0
    %978 = vmatprep.subr.bf16.mxu0 0
    %979 = vmatpush1.bf16.msra.mxu0 0
    %980 = vmatprep.subr.bf16.mxu0 0
    %981 = vmatpush1.bf16.msra.mxu0 0
    %982 = vmatprep.subr.bf16.mxu0 0
    %983 = vmatpush1.bf16.msra.mxu0 0
    %984 = vmatprep.subr.bf16.mxu0 0
    %985 = vmatpush1.bf16.msra.mxu0 0
    %986 = vmatprep.subr.bf16.mxu0 0
    %987 = vmatpush1.bf16.msra.mxu0 0
    %988 = vmatprep.subr.bf16.mxu0 0
    %989 = vmatpush1.bf16.msra.mxu0 0
    %990 = vmatprep.subr.bf16.mxu0 0
    %991 = vmatpush1.bf16.msra.mxu0 0
    %992 = vmatprep.subr.bf16.mxu0 0
    %993 = vmatpush1.bf16.msra.mxu0 %v976
    %994 = vmatprep.subr.bf16.mxu0 0
    %995 = vmatpush2.bf16.msra.mxu0 0
    %996 = vmatprep.subr.bf16.mxu0 0
    %997 = vmatpush2.bf16.msra.mxu0 0
    %998 = vmatprep.subr.bf16.mxu0 0
    %999 = vmatpush2.bf16.msra.mxu0 0
    %1000 = vmatprep.subr.bf16.mxu0 0
    %1001 = vmatpush2.bf16.msra.mxu0 0
    %1002 = vmatprep.subr.bf16.mxu0 0
    %1003 = vmatpush2.bf16.msra.mxu0 0
    %1004 = vmatprep.subr.bf16.mxu0 0
    %1005 = vmatpush2.bf16.msra.mxu0 0
    %1006 = vmatprep.subr.bf16.mxu0 0
    %1007 = vmatpush2.bf16.msra.mxu0 0
    %1008 = vmatprep.subr.bf16.mxu0 0
    %1009 = vmatpush2.bf16.msra.mxu0 0
    %1010 = vmatprep.mubr.bf16.mxu0 0
    %1011 = vmatmul.mubr.bf16.gmra.mxu0 %v973
    %v1012 = vpop.f32.mrf.mxu0
    %v1013 = vadd.f32 0.0, %v1012
    %v1014 = vpop.f32.mrf.mxu0
    %v1015 = vpop.f32.mrf.mxu0
    %v1016 = vpop.f32.mrf.mxu0
    %1017 = vdwg.mxu0
    %1018 = vrot.lane.b32.xlu0 %v205, 64
    %v1019 = vpop.permute.xlu0 %1018
    %v1021 = vsel %vm208, %v680, 0
    %v1024 = vsel %vm686, %v1019, 0
    %1026 = vmatprep.subr.bf16.mxu0 0
    %1027 = vmatpush1.bf16.msra.mxu0 0
    %1028 = vmatprep.subr.bf16.mxu0 0
    %1029 = vmatpush1.bf16.msra.mxu0 0
    %1030 = vmatprep.subr.bf16.mxu0 0
    %1031 = vmatpush1.bf16.msra.mxu0 0
    %1032 = vmatprep.subr.bf16.mxu0 0
    %1033 = vmatpush1.bf16.msra.mxu0 0
    %1034 = vmatprep.subr.bf16.mxu0 0
    %1035 = vmatpush1.bf16.msra.mxu0 0
    %1036 = vmatprep.subr.bf16.mxu0 0
    %1037 = vmatpush1.bf16.msra.mxu0 0
    %1038 = vmatprep.subr.bf16.mxu0 0
    %1039 = vmatpush1.bf16.msra.mxu0 0
    %1040 = vmatprep.subr.bf16.mxu0 0
    %1041 = vmatpush1.bf16.msra.mxu0 %v1024
    %1042 = vmatprep.subr.bf16.mxu0 0
    %1043 = vmatpush2.bf16.msra.mxu0 0
    %1044 = vmatprep.subr.bf16.mxu0 0
    %1045 = vmatpush2.bf16.msra.mxu0 0
    %1046 = vmatprep.subr.bf16.mxu0 0
    %1047 = vmatpush2.bf16.msra.mxu0 0
    %1048 = vmatprep.subr.bf16.mxu0 0
    %1049 = vmatpush2.bf16.msra.mxu0 0
    %1050 = vmatprep.subr.bf16.mxu0 0
    %1051 = vmatpush2.bf16.msra.mxu0 0
    %1052 = vmatprep.subr.bf16.mxu0 0
    %1053 = vmatpush2.bf16.msra.mxu0 0
    %1054 = vmatprep.subr.bf16.mxu0 0
    %1055 = vmatpush2.bf16.msra.mxu0 0
    %1056 = vmatprep.subr.bf16.mxu0 0
    %1057 = vmatpush2.bf16.msra.mxu0 0
    %1058 = vmatprep.mubr.bf16.mxu0 0
    %1059 = vmatmul.mubr.bf16.gmra.mxu0 %v1021
    %v1060 = vpop.f32.mrf.mxu0
    %v1061 = vadd.f32 0.0, %v1060
    %v1062 = vpop.f32.mrf.mxu0
    %v1063 = vpop.f32.mrf.mxu0
    %v1064 = vpop.f32.mrf.mxu0
    %1065 = vdwg.mxu0
    %v1066 = vrcp.pop %v651
    %v1067 = vrcp.pop %v654
    %v1068 = vrcp.pop %v657
    %v1069 = vrcp.pop %v660
    %v1070 = vrcp.pop %v663
    %v1071 = vrcp.pop %v666
    %v1072 = vrcp.pop %v669
    %v1073 = vrcp.pop %v672
    %v1074 = vmul.f32 %v725, %v1066
    %v1075 = vmul.f32 %v773, %v1067
    %v1076 = vmul.f32 %v821, %v1068
    %v1077 = vmul.f32 %v869, %v1069
    %v1078 = vmul.f32 %v917, %v1070
    %v1079 = vmul.f32 %v965, %v1071
    %v1080 = vmul.f32 %v1013, %v1072
    %v1081 = vmul.f32 %v1061, %v1073
    %v1082 = vpack.c.bf16 %v1074, %v1074
    %v1083 = vpack.c.bf16 %v1075, %v1075
    %v1084 = vpack.c.bf16 %v1076, %v1076
    %v1085 = vpack.c.bf16 %v1077, %v1077
    %v1086 = vpack.c.bf16 %v1078, %v1078
    %v1087 = vpack.c.bf16 %v1079, %v1079
    %v1088 = vpack.c.bf16 %v1080, %v1080
    %v1089 = vpack.c.bf16 %v1081, %v1081
    %vm1090 = vcmask 60416
    %1091 = vst.msk [vmem:[#allocation2] sm:$0xf] %vm1090, %v1082
    %1092 = vst.msk [vmem:[#allocation2 + $0x4] sm:$0xf] %vm1090, %v1083
    %1093 = vst.msk [vmem:[#allocation2 + $0x8] sm:$0xf] %vm1090, %v1084
    %1094 = vst.msk [vmem:[#allocation2 + $0xc] sm:$0xf] %vm1090, %v1085
    %1095 = vst.msk [vmem:[#allocation2 + $0x10] sm:$0xf] %vm1090, %v1086
    %1096 = vst.msk [vmem:[#allocation2 + $0x14] sm:$0xf] %vm1090, %v1087
    %1097 = vst.msk [vmem:[#allocation2 + $0x18] sm:$0xf] %vm1090, %v1088
    %1098 = vst.msk [vmem:[#allocation2 + $0x1c] sm:$0xf] %vm1090, %v1089
    %1099 = vrot.lane.b32.xlu0 %v198, 120
    %v1100 = vpop.permute.xlu0 %1099
    %1101 = vrot.lane.b32.xlu0 %v198, 88
    %v1102 = vpop.permute.xlu0 %1101
    %v1104 = vsel %vm208, %v1100, 0
    %v1107 = vsel %vm208, %v1102, 0
    %1109 = vmatprep.subr.bf16.mxu0 0
    %1110 = vmatpush1.bf16.xpose.msra.mxu0 0
    %1111 = vmatprep.subr.bf16.mxu0 0
    %1112 = vmatpush1.bf16.xpose.msra.mxu0 0
    %1113 = vmatprep.subr.bf16.mxu0 0
    %1114 = vmatpush1.bf16.xpose.msra.mxu0 0
    %1115 = vmatprep.subr.bf16.mxu0 0
    %1116 = vmatpush1.bf16.xpose.msra.mxu0 0
    %1117 = vmatprep.subr.bf16.mxu0 0
    %1118 = vmatpush1.bf16.xpose.msra.mxu0 0
    %1119 = vmatprep.subr.bf16.mxu0 0
    %1120 = vmatpush1.bf16.xpose.msra.mxu0 0
    %1121 = vmatprep.subr.bf16.mxu0 0
    %1122 = vmatpush1.bf16.xpose.msra.mxu0 0
    %1123 = vmatprep.subr.bf16.mxu0 0
    %1124 = vmatpush1.bf16.xpose.msra.mxu0 %v1107
    %1125 = vmatprep.subr.bf16.mxu0 0
    %1126 = vmatpush2.bf16.xpose.msra.mxu0 0
    %1127 = vmatprep.subr.bf16.mxu0 0
    %1128 = vmatpush2.bf16.xpose.msra.mxu0 0
    %1129 = vmatprep.subr.bf16.mxu0 0
    %1130 = vmatpush2.bf16.xpose.msra.mxu0 0
    %1131 = vmatprep.subr.bf16.mxu0 0
    %1132 = vmatpush2.bf16.xpose.msra.mxu0 0
    %1133 = vmatprep.subr.bf16.mxu0 0
    %1134 = vmatpush2.bf16.xpose.msra.mxu0 0
    %1135 = vmatprep.subr.bf16.mxu0 0
    %1136 = vmatpush2.bf16.xpose.msra.mxu0 0
    %1137 = vmatprep.subr.bf16.mxu0 0
    %1138 = vmatpush2.bf16.xpose.msra.mxu0 0
    %1139 = vmatprep.subr.bf16.mxu0 0
    %1140 = vmatpush2.bf16.xpose.msra.mxu0 0
    %1141 = vmatprep.mubr.bf16.mxu0 0
    %1142 = vmatmul.mubr.bf16.gmra.mxu0 %v1104
    %v1143 = vpop.f32.mrf.mxu0
    %v1144 = vadd.f32 0.0, %v1143
    %v1145 = vpop.f32.mrf.mxu0
    %v1146 = vpop.f32.mrf.mxu0
    %v1147 = vpop.f32.mrf.mxu0
    %1148 = vdwg.mxu0
    %1149 = vrot.lane.b32.xlu0 %v199, 120
    %v1150 = vpop.permute.xlu0 %1149
    %1151 = vrot.lane.b32.xlu0 %v199, 88
    %v1152 = vpop.permute.xlu0 %1151
    %v1154 = vsel %vm208, %v1150, 0
    %v1157 = vsel %vm208, %v1152, 0
    %1159 = vmatprep.subr.bf16.mxu0 0
    %1160 = vmatpush1.bf16.xpose.msra.mxu0 0
    %1161 = vmatprep.subr.bf16.mxu0 0
    %1162 = vmatpush1.bf16.xpose.msra.mxu0 0
    %1163 = vmatprep.subr.bf16.mxu0 0
    %1164 = vmatpush1.bf16.xpose.msra.mxu0 0
    %1165 = vmatprep.subr.bf16.mxu0 0
    %1166 = vmatpush1.bf16.xpose.msra.mxu0 0
    %1167 = vmatprep.subr.bf16.mxu0 0
    %1168 = vmatpush1.bf16.xpose.msra.mxu0 0
    %1169 = vmatprep.subr.bf16.mxu0 0
    %1170 = vmatpush1.bf16.xpose.msra.mxu0 0
    %1171 = vmatprep.subr.bf16.mxu0 0
    %1172 = vmatpush1.bf16.xpose.msra.mxu0 0
    %1173 = vmatprep.subr.bf16.mxu0 0
    %1174 = vmatpush1.bf16.xpose.msra.mxu0 %v1157
    %1175 = vmatprep.subr.bf16.mxu0 0
    %1176 = vmatpush2.bf16.xpose.msra.mxu0 0
    %1177 = vmatprep.subr.bf16.mxu0 0
    %1178 = vmatpush2.bf16.xpose.msra.mxu0 0
    %1179 = vmatprep.subr.bf16.mxu0 0
    %1180 = vmatpush2.bf16.xpose.msra.mxu0 0
    %1181 = vmatprep.subr.bf16.mxu0 0
    %1182 = vmatpush2.bf16.xpose.msra.mxu0 0
    %1183 = vmatprep.subr.bf16.mxu0 0
    %1184 = vmatpush2.bf16.xpose.msra.mxu0 0
    %1185 = vmatprep.subr.bf16.mxu0 0
    %1186 = vmatpush2.bf16.xpose.msra.mxu0 0
    %1187 = vmatprep.subr.bf16.mxu0 0
    %1188 = vmatpush2.bf16.xpose.msra.mxu0 0
    %1189 = vmatprep.subr.bf16.mxu0 0
    %1190 = vmatpush2.bf16.xpose.msra.mxu0 0
    %1191 = vmatprep.mubr.bf16.mxu0 0
    %1192 = vmatmul.mubr.bf16.gmra.mxu0 %v1154
    %v1193 = vpop.f32.mrf.mxu0
    %v1194 = vadd.f32 0.0, %v1193
    %v1195 = vpop.f32.mrf.mxu0
    %v1196 = vpop.f32.mrf.mxu0
    %v1197 = vpop.f32.mrf.mxu0
    %1198 = vdwg.mxu0
    %1199 = vrot.lane.b32.xlu0 %v200, 120
    %v1200 = vpop.permute.xlu0 %1199
    %1201 = vrot.lane.b32.xlu0 %v200, 88
    %v1202 = vpop.permute.xlu0 %1201
    %v1204 = vsel %vm208, %v1200, 0
    %v1207 = vsel %vm208, %v1202, 0
    %1209 = vmatprep.subr.bf16.mxu0 0
    %1210 = vmatpush1.bf16.xpose.msra.mxu0 0
    %1211 = vmatprep.subr.bf16.mxu0 0
    %1212 = vmatpush1.bf16.xpose.msra.mxu0 0
    %1213 = vmatprep.subr.bf16.mxu0 0
    %1214 = vmatpush1.bf16.xpose.msra.mxu0 0
    %1215 = vmatprep.subr.bf16.mxu0 0
    %1216 = vmatpush1.bf16.xpose.msra.mxu0 0
    %1217 = vmatprep.subr.bf16.mxu0 0
    %1218 = vmatpush1.bf16.xpose.msra.mxu0 0
    %1219 = vmatprep.subr.bf16.mxu0 0
    %1220 = vmatpush1.bf16.xpose.msra.mxu0 0
    %1221 = vmatprep.subr.bf16.mxu0 0
    %1222 = vmatpush1.bf16.xpose.msra.mxu0 0
    %1223 = vmatprep.subr.bf16.mxu0 0
    %1224 = vmatpush1.bf16.xpose.msra.mxu0 %v1207
    %1225 = vmatprep.subr.bf16.mxu0 0
    %1226 = vmatpush2.bf16.xpose.msra.mxu0 0
    %1227 = vmatprep.subr.bf16.mxu0 0
    %1228 = vmatpush2.bf16.xpose.msra.mxu0 0
    %1229 = vmatprep.subr.bf16.mxu0 0
    %1230 = vmatpush2.bf16.xpose.msra.mxu0 0
    %1231 = vmatprep.subr.bf16.mxu0 0
    %1232 = vmatpush2.bf16.xpose.msra.mxu0 0
    %1233 = vmatprep.subr.bf16.mxu0 0
    %1234 = vmatpush2.bf16.xpose.msra.mxu0 0
    %1235 = vmatprep.subr.bf16.mxu0 0
    %1236 = vmatpush2.bf16.xpose.msra.mxu0 0
    %1237 = vmatprep.subr.bf16.mxu0 0
    %1238 = vmatpush2.bf16.xpose.msra.mxu0 0
    %1239 = vmatprep.subr.bf16.mxu0 0
    %1240 = vmatpush2.bf16.xpose.msra.mxu0 0
    %1241 = vmatprep.mubr.bf16.mxu0 0
    %1242 = vmatmul.mubr.bf16.gmra.mxu0 %v1204
    %v1243 = vpop.f32.mrf.mxu0
    %v1244 = vadd.f32 0.0, %v1243
    %v1245 = vpop.f32.mrf.mxu0
    %v1246 = vpop.f32.mrf.mxu0
    %v1247 = vpop.f32.mrf.mxu0
    %1248 = vdwg.mxu0
    %1249 = vrot.lane.b32.xlu0 %v201, 120
    %v1250 = vpop.permute.xlu0 %1249
    %1251 = vrot.lane.b32.xlu0 %v201, 88
    %v1252 = vpop.permute.xlu0 %1251
    %v1254 = vsel %vm208, %v1250, 0
    %v1257 = vsel %vm208, %v1252, 0
    %1259 = vmatprep.subr.bf16.mxu0 0
    %1260 = vmatpush1.bf16.xpose.msra.mxu0 0
    %1261 = vmatprep.subr.bf16.mxu0 0
    %1262 = vmatpush1.bf16.xpose.msra.mxu0 0
    %1263 = vmatprep.subr.bf16.mxu0 0
    %1264 = vmatpush1.bf16.xpose.msra.mxu0 0
    %1265 = vmatprep.subr.bf16.mxu0 0
    %1266 = vmatpush1.bf16.xpose.msra.mxu0 0
    %1267 = vmatprep.subr.bf16.mxu0 0
    %1268 = vmatpush1.bf16.xpose.msra.mxu0 0
    %1269 = vmatprep.subr.bf16.mxu0 0
    %1270 = vmatpush1.bf16.xpose.msra.mxu0 0
    %1271 = vmatprep.subr.bf16.mxu0 0
    %1272 = vmatpush1.bf16.xpose.msra.mxu0 0
    %1273 = vmatprep.subr.bf16.mxu0 0
    %1274 = vmatpush1.bf16.xpose.msra.mxu0 %v1257
    %1275 = vmatprep.subr.bf16.mxu0 0
    %1276 = vmatpush2.bf16.xpose.msra.mxu0 0
    %1277 = vmatprep.subr.bf16.mxu0 0
    %1278 = vmatpush2.bf16.xpose.msra.mxu0 0
    %1279 = vmatprep.subr.bf16.mxu0 0
    %1280 = vmatpush2.bf16.xpose.msra.mxu0 0
    %1281 = vmatprep.subr.bf16.mxu0 0
    %1282 = vmatpush2.bf16.xpose.msra.mxu0 0
    %1283 = vmatprep.subr.bf16.mxu0 0
    %1284 = vmatpush2.bf16.xpose.msra.mxu0 0
    %1285 = vmatprep.subr.bf16.mxu0 0
    %1286 = vmatpush2.bf16.xpose.msra.mxu0 0
    %1287 = vmatprep.subr.bf16.mxu0 0
    %1288 = vmatpush2.bf16.xpose.msra.mxu0 0
    %1289 = vmatprep.subr.bf16.mxu0 0
    %1290 = vmatpush2.bf16.xpose.msra.mxu0 0
    %1291 = vmatprep.mubr.bf16.mxu0 0
    %1292 = vmatmul.mubr.bf16.gmra.mxu0 %v1254
    %v1293 = vpop.f32.mrf.mxu0
    %v1294 = vadd.f32 0.0, %v1293
    %v1295 = vpop.f32.mrf.mxu0
    %v1296 = vpop.f32.mrf.mxu0
    %v1297 = vpop.f32.mrf.mxu0
    %1298 = vdwg.mxu0
    %1299 = vrot.lane.b32.xlu0 %v202, 120
    %v1300 = vpop.permute.xlu0 %1299
    %1301 = vrot.lane.b32.xlu0 %v202, 88
    %v1302 = vpop.permute.xlu0 %1301
    %v1304 = vsel %vm208, %v1300, 0
    %v1307 = vsel %vm208, %v1302, 0
    %1309 = vmatprep.subr.bf16.mxu0 0
    %1310 = vmatpush1.bf16.xpose.msra.mxu0 0
    %1311 = vmatprep.subr.bf16.mxu0 0
    %1312 = vmatpush1.bf16.xpose.msra.mxu0 0
    %1313 = vmatprep.subr.bf16.mxu0 0
    %1314 = vmatpush1.bf16.xpose.msra.mxu0 0
    %1315 = vmatprep.subr.bf16.mxu0 0
    %1316 = vmatpush1.bf16.xpose.msra.mxu0 0
    %1317 = vmatprep.subr.bf16.mxu0 0
    %1318 = vmatpush1.bf16.xpose.msra.mxu0 0
    %1319 = vmatprep.subr.bf16.mxu0 0
    %1320 = vmatpush1.bf16.xpose.msra.mxu0 0
    %1321 = vmatprep.subr.bf16.mxu0 0
    %1322 = vmatpush1.bf16.xpose.msra.mxu0 0
    %1323 = vmatprep.subr.bf16.mxu0 0
    %1324 = vmatpush1.bf16.xpose.msra.mxu0 %v1307
    %1325 = vmatprep.subr.bf16.mxu0 0
    %1326 = vmatpush2.bf16.xpose.msra.mxu0 0
    %1327 = vmatprep.subr.bf16.mxu0 0
    %1328 = vmatpush2.bf16.xpose.msra.mxu0 0
    %1329 = vmatprep.subr.bf16.mxu0 0
    %1330 = vmatpush2.bf16.xpose.msra.mxu0 0
    %1331 = vmatprep.subr.bf16.mxu0 0
    %1332 = vmatpush2.bf16.xpose.msra.mxu0 0
    %1333 = vmatprep.subr.bf16.mxu0 0
    %1334 = vmatpush2.bf16.xpose.msra.mxu0 0
    %1335 = vmatprep.subr.bf16.mxu0 0
    %1336 = vmatpush2.bf16.xpose.msra.mxu0 0
    %1337 = vmatprep.subr.bf16.mxu0 0
    %1338 = vmatpush2.bf16.xpose.msra.mxu0 0
    %1339 = vmatprep.subr.bf16.mxu0 0
    %1340 = vmatpush2.bf16.xpose.msra.mxu0 0
    %1341 = vmatprep.mubr.bf16.mxu0 0
    %1342 = vmatmul.mubr.bf16.gmra.mxu0 %v1304
    %v1343 = vpop.f32.mrf.mxu0
    %v1344 = vadd.f32 0.0, %v1343
    %v1345 = vpop.f32.mrf.mxu0
    %v1346 = vpop.f32.mrf.mxu0
    %v1347 = vpop.f32.mrf.mxu0
    %1348 = vdwg.mxu0
    %1349 = vrot.lane.b32.xlu0 %v203, 120
    %v1350 = vpop.permute.xlu0 %1349
    %1351 = vrot.lane.b32.xlu0 %v203, 88
    %v1352 = vpop.permute.xlu0 %1351
    %v1354 = vsel %vm208, %v1350, 0
    %v1357 = vsel %vm208, %v1352, 0
    %1359 = vmatprep.subr.bf16.mxu0 0
    %1360 = vmatpush1.bf16.xpose.msra.mxu0 0
    %1361 = vmatprep.subr.bf16.mxu0 0
    %1362 = vmatpush1.bf16.xpose.msra.mxu0 0
    %1363 = vmatprep.subr.bf16.mxu0 0
    %1364 = vmatpush1.bf16.xpose.msra.mxu0 0
    %1365 = vmatprep.subr.bf16.mxu0 0
    %1366 = vmatpush1.bf16.xpose.msra.mxu0 0
    %1367 = vmatprep.subr.bf16.mxu0 0
    %1368 = vmatpush1.bf16.xpose.msra.mxu0 0
    %1369 = vmatprep.subr.bf16.mxu0 0
    %1370 = vmatpush1.bf16.xpose.msra.mxu0 0
    %1371 = vmatprep.subr.bf16.mxu0 0
    %1372 = vmatpush1.bf16.xpose.msra.mxu0 0
    %1373 = vmatprep.subr.bf16.mxu0 0
    %1374 = vmatpush1.bf16.xpose.msra.mxu0 %v1357
    %1375 = vmatprep.subr.bf16.mxu0 0
    %1376 = vmatpush2.bf16.xpose.msra.mxu0 0
    %1377 = vmatprep.subr.bf16.mxu0 0
    %1378 = vmatpush2.bf16.xpose.msra.mxu0 0
    %1379 = vmatprep.subr.bf16.mxu0 0
    %1380 = vmatpush2.bf16.xpose.msra.mxu0 0
    %1381 = vmatprep.subr.bf16.mxu0 0
    %1382 = vmatpush2.bf16.xpose.msra.mxu0 0
    %1383 = vmatprep.subr.bf16.mxu0 0
    %1384 = vmatpush2.bf16.xpose.msra.mxu0 0
    %1385 = vmatprep.subr.bf16.mxu0 0
    %1386 = vmatpush2.bf16.xpose.msra.mxu0 0
    %1387 = vmatprep.subr.bf16.mxu0 0
    %1388 = vmatpush2.bf16.xpose.msra.mxu0 0
    %1389 = vmatprep.subr.bf16.mxu0 0
    %1390 = vmatpush2.bf16.xpose.msra.mxu0 0
    %1391 = vmatprep.mubr.bf16.mxu0 0
    %1392 = vmatmul.mubr.bf16.gmra.mxu0 %v1354
    %v1393 = vpop.f32.mrf.mxu0
    %v1394 = vadd.f32 0.0, %v1393
    %v1395 = vpop.f32.mrf.mxu0
    %v1396 = vpop.f32.mrf.mxu0
    %v1397 = vpop.f32.mrf.mxu0
    %1398 = vdwg.mxu0
    %1399 = vrot.lane.b32.xlu0 %v204, 120
    %v1400 = vpop.permute.xlu0 %1399
    %1401 = vrot.lane.b32.xlu0 %v204, 88
    %v1402 = vpop.permute.xlu0 %1401
    %v1404 = vsel %vm208, %v1400, 0
    %v1407 = vsel %vm208, %v1402, 0
    %1409 = vmatprep.subr.bf16.mxu0 0
    %1410 = vmatpush1.bf16.xpose.msra.mxu0 0
    %1411 = vmatprep.subr.bf16.mxu0 0
    %1412 = vmatpush1.bf16.xpose.msra.mxu0 0
    %1413 = vmatprep.subr.bf16.mxu0 0
    %1414 = vmatpush1.bf16.xpose.msra.mxu0 0
    %1415 = vmatprep.subr.bf16.mxu0 0
    %1416 = vmatpush1.bf16.xpose.msra.mxu0 0
    %1417 = vmatprep.subr.bf16.mxu0 0
    %1418 = vmatpush1.bf16.xpose.msra.mxu0 0
    %1419 = vmatprep.subr.bf16.mxu0 0
    %1420 = vmatpush1.bf16.xpose.msra.mxu0 0
    %1421 = vmatprep.subr.bf16.mxu0 0
    %1422 = vmatpush1.bf16.xpose.msra.mxu0 0
    %1423 = vmatprep.subr.bf16.mxu0 0
    %1424 = vmatpush1.bf16.xpose.msra.mxu0 %v1407
    %1425 = vmatprep.subr.bf16.mxu0 0
    %1426 = vmatpush2.bf16.xpose.msra.mxu0 0
    %1427 = vmatprep.subr.bf16.mxu0 0
    %1428 = vmatpush2.bf16.xpose.msra.mxu0 0
    %1429 = vmatprep.subr.bf16.mxu0 0
    %1430 = vmatpush2.bf16.xpose.msra.mxu0 0
    %1431 = vmatprep.subr.bf16.mxu0 0
    %1432 = vmatpush2.bf16.xpose.msra.mxu0 0
    %1433 = vmatprep.subr.bf16.mxu0 0
    %1434 = vmatpush2.bf16.xpose.msra.mxu0 0
    %1435 = vmatprep.subr.bf16.mxu0 0
    %1436 = vmatpush2.bf16.xpose.msra.mxu0 0
    %1437 = vmatprep.subr.bf16.mxu0 0
    %1438 = vmatpush2.bf16.xpose.msra.mxu0 0
    %1439 = vmatprep.subr.bf16.mxu0 0
    %1440 = vmatpush2.bf16.xpose.msra.mxu0 0
    %1441 = vmatprep.mubr.bf16.mxu0 0
    %1442 = vmatmul.mubr.bf16.gmra.mxu0 %v1404
    %v1443 = vpop.f32.mrf.mxu0
    %v1444 = vadd.f32 0.0, %v1443
    %v1445 = vpop.f32.mrf.mxu0
    %v1446 = vpop.f32.mrf.mxu0
    %v1447 = vpop.f32.mrf.mxu0
    %1448 = vdwg.mxu0
    %1449 = vrot.lane.b32.xlu0 %v205, 120
    %v1450 = vpop.permute.xlu0 %1449
    %1451 = vrot.lane.b32.xlu0 %v205, 88
    %v1452 = vpop.permute.xlu0 %1451
    %v1454 = vsel %vm208, %v1450, 0
    %v1457 = vsel %vm208, %v1452, 0
    %1459 = vmatprep.subr.bf16.mxu0 0
    %1460 = vmatpush1.bf16.xpose.msra.mxu0 0
    %1461 = vmatprep.subr.bf16.mxu0 0
    %1462 = vmatpush1.bf16.xpose.msra.mxu0 0
    %1463 = vmatprep.subr.bf16.mxu0 0
    %1464 = vmatpush1.bf16.xpose.msra.mxu0 0
    %1465 = vmatprep.subr.bf16.mxu0 0
    %1466 = vmatpush1.bf16.xpose.msra.mxu0 0
    %1467 = vmatprep.subr.bf16.mxu0 0
    %1468 = vmatpush1.bf16.xpose.msra.mxu0 0
    %1469 = vmatprep.subr.bf16.mxu0 0
    %1470 = vmatpush1.bf16.xpose.msra.mxu0 0
    %1471 = vmatprep.subr.bf16.mxu0 0
    %1472 = vmatpush1.bf16.xpose.msra.mxu0 0
    %1473 = vmatprep.subr.bf16.mxu0 0
    %1474 = vmatpush1.bf16.xpose.msra.mxu0 %v1457
    %1475 = vmatprep.subr.bf16.mxu0 0
    %1476 = vmatpush2.bf16.xpose.msra.mxu0 0
    %1477 = vmatprep.subr.bf16.mxu0 0
    %1478 = vmatpush2.bf16.xpose.msra.mxu0 0
    %1479 = vmatprep.subr.bf16.mxu0 0
    %1480 = vmatpush2.bf16.xpose.msra.mxu0 0
    %1481 = vmatprep.subr.bf16.mxu0 0
    %1482 = vmatpush2.bf16.xpose.msra.mxu0 0
    %1483 = vmatprep.subr.bf16.mxu0 0
    %1484 = vmatpush2.bf16.xpose.msra.mxu0 0
    %1485 = vmatprep.subr.bf16.mxu0 0
    %1486 = vmatpush2.bf16.xpose.msra.mxu0 0
    %1487 = vmatprep.subr.bf16.mxu0 0
    %1488 = vmatpush2.bf16.xpose.msra.mxu0 0
    %1489 = vmatprep.subr.bf16.mxu0 0
    %1490 = vmatpush2.bf16.xpose.msra.mxu0 0
    %1491 = vmatprep.mubr.bf16.mxu0 0
    %1492 = vmatmul.mubr.bf16.gmra.mxu0 %v1454
    %v1493 = vpop.f32.mrf.mxu0
    %v1494 = vadd.f32 0.0, %v1493
    %v1495 = vpop.f32.mrf.mxu0
    %v1496 = vpop.f32.mrf.mxu0
    %v1497 = vpop.f32.mrf.mxu0
    %1498 = vdwg.mxu0
    %v1499 = vsel %vm592, %v1144, -1e+30
    %v1500 = vsel %vm592, %v1194, -1e+30
    %v1501 = vsel %vm592, %v1244, -1e+30
    %v1502 = vsel %vm592, %v1294, -1e+30
    %v1503 = vsel %vm592, %v1344, -1e+30
    %v1504 = vsel %vm592, %v1394, -1e+30
    %v1505 = vsel %vm592, %v1444, -1e+30
    %v1506 = vsel %vm592, %v1494, -1e+30
    %v1507 = vsel %vm208, %v1499, -inf
    %1508 = vmax.xlane.f32.xlu0 %v1507
    %v1509 = vpop.xlane.xlu0 %1508
    %v1510 = vsel %vm208, %v1500, -inf
    %1511 = vmax.xlane.f32.xlu0 %v1510
    %v1512 = vpop.xlane.xlu0 %1511
    %v1513 = vsel %vm208, %v1501, -inf
    %1514 = vmax.xlane.f32.xlu0 %v1513
    %v1515 = vpop.xlane.xlu0 %1514
    %v1516 = vsel %vm208, %v1502, -inf
    %1517 = vmax.xlane.f32.xlu0 %v1516
    %v1518 = vpop.xlane.xlu0 %1517
    %v1519 = vsel %vm208, %v1503, -inf
    %1520 = vmax.xlane.f32.xlu0 %v1519
    %v1521 = vpop.xlane.xlu0 %1520
    %v1522 = vsel %vm208, %v1504, -inf
    %1523 = vmax.xlane.f32.xlu0 %v1522
    %v1524 = vpop.xlane.xlu0 %1523
    %v1525 = vsel %vm208, %v1505, -inf
    %1526 = vmax.xlane.f32.xlu0 %v1525
    %v1527 = vpop.xlane.xlu0 %1526
    %v1528 = vsel %vm208, %v1506, -inf
    %1529 = vmax.xlane.f32.xlu0 %v1528
    %v1530 = vpop.xlane.xlu0 %1529
    %v1531 = vsub.f32 %v1499, %v1509
    %v1532 = vsub.f32 %v1500, %v1512
    %v1533 = vsub.f32 %v1501, %v1515
    %v1534 = vsub.f32 %v1502, %v1518
    %v1535 = vsub.f32 %v1503, %v1521
    %v1536 = vsub.f32 %v1504, %v1524
    %v1537 = vsub.f32 %v1505, %v1527
    %v1538 = vsub.f32 %v1506, %v1530
    %v1539 = vmul.f32 %v1531, 1.442695
    %v1540 = vpow.pop %v1539
    %v1541 = vmul.f32 %v1532, 1.442695
    %v1542 = vpow.pop %v1541
    %v1543 = vmul.f32 %v1533, 1.442695
    %v1544 = vpow.pop %v1543
    %v1545 = vmul.f32 %v1534, 1.442695
    %v1546 = vpow.pop %v1545
    %v1547 = vmul.f32 %v1535, 1.442695
    %v1548 = vpow.pop %v1547
    %v1549 = vmul.f32 %v1536, 1.442695
    %v1550 = vpow.pop %v1549
    %v1551 = vmul.f32 %v1537, 1.442695
    %v1552 = vpow.pop %v1551
    %v1553 = vmul.f32 %v1538, 1.442695
    %v1554 = vpow.pop %v1553
    %v1555 = vsel %vm208, %v1540, 0.0
    %1556 = vadd.xlane.f32.xlu0 %v1555
    %v1557 = vpop.xlane.xlu0 %1556
    %v1558 = vsel %vm208, %v1542, 0.0
    %1559 = vadd.xlane.f32.xlu0 %v1558
    %v1560 = vpop.xlane.xlu0 %1559
    %v1561 = vsel %vm208, %v1544, 0.0
    %1562 = vadd.xlane.f32.xlu0 %v1561
    %v1563 = vpop.xlane.xlu0 %1562
    %v1564 = vsel %vm208, %v1546, 0.0
    %1565 = vadd.xlane.f32.xlu0 %v1564
    %v1566 = vpop.xlane.xlu0 %1565
    %v1567 = vsel %vm208, %v1548, 0.0
    %1568 = vadd.xlane.f32.xlu0 %v1567
    %v1569 = vpop.xlane.xlu0 %1568
    %v1570 = vsel %vm208, %v1550, 0.0
    %1571 = vadd.xlane.f32.xlu0 %v1570
    %v1572 = vpop.xlane.xlu0 %1571
    %v1573 = vsel %vm208, %v1552, 0.0
    %1574 = vadd.xlane.f32.xlu0 %v1573
    %v1575 = vpop.xlane.xlu0 %1574
    %v1576 = vsel %vm208, %v1554, 0.0
    %1577 = vadd.xlane.f32.xlu0 %v1576
    %v1578 = vpop.xlane.xlu0 %1577
    %v1579 = vpack.c.bf16 %v1540, %v1540
    %v1580 = vpack.c.bf16 %v1542, %v1542
    %v1581 = vpack.c.bf16 %v1544, %v1544
    %v1582 = vpack.c.bf16 %v1546, %v1546
    %v1583 = vpack.c.bf16 %v1548, %v1548
    %v1584 = vpack.c.bf16 %v1550, %v1550
    %v1585 = vpack.c.bf16 %v1552, %v1552
    %v1586 = vpack.c.bf16 %v1554, %v1554
    %1587 = vrot.lane.b32.xlu0 %v198, 56
    %v1588 = vpop.permute.xlu0 %1587
    %v1590 = vsel %vm208, %v1579, 0
    %v1593 = vsel %vm686, %v1588, 0
    %1595 = vmatprep.subr.bf16.mxu0 0
    %1596 = vmatpush1.bf16.msra.mxu0 0
    %1597 = vmatprep.subr.bf16.mxu0 0
    %1598 = vmatpush1.bf16.msra.mxu0 0
    %1599 = vmatprep.subr.bf16.mxu0 0
    %1600 = vmatpush1.bf16.msra.mxu0 0
    %1601 = vmatprep.subr.bf16.mxu0 0
    %1602 = vmatpush1.bf16.msra.mxu0 0
    %1603 = vmatprep.subr.bf16.mxu0 0
    %1604 = vmatpush1.bf16.msra.mxu0 0
    %1605 = vmatprep.subr.bf16.mxu0 0
    %1606 = vmatpush1.bf16.msra.mxu0 0
    %1607 = vmatprep.subr.bf16.mxu0 0
    %1608 = vmatpush1.bf16.msra.mxu0 0
    %1609 = vmatprep.subr.bf16.mxu0 0
    %1610 = vmatpush1.bf16.msra.mxu0 %v1593
    %1611 = vmatprep.subr.bf16.mxu0 0
    %1612 = vmatpush2.bf16.msra.mxu0 0
    %1613 = vmatprep.subr.bf16.mxu0 0
    %1614 = vmatpush2.bf16.msra.mxu0 0
    %1615 = vmatprep.subr.bf16.mxu0 0
    %1616 = vmatpush2.bf16.msra.mxu0 0
    %1617 = vmatprep.subr.bf16.mxu0 0
    %1618 = vmatpush2.bf16.msra.mxu0 0
    %1619 = vmatprep.subr.bf16.mxu0 0
    %1620 = vmatpush2.bf16.msra.mxu0 0
    %1621 = vmatprep.subr.bf16.mxu0 0
    %1622 = vmatpush2.bf16.msra.mxu0 0
    %1623 = vmatprep.subr.bf16.mxu0 0
    %1624 = vmatpush2.bf16.msra.mxu0 0
    %1625 = vmatprep.subr.bf16.mxu0 0
    %1626 = vmatpush2.bf16.msra.mxu0 0
    %1627 = vmatprep.mubr.bf16.mxu0 0
    %1628 = vmatmul.mubr.bf16.gmra.mxu0 %v1590
    %v1629 = vpop.f32.mrf.mxu0
    %v1630 = vadd.f32 0.0, %v1629
    %v1631 = vpop.f32.mrf.mxu0
    %v1632 = vpop.f32.mrf.mxu0
    %v1633 = vpop.f32.mrf.mxu0
    %1634 = vdwg.mxu0
    %1635 = vrot.lane.b32.xlu0 %v199, 56
    %v1636 = vpop.permute.xlu0 %1635
    %v1638 = vsel %vm208, %v1580, 0
    %v1641 = vsel %vm686, %v1636, 0
    %1643 = vmatprep.subr.bf16.mxu0 0
    %1644 = vmatpush1.bf16.msra.mxu0 0
    %1645 = vmatprep.subr.bf16.mxu0 0
    %1646 = vmatpush1.bf16.msra.mxu0 0
    %1647 = vmatprep.subr.bf16.mxu0 0
    %1648 = vmatpush1.bf16.msra.mxu0 0
    %1649 = vmatprep.subr.bf16.mxu0 0
    %1650 = vmatpush1.bf16.msra.mxu0 0
    %1651 = vmatprep.subr.bf16.mxu0 0
    %1652 = vmatpush1.bf16.msra.mxu0 0
    %1653 = vmatprep.subr.bf16.mxu0 0
    %1654 = vmatpush1.bf16.msra.mxu0 0
    %1655 = vmatprep.subr.bf16.mxu0 0
    %1656 = vmatpush1.bf16.msra.mxu0 0
    %1657 = vmatprep.subr.bf16.mxu0 0
    %1658 = vmatpush1.bf16.msra.mxu0 %v1641
    %1659 = vmatprep.subr.bf16.mxu0 0
    %1660 = vmatpush2.bf16.msra.mxu0 0
    %1661 = vmatprep.subr.bf16.mxu0 0
    %1662 = vmatpush2.bf16.msra.mxu0 0
    %1663 = vmatprep.subr.bf16.mxu0 0
    %1664 = vmatpush2.bf16.msra.mxu0 0
    %1665 = vmatprep.subr.bf16.mxu0 0
    %1666 = vmatpush2.bf16.msra.mxu0 0
    %1667 = vmatprep.subr.bf16.mxu0 0
    %1668 = vmatpush2.bf16.msra.mxu0 0
    %1669 = vmatprep.subr.bf16.mxu0 0
    %1670 = vmatpush2.bf16.msra.mxu0 0
    %1671 = vmatprep.subr.bf16.mxu0 0
    %1672 = vmatpush2.bf16.msra.mxu0 0
    %1673 = vmatprep.subr.bf16.mxu0 0
    %1674 = vmatpush2.bf16.msra.mxu0 0
    %1675 = vmatprep.mubr.bf16.mxu0 0
    %1676 = vmatmul.mubr.bf16.gmra.mxu0 %v1638
    %v1677 = vpop.f32.mrf.mxu0
    %v1678 = vadd.f32 0.0, %v1677
    %v1679 = vpop.f32.mrf.mxu0
    %v1680 = vpop.f32.mrf.mxu0
    %v1681 = vpop.f32.mrf.mxu0
    %1682 = vdwg.mxu0
    %1683 = vrot.lane.b32.xlu0 %v200, 56
    %v1684 = vpop.permute.xlu0 %1683
    %v1686 = vsel %vm208, %v1581, 0
    %v1689 = vsel %vm686, %v1684, 0
    %1691 = vmatprep.subr.bf16.mxu0 0
    %1692 = vmatpush1.bf16.msra.mxu0 0
    %1693 = vmatprep.subr.bf16.mxu0 0
    %1694 = vmatpush1.bf16.msra.mxu0 0
    %1695 = vmatprep.subr.bf16.mxu0 0
    %1696 = vmatpush1.bf16.msra.mxu0 0
    %1697 = vmatprep.subr.bf16.mxu0 0
    %1698 = vmatpush1.bf16.msra.mxu0 0
    %1699 = vmatprep.subr.bf16.mxu0 0
    %1700 = vmatpush1.bf16.msra.mxu0 0
    %1701 = vmatprep.subr.bf16.mxu0 0
    %1702 = vmatpush1.bf16.msra.mxu0 0
    %1703 = vmatprep.subr.bf16.mxu0 0
    %1704 = vmatpush1.bf16.msra.mxu0 0
    %1705 = vmatprep.subr.bf16.mxu0 0
    %1706 = vmatpush1.bf16.msra.mxu0 %v1689
    %1707 = vmatprep.subr.bf16.mxu0 0
    %1708 = vmatpush2.bf16.msra.mxu0 0
    %1709 = vmatprep.subr.bf16.mxu0 0
    %1710 = vmatpush2.bf16.msra.mxu0 0
    %1711 = vmatprep.subr.bf16.mxu0 0
    %1712 = vmatpush2.bf16.msra.mxu0 0
    %1713 = vmatprep.subr.bf16.mxu0 0
    %1714 = vmatpush2.bf16.msra.mxu0 0
    %1715 = vmatprep.subr.bf16.mxu0 0
    %1716 = vmatpush2.bf16.msra.mxu0 0
    %1717 = vmatprep.subr.bf16.mxu0 0
    %1718 = vmatpush2.bf16.msra.mxu0 0
    %1719 = vmatprep.subr.bf16.mxu0 0
    %1720 = vmatpush2.bf16.msra.mxu0 0
    %1721 = vmatprep.subr.bf16.mxu0 0
    %1722 = vmatpush2.bf16.msra.mxu0 0
    %1723 = vmatprep.mubr.bf16.mxu0 0
    %1724 = vmatmul.mubr.bf16.gmra.mxu0 %v1686
    %v1725 = vpop.f32.mrf.mxu0
    %v1726 = vadd.f32 0.0, %v1725
    %v1727 = vpop.f32.mrf.mxu0
    %v1728 = vpop.f32.mrf.mxu0
    %v1729 = vpop.f32.mrf.mxu0
    %1730 = vdwg.mxu0
    %1731 = vrot.lane.b32.xlu0 %v201, 56
    %v1732 = vpop.permute.xlu0 %1731
    %v1734 = vsel %vm208, %v1582, 0
    %v1737 = vsel %vm686, %v1732, 0
    %1739 = vmatprep.subr.bf16.mxu0 0
    %1740 = vmatpush1.bf16.msra.mxu0 0
    %1741 = vmatprep.subr.bf16.mxu0 0
    %1742 = vmatpush1.bf16.msra.mxu0 0
    %1743 = vmatprep.subr.bf16.mxu0 0
    %1744 = vmatpush1.bf16.msra.mxu0 0
    %1745 = vmatprep.subr.bf16.mxu0 0
    %1746 = vmatpush1.bf16.msra.mxu0 0
    %1747 = vmatprep.subr.bf16.mxu0 0
    %1748 = vmatpush1.bf16.msra.mxu0 0
    %1749 = vmatprep.subr.bf16.mxu0 0
    %1750 = vmatpush1.bf16.msra.mxu0 0
    %1751 = vmatprep.subr.bf16.mxu0 0
    %1752 = vmatpush1.bf16.msra.mxu0 0
    %1753 = vmatprep.subr.bf16.mxu0 0
    %1754 = vmatpush1.bf16.msra.mxu0 %v1737
    %1755 = vmatprep.subr.bf16.mxu0 0
    %1756 = vmatpush2.bf16.msra.mxu0 0
    %1757 = vmatprep.subr.bf16.mxu0 0
    %1758 = vmatpush2.bf16.msra.mxu0 0
    %1759 = vmatprep.subr.bf16.mxu0 0
    %1760 = vmatpush2.bf16.msra.mxu0 0
    %1761 = vmatprep.subr.bf16.mxu0 0
    %1762 = vmatpush2.bf16.msra.mxu0 0
    %1763 = vmatprep.subr.bf16.mxu0 0
    %1764 = vmatpush2.bf16.msra.mxu0 0
    %1765 = vmatprep.subr.bf16.mxu0 0
    %1766 = vmatpush2.bf16.msra.mxu0 0
    %1767 = vmatprep.subr.bf16.mxu0 0
    %1768 = vmatpush2.bf16.msra.mxu0 0
    %1769 = vmatprep.subr.bf16.mxu0 0
    %1770 = vmatpush2.bf16.msra.mxu0 0
    %1771 = vmatprep.mubr.bf16.mxu0 0
    %1772 = vmatmul.mubr.bf16.gmra.mxu0 %v1734
    %v1773 = vpop.f32.mrf.mxu0
    %v1774 = vadd.f32 0.0, %v1773
    %v1775 = vpop.f32.mrf.mxu0
    %v1776 = vpop.f32.mrf.mxu0
    %v1777 = vpop.f32.mrf.mxu0
    %1778 = vdwg.mxu0
    %1779 = vrot.lane.b32.xlu0 %v202, 56
    %v1780 = vpop.permute.xlu0 %1779
    %v1782 = vsel %vm208, %v1583, 0
    %v1785 = vsel %vm686, %v1780, 0
    %1787 = vmatprep.subr.bf16.mxu0 0
    %1788 = vmatpush1.bf16.msra.mxu0 0
    %1789 = vmatprep.subr.bf16.mxu0 0
    %1790 = vmatpush1.bf16.msra.mxu0 0
    %1791 = vmatprep.subr.bf16.mxu0 0
    %1792 = vmatpush1.bf16.msra.mxu0 0
    %1793 = vmatprep.subr.bf16.mxu0 0
    %1794 = vmatpush1.bf16.msra.mxu0 0
    %1795 = vmatprep.subr.bf16.mxu0 0
    %1796 = vmatpush1.bf16.msra.mxu0 0
    %1797 = vmatprep.subr.bf16.mxu0 0
    %1798 = vmatpush1.bf16.msra.mxu0 0
    %1799 = vmatprep.subr.bf16.mxu0 0
    %1800 = vmatpush1.bf16.msra.mxu0 0
    %1801 = vmatprep.subr.bf16.mxu0 0
    %1802 = vmatpush1.bf16.msra.mxu0 %v1785
    %1803 = vmatprep.subr.bf16.mxu0 0
    %1804 = vmatpush2.bf16.msra.mxu0 0
    %1805 = vmatprep.subr.bf16.mxu0 0
    %1806 = vmatpush2.bf16.msra.mxu0 0
    %1807 = vmatprep.subr.bf16.mxu0 0
    %1808 = vmatpush2.bf16.msra.mxu0 0
    %1809 = vmatprep.subr.bf16.mxu0 0
    %1810 = vmatpush2.bf16.msra.mxu0 0
    %1811 = vmatprep.subr.bf16.mxu0 0
    %1812 = vmatpush2.bf16.msra.mxu0 0
    %1813 = vmatprep.subr.bf16.mxu0 0
    %1814 = vmatpush2.bf16.msra.mxu0 0
    %1815 = vmatprep.subr.bf16.mxu0 0
    %1816 = vmatpush2.bf16.msra.mxu0 0
    %1817 = vmatprep.subr.bf16.mxu0 0
    %1818 = vmatpush2.bf16.msra.mxu0 0
    %1819 = vmatprep.mubr.bf16.mxu0 0
    %1820 = vmatmul.mubr.bf16.gmra.mxu0 %v1782
    %v1821 = vpop.f32.mrf.mxu0
    %v1822 = vadd.f32 0.0, %v1821
    %v1823 = vpop.f32.mrf.mxu0
    %v1824 = vpop.f32.mrf.mxu0
    %v1825 = vpop.f32.mrf.mxu0
    %1826 = vdwg.mxu0
    %1827 = vrot.lane.b32.xlu0 %v203, 56
    %v1828 = vpop.permute.xlu0 %1827
    %v1830 = vsel %vm208, %v1584, 0
    %v1833 = vsel %vm686, %v1828, 0
    %1835 = vmatprep.subr.bf16.mxu0 0
    %1836 = vmatpush1.bf16.msra.mxu0 0
    %1837 = vmatprep.subr.bf16.mxu0 0
    %1838 = vmatpush1.bf16.msra.mxu0 0
    %1839 = vmatprep.subr.bf16.mxu0 0
    %1840 = vmatpush1.bf16.msra.mxu0 0
    %1841 = vmatprep.subr.bf16.mxu0 0
    %1842 = vmatpush1.bf16.msra.mxu0 0
    %1843 = vmatprep.subr.bf16.mxu0 0
    %1844 = vmatpush1.bf16.msra.mxu0 0
    %1845 = vmatprep.subr.bf16.mxu0 0
    %1846 = vmatpush1.bf16.msra.mxu0 0
    %1847 = vmatprep.subr.bf16.mxu0 0
    %1848 = vmatpush1.bf16.msra.mxu0 0
    %1849 = vmatprep.subr.bf16.mxu0 0
    %1850 = vmatpush1.bf16.msra.mxu0 %v1833
    %1851 = vmatprep.subr.bf16.mxu0 0
    %1852 = vmatpush2.bf16.msra.mxu0 0
    %1853 = vmatprep.subr.bf16.mxu0 0
    %1854 = vmatpush2.bf16.msra.mxu0 0
    %1855 = vmatprep.subr.bf16.mxu0 0
    %1856 = vmatpush2.bf16.msra.mxu0 0
    %1857 = vmatprep.subr.bf16.mxu0 0
    %1858 = vmatpush2.bf16.msra.mxu0 0
    %1859 = vmatprep.subr.bf16.mxu0 0
    %1860 = vmatpush2.bf16.msra.mxu0 0
    %1861 = vmatprep.subr.bf16.mxu0 0
    %1862 = vmatpush2.bf16.msra.mxu0 0
    %1863 = vmatprep.subr.bf16.mxu0 0
    %1864 = vmatpush2.bf16.msra.mxu0 0
    %1865 = vmatprep.subr.bf16.mxu0 0
    %1866 = vmatpush2.bf16.msra.mxu0 0
    %1867 = vmatprep.mubr.bf16.mxu0 0
    %1868 = vmatmul.mubr.bf16.gmra.mxu0 %v1830
    %v1869 = vpop.f32.mrf.mxu0
    %v1870 = vadd.f32 0.0, %v1869
    %v1871 = vpop.f32.mrf.mxu0
    %v1872 = vpop.f32.mrf.mxu0
    %v1873 = vpop.f32.mrf.mxu0
    %1874 = vdwg.mxu0
    %1875 = vrot.lane.b32.xlu0 %v204, 56
    %v1876 = vpop.permute.xlu0 %1875
    %v1878 = vsel %vm208, %v1585, 0
    %v1881 = vsel %vm686, %v1876, 0
    %1883 = vmatprep.subr.bf16.mxu0 0
    %1884 = vmatpush1.bf16.msra.mxu0 0
    %1885 = vmatprep.subr.bf16.mxu0 0
    %1886 = vmatpush1.bf16.msra.mxu0 0
    %1887 = vmatprep.subr.bf16.mxu0 0
    %1888 = vmatpush1.bf16.msra.mxu0 0
    %1889 = vmatprep.subr.bf16.mxu0 0
    %1890 = vmatpush1.bf16.msra.mxu0 0
    %1891 = vmatprep.subr.bf16.mxu0 0
    %1892 = vmatpush1.bf16.msra.mxu0 0
    %1893 = vmatprep.subr.bf16.mxu0 0
    %1894 = vmatpush1.bf16.msra.mxu0 0
    %1895 = vmatprep.subr.bf16.mxu0 0
    %1896 = vmatpush1.bf16.msra.mxu0 0
    %1897 = vmatprep.subr.bf16.mxu0 0
    %1898 = vmatpush1.bf16.msra.mxu0 %v1881
    %1899 = vmatprep.subr.bf16.mxu0 0
    %1900 = vmatpush2.bf16.msra.mxu0 0
    %1901 = vmatprep.subr.bf16.mxu0 0
    %1902 = vmatpush2.bf16.msra.mxu0 0
    %1903 = vmatprep.subr.bf16.mxu0 0
    %1904 = vmatpush2.bf16.msra.mxu0 0
    %1905 = vmatprep.subr.bf16.mxu0 0
    %1906 = vmatpush2.bf16.msra.mxu0 0
    %1907 = vmatprep.subr.bf16.mxu0 0
    %1908 = vmatpush2.bf16.msra.mxu0 0
    %1909 = vmatprep.subr.bf16.mxu0 0
    %1910 = vmatpush2.bf16.msra.mxu0 0
    %1911 = vmatprep.subr.bf16.mxu0 0
    %1912 = vmatpush2.bf16.msra.mxu0 0
    %1913 = vmatprep.subr.bf16.mxu0 0
    %1914 = vmatpush2.bf16.msra.mxu0 0
    %1915 = vmatprep.mubr.bf16.mxu0 0
    %1916 = vmatmul.mubr.bf16.gmra.mxu0 %v1878
    %v1917 = vpop.f32.mrf.mxu0
    %v1918 = vadd.f32 0.0, %v1917
    %v1919 = vpop.f32.mrf.mxu0
    %v1920 = vpop.f32.mrf.mxu0
    %v1921 = vpop.f32.mrf.mxu0
    %1922 = vdwg.mxu0
    %1923 = vrot.lane.b32.xlu0 %v205, 56
    %v1924 = vpop.permute.xlu0 %1923
    %v1926 = vsel %vm208, %v1586, 0
    %v1929 = vsel %vm686, %v1924, 0
    %1931 = vmatprep.subr.bf16.mxu0 0
    %1932 = vmatpush1.bf16.msra.mxu0 0
    %1933 = vmatprep.subr.bf16.mxu0 0
    %1934 = vmatpush1.bf16.msra.mxu0 0
    %1935 = vmatprep.subr.bf16.mxu0 0
    %1936 = vmatpush1.bf16.msra.mxu0 0
    %1937 = vmatprep.subr.bf16.mxu0 0
    %1938 = vmatpush1.bf16.msra.mxu0 0
    %1939 = vmatprep.subr.bf16.mxu0 0
    %1940 = vmatpush1.bf16.msra.mxu0 0
    %1941 = vmatprep.subr.bf16.mxu0 0
    %1942 = vmatpush1.bf16.msra.mxu0 0
    %1943 = vmatprep.subr.bf16.mxu0 0
    %1944 = vmatpush1.bf16.msra.mxu0 0
    %1945 = vmatprep.subr.bf16.mxu0 0
    %1946 = vmatpush1.bf16.msra.mxu0 %v1929
    %1947 = vmatprep.subr.bf16.mxu0 0
    %1948 = vmatpush2.bf16.msra.mxu0 0
    %1949 = vmatprep.subr.bf16.mxu0 0
    %1950 = vmatpush2.bf16.msra.mxu0 0
    %1951 = vmatprep.subr.bf16.mxu0 0
    %1952 = vmatpush2.bf16.msra.mxu0 0
    %1953 = vmatprep.subr.bf16.mxu0 0
    %1954 = vmatpush2.bf16.msra.mxu0 0
    %1955 = vmatprep.subr.bf16.mxu0 0
    %1956 = vmatpush2.bf16.msra.mxu0 0
    %1957 = vmatprep.subr.bf16.mxu0 0
    %1958 = vmatpush2.bf16.msra.mxu0 0
    %1959 = vmatprep.subr.bf16.mxu0 0
    %1960 = vmatpush2.bf16.msra.mxu0 0
    %1961 = vmatprep.subr.bf16.mxu0 0
    %1962 = vmatpush2.bf16.msra.mxu0 0
    %1963 = vmatprep.mubr.bf16.mxu0 0
    %1964 = vmatmul.mubr.bf16.gmra.mxu0 %v1926
    %v1965 = vpop.f32.mrf.mxu0
    %v1966 = vadd.f32 0.0, %v1965
    %v1967 = vpop.f32.mrf.mxu0
    %v1968 = vpop.f32.mrf.mxu0
    %v1969 = vpop.f32.mrf.mxu0
    %1970 = vdwg.mxu0
    %v1971 = vrcp.pop %v1557
    %v1972 = vrcp.pop %v1560
    %v1973 = vrcp.pop %v1563
    %v1974 = vrcp.pop %v1566
    %v1975 = vrcp.pop %v1569
    %v1976 = vrcp.pop %v1572
    %v1977 = vrcp.pop %v1575
    %v1978 = vrcp.pop %v1578
    %v1979 = vmul.f32 %v1630, %v1971
    %v1980 = vmul.f32 %v1678, %v1972
    %v1981 = vmul.f32 %v1726, %v1973
    %v1982 = vmul.f32 %v1774, %v1974
    %v1983 = vmul.f32 %v1822, %v1975
    %v1984 = vmul.f32 %v1870, %v1976
    %v1985 = vmul.f32 %v1918, %v1977
    %v1986 = vmul.f32 %v1966, %v1978
    %v1987 = vpack.c.bf16 %v1979, %v1979
    %v1988 = vpack.c.bf16 %v1980, %v1980
    %v1989 = vpack.c.bf16 %v1981, %v1981
    %v1990 = vpack.c.bf16 %v1982, %v1982
    %v1991 = vpack.c.bf16 %v1983, %v1983
    %v1992 = vpack.c.bf16 %v1984, %v1984
    %v1993 = vpack.c.bf16 %v1985, %v1985
    %v1994 = vpack.c.bf16 %v1986, %v1986
    %v2003 = vunpack.c.l.b16 %v1987
    %v2004 = vunpack.c.l.b16 %v1988
    %v2005 = vunpack.c.l.b16 %v1989
    %v2006 = vunpack.c.l.b16 %v1990
    %v2007 = vunpack.c.l.b16 %v1991
    %v2008 = vunpack.c.l.b16 %v1992
    %v2009 = vunpack.c.l.b16 %v1993
    %v2010 = vunpack.c.l.b16 %v1994
    %v2011 = vpack.c.b16 %v2003, %v2003
    %v2012 = vpack.c.b16 %v2004, %v2004
    %v2013 = vpack.c.b16 %v2005, %v2005
    %v2014 = vpack.c.b16 %v2006, %v2006
    %v2015 = vpack.c.b16 %v2007, %v2007
    %v2016 = vpack.c.b16 %v2008, %v2008
    %v2017 = vpack.c.b16 %v2009, %v2009
    %v2018 = vpack.c.b16 %v2010, %v2010
    %2019 = vrot.lane.b32.xlu0 %v2011, 8
    %v2020 = vpop.permute.xlu0 %2019
    %2021 = vrot.lane.b32.xlu0 %v2012, 8
    %v2022 = vpop.permute.xlu0 %2021
    %2023 = vrot.lane.b32.xlu0 %v2013, 8
    %v2024 = vpop.permute.xlu0 %2023
    %2025 = vrot.lane.b32.xlu0 %v2014, 8
    %v2026 = vpop.permute.xlu0 %2025
    %2027 = vrot.lane.b32.xlu0 %v2015, 8
    %v2028 = vpop.permute.xlu0 %2027
    %2029 = vrot.lane.b32.xlu0 %v2016, 8
    %v2030 = vpop.permute.xlu0 %2029
    %2031 = vrot.lane.b32.xlu0 %v2017, 8
    %v2032 = vpop.permute.xlu0 %2031
    %2033 = vrot.lane.b32.xlu0 %v2018, 8
    %v2034 = vpop.permute.xlu0 %2033
    %vm2043 = vcmask 126016
    %2044 = vst.msk [vmem:[#allocation2] sm:$0xf] %vm2043, %v2020
    %2045 = vst.msk [vmem:[#allocation2 + $0x4] sm:$0xf] %vm2043, %v2022
    %2046 = vst.msk [vmem:[#allocation2 + $0x8] sm:$0xf] %vm2043, %v2024
    %2047 = vst.msk [vmem:[#allocation2 + $0xc] sm:$0xf] %vm2043, %v2026
    %2048 = vst.msk [vmem:[#allocation2 + $0x10] sm:$0xf] %vm2043, %v2028
    %2049 = vst.msk [vmem:[#allocation2 + $0x14] sm:$0xf] %vm2043, %v2030
    %2050 = vst.msk [vmem:[#allocation2 + $0x18] sm:$0xf] %vm2043, %v2032
    %2051 = vst.msk [vmem:[#allocation2 + $0x1c] sm:$0xf] %vm2043, %v2034
    %2052 = vrot.lane.b32.xlu0 %v198, 112
    %v2053 = vpop.permute.xlu0 %2052
    %2054 = vrot.lane.b32.xlu0 %v198, 80
    %v2055 = vpop.permute.xlu0 %2054
    %v2057 = vsel %vm208, %v2053, 0
    %v2060 = vsel %vm208, %v2055, 0
    %2062 = vmatprep.subr.bf16.mxu0 0
    %2063 = vmatpush1.bf16.xpose.msra.mxu0 0
    %2064 = vmatprep.subr.bf16.mxu0 0
    %2065 = vmatpush1.bf16.xpose.msra.mxu0 0
    %2066 = vmatprep.subr.bf16.mxu0 0
    %2067 = vmatpush1.bf16.xpose.msra.mxu0 0
    %2068 = vmatprep.subr.bf16.mxu0 0
    %2069 = vmatpush1.bf16.xpose.msra.mxu0 0
    %2070 = vmatprep.subr.bf16.mxu0 0
    %2071 = vmatpush1.bf16.xpose.msra.mxu0 0
    %2072 = vmatprep.subr.bf16.mxu0 0
    %2073 = vmatpush1.bf16.xpose.msra.mxu0 0
    %2074 = vmatprep.subr.bf16.mxu0 0
    %2075 = vmatpush1.bf16.xpose.msra.mxu0 0
    %2076 = vmatprep.subr.bf16.mxu0 0
    %2077 = vmatpush1.bf16.xpose.msra.mxu0 %v2060
    %2078 = vmatprep.subr.bf16.mxu0 0
    %2079 = vmatpush2.bf16.xpose.msra.mxu0 0
    %2080 = vmatprep.subr.bf16.mxu0 0
    %2081 = vmatpush2.bf16.xpose.msra.mxu0 0
    %2082 = vmatprep.subr.bf16.mxu0 0
    %2083 = vmatpush2.bf16.xpose.msra.mxu0 0
    %2084 = vmatprep.subr.bf16.mxu0 0
    %2085 = vmatpush2.bf16.xpose.msra.mxu0 0
    %2086 = vmatprep.subr.bf16.mxu0 0
    %2087 = vmatpush2.bf16.xpose.msra.mxu0 0
    %2088 = vmatprep.subr.bf16.mxu0 0
    %2089 = vmatpush2.bf16.xpose.msra.mxu0 0
    %2090 = vmatprep.subr.bf16.mxu0 0
    %2091 = vmatpush2.bf16.xpose.msra.mxu0 0
    %2092 = vmatprep.subr.bf16.mxu0 0
    %2093 = vmatpush2.bf16.xpose.msra.mxu0 0
    %2094 = vmatprep.mubr.bf16.mxu0 0
    %2095 = vmatmul.mubr.bf16.gmra.mxu0 %v2057
    %v2096 = vpop.f32.mrf.mxu0
    %v2097 = vadd.f32 0.0, %v2096
    %v2098 = vpop.f32.mrf.mxu0
    %v2099 = vpop.f32.mrf.mxu0
    %v2100 = vpop.f32.mrf.mxu0
    %2101 = vdwg.mxu0
    %2102 = vrot.lane.b32.xlu0 %v199, 112
    %v2103 = vpop.permute.xlu0 %2102
    %2104 = vrot.lane.b32.xlu0 %v199, 80
    %v2105 = vpop.permute.xlu0 %2104
    %v2107 = vsel %vm208, %v2103, 0
    %v2110 = vsel %vm208, %v2105, 0
    %2112 = vmatprep.subr.bf16.mxu0 0
    %2113 = vmatpush1.bf16.xpose.msra.mxu0 0
    %2114 = vmatprep.subr.bf16.mxu0 0
    %2115 = vmatpush1.bf16.xpose.msra.mxu0 0
    %2116 = vmatprep.subr.bf16.mxu0 0
    %2117 = vmatpush1.bf16.xpose.msra.mxu0 0
    %2118 = vmatprep.subr.bf16.mxu0 0
    %2119 = vmatpush1.bf16.xpose.msra.mxu0 0
    %2120 = vmatprep.subr.bf16.mxu0 0
    %2121 = vmatpush1.bf16.xpose.msra.mxu0 0
    %2122 = vmatprep.subr.bf16.mxu0 0
    %2123 = vmatpush1.bf16.xpose.msra.mxu0 0
    %2124 = vmatprep.subr.bf16.mxu0 0
    %2125 = vmatpush1.bf16.xpose.msra.mxu0 0
    %2126 = vmatprep.subr.bf16.mxu0 0
    %2127 = vmatpush1.bf16.xpose.msra.mxu0 %v2110
    %2128 = vmatprep.subr.bf16.mxu0 0
    %2129 = vmatpush2.bf16.xpose.msra.mxu0 0
    %2130 = vmatprep.subr.bf16.mxu0 0
    %2131 = vmatpush2.bf16.xpose.msra.mxu0 0
    %2132 = vmatprep.subr.bf16.mxu0 0
    %2133 = vmatpush2.bf16.xpose.msra.mxu0 0
    %2134 = vmatprep.subr.bf16.mxu0 0
    %2135 = vmatpush2.bf16.xpose.msra.mxu0 0
    %2136 = vmatprep.subr.bf16.mxu0 0
    %2137 = vmatpush2.bf16.xpose.msra.mxu0 0
    %2138 = vmatprep.subr.bf16.mxu0 0
    %2139 = vmatpush2.bf16.xpose.msra.mxu0 0
    %2140 = vmatprep.subr.bf16.mxu0 0
    %2141 = vmatpush2.bf16.xpose.msra.mxu0 0
    %2142 = vmatprep.subr.bf16.mxu0 0
    %2143 = vmatpush2.bf16.xpose.msra.mxu0 0
    %2144 = vmatprep.mubr.bf16.mxu0 0
    %2145 = vmatmul.mubr.bf16.gmra.mxu0 %v2107
    %v2146 = vpop.f32.mrf.mxu0
    %v2147 = vadd.f32 0.0, %v2146
    %v2148 = vpop.f32.mrf.mxu0
    %v2149 = vpop.f32.mrf.mxu0
    %v2150 = vpop.f32.mrf.mxu0
    %2151 = vdwg.mxu0
    %2152 = vrot.lane.b32.xlu0 %v200, 112
    %v2153 = vpop.permute.xlu0 %2152
    %2154 = vrot.lane.b32.xlu0 %v200, 80
    %v2155 = vpop.permute.xlu0 %2154
    %v2157 = vsel %vm208, %v2153, 0
    %v2160 = vsel %vm208, %v2155, 0
    %2162 = vmatprep.subr.bf16.mxu0 0
    %2163 = vmatpush1.bf16.xpose.msra.mxu0 0
    %2164 = vmatprep.subr.bf16.mxu0 0
    %2165 = vmatpush1.bf16.xpose.msra.mxu0 0
    %2166 = vmatprep.subr.bf16.mxu0 0
    %2167 = vmatpush1.bf16.xpose.msra.mxu0 0
    %2168 = vmatprep.subr.bf16.mxu0 0
    %2169 = vmatpush1.bf16.xpose.msra.mxu0 0
    %2170 = vmatprep.subr.bf16.mxu0 0
    %2171 = vmatpush1.bf16.xpose.msra.mxu0 0
    %2172 = vmatprep.subr.bf16.mxu0 0
    %2173 = vmatpush1.bf16.xpose.msra.mxu0 0
    %2174 = vmatprep.subr.bf16.mxu0 0
    %2175 = vmatpush1.bf16.xpose.msra.mxu0 0
    %2176 = vmatprep.subr.bf16.mxu0 0
    %2177 = vmatpush1.bf16.xpose.msra.mxu0 %v2160
    %2178 = vmatprep.subr.bf16.mxu0 0
    %2179 = vmatpush2.bf16.xpose.msra.mxu0 0
    %2180 = vmatprep.subr.bf16.mxu0 0
    %2181 = vmatpush2.bf16.xpose.msra.mxu0 0
    %2182 = vmatprep.subr.bf16.mxu0 0
    %2183 = vmatpush2.bf16.xpose.msra.mxu0 0
    %2184 = vmatprep.subr.bf16.mxu0 0
    %2185 = vmatpush2.bf16.xpose.msra.mxu0 0
    %2186 = vmatprep.subr.bf16.mxu0 0
    %2187 = vmatpush2.bf16.xpose.msra.mxu0 0
    %2188 = vmatprep.subr.bf16.mxu0 0
    %2189 = vmatpush2.bf16.xpose.msra.mxu0 0
    %2190 = vmatprep.subr.bf16.mxu0 0
    %2191 = vmatpush2.bf16.xpose.msra.mxu0 0
    %2192 = vmatprep.subr.bf16.mxu0 0
    %2193 = vmatpush2.bf16.xpose.msra.mxu0 0
    %2194 = vmatprep.mubr.bf16.mxu0 0
    %2195 = vmatmul.mubr.bf16.gmra.mxu0 %v2157
    %v2196 = vpop.f32.mrf.mxu0
    %v2197 = vadd.f32 0.0, %v2196
    %v2198 = vpop.f32.mrf.mxu0
    %v2199 = vpop.f32.mrf.mxu0
    %v2200 = vpop.f32.mrf.mxu0
    %2201 = vdwg.mxu0
    %2202 = vrot.lane.b32.xlu0 %v201, 112
    %v2203 = vpop.permute.xlu0 %2202
    %2204 = vrot.lane.b32.xlu0 %v201, 80
    %v2205 = vpop.permute.xlu0 %2204
    %v2207 = vsel %vm208, %v2203, 0
    %v2210 = vsel %vm208, %v2205, 0
    %2212 = vmatprep.subr.bf16.mxu0 0
    %2213 = vmatpush1.bf16.xpose.msra.mxu0 0
    %2214 = vmatprep.subr.bf16.mxu0 0
    %2215 = vmatpush1.bf16.xpose.msra.mxu0 0
    %2216 = vmatprep.subr.bf16.mxu0 0
    %2217 = vmatpush1.bf16.xpose.msra.mxu0 0
    %2218 = vmatprep.subr.bf16.mxu0 0
    %2219 = vmatpush1.bf16.xpose.msra.mxu0 0
    %2220 = vmatprep.subr.bf16.mxu0 0
    %2221 = vmatpush1.bf16.xpose.msra.mxu0 0
    %2222 = vmatprep.subr.bf16.mxu0 0
    %2223 = vmatpush1.bf16.xpose.msra.mxu0 0
    %2224 = vmatprep.subr.bf16.mxu0 0
    %2225 = vmatpush1.bf16.xpose.msra.mxu0 0
    %2226 = vmatprep.subr.bf16.mxu0 0
    %2227 = vmatpush1.bf16.xpose.msra.mxu0 %v2210
    %2228 = vmatprep.subr.bf16.mxu0 0
    %2229 = vmatpush2.bf16.xpose.msra.mxu0 0
    %2230 = vmatprep.subr.bf16.mxu0 0
    %2231 = vmatpush2.bf16.xpose.msra.mxu0 0
    %2232 = vmatprep.subr.bf16.mxu0 0
    %2233 = vmatpush2.bf16.xpose.msra.mxu0 0
    %2234 = vmatprep.subr.bf16.mxu0 0
    %2235 = vmatpush2.bf16.xpose.msra.mxu0 0
    %2236 = vmatprep.subr.bf16.mxu0 0
    %2237 = vmatpush2.bf16.xpose.msra.mxu0 0
    %2238 = vmatprep.subr.bf16.mxu0 0
    %2239 = vmatpush2.bf16.xpose.msra.mxu0 0
    %2240 = vmatprep.subr.bf16.mxu0 0
    %2241 = vmatpush2.bf16.xpose.msra.mxu0 0
    %2242 = vmatprep.subr.bf16.mxu0 0
    %2243 = vmatpush2.bf16.xpose.msra.mxu0 0
    %2244 = vmatprep.mubr.bf16.mxu0 0
    %2245 = vmatmul.mubr.bf16.gmra.mxu0 %v2207
    %v2246 = vpop.f32.mrf.mxu0
    %v2247 = vadd.f32 0.0, %v2246
    %v2248 = vpop.f32.mrf.mxu0
    %v2249 = vpop.f32.mrf.mxu0
    %v2250 = vpop.f32.mrf.mxu0
    %2251 = vdwg.mxu0
    %2252 = vrot.lane.b32.xlu0 %v202, 112
    %v2253 = vpop.permute.xlu0 %2252
    %2254 = vrot.lane.b32.xlu0 %v202, 80
    %v2255 = vpop.permute.xlu0 %2254
    %v2257 = vsel %vm208, %v2253, 0
    %v2260 = vsel %vm208, %v2255, 0
    %2262 = vmatprep.subr.bf16.mxu0 0
    %2263 = vmatpush1.bf16.xpose.msra.mxu0 0
    %2264 = vmatprep.subr.bf16.mxu0 0
    %2265 = vmatpush1.bf16.xpose.msra.mxu0 0
    %2266 = vmatprep.subr.bf16.mxu0 0
    %2267 = vmatpush1.bf16.xpose.msra.mxu0 0
    %2268 = vmatprep.subr.bf16.mxu0 0
    %2269 = vmatpush1.bf16.xpose.msra.mxu0 0
    %2270 = vmatprep.subr.bf16.mxu0 0
    %2271 = vmatpush1.bf16.xpose.msra.mxu0 0
    %2272 = vmatprep.subr.bf16.mxu0 0
    %2273 = vmatpush1.bf16.xpose.msra.mxu0 0
    %2274 = vmatprep.subr.bf16.mxu0 0
    %2275 = vmatpush1.bf16.xpose.msra.mxu0 0
    %2276 = vmatprep.subr.bf16.mxu0 0
    %2277 = vmatpush1.bf16.xpose.msra.mxu0 %v2260
    %2278 = vmatprep.subr.bf16.mxu0 0
    %2279 = vmatpush2.bf16.xpose.msra.mxu0 0
    %2280 = vmatprep.subr.bf16.mxu0 0
    %2281 = vmatpush2.bf16.xpose.msra.mxu0 0
    %2282 = vmatprep.subr.bf16.mxu0 0
    %2283 = vmatpush2.bf16.xpose.msra.mxu0 0
    %2284 = vmatprep.subr.bf16.mxu0 0
    %2285 = vmatpush2.bf16.xpose.msra.mxu0 0
    %2286 = vmatprep.subr.bf16.mxu0 0
    %2287 = vmatpush2.bf16.xpose.msra.mxu0 0
    %2288 = vmatprep.subr.bf16.mxu0 0
    %2289 = vmatpush2.bf16.xpose.msra.mxu0 0
    %2290 = vmatprep.subr.bf16.mxu0 0
    %2291 = vmatpush2.bf16.xpose.msra.mxu0 0
    %2292 = vmatprep.subr.bf16.mxu0 0
    %2293 = vmatpush2.bf16.xpose.msra.mxu0 0
    %2294 = vmatprep.mubr.bf16.mxu0 0
    %2295 = vmatmul.mubr.bf16.gmra.mxu0 %v2257
    %v2296 = vpop.f32.mrf.mxu0
    %v2297 = vadd.f32 0.0, %v2296
    %v2298 = vpop.f32.mrf.mxu0
    %v2299 = vpop.f32.mrf.mxu0
    %v2300 = vpop.f32.mrf.mxu0
    %2301 = vdwg.mxu0
    %2302 = vrot.lane.b32.xlu0 %v203, 112
    %v2303 = vpop.permute.xlu0 %2302
    %2304 = vrot.lane.b32.xlu0 %v203, 80
    %v2305 = vpop.permute.xlu0 %2304
    %v2307 = vsel %vm208, %v2303, 0
    %v2310 = vsel %vm208, %v2305, 0
    %2312 = vmatprep.subr.bf16.mxu0 0
    %2313 = vmatpush1.bf16.xpose.msra.mxu0 0
    %2314 = vmatprep.subr.bf16.mxu0 0
    %2315 = vmatpush1.bf16.xpose.msra.mxu0 0
    %2316 = vmatprep.subr.bf16.mxu0 0
    %2317 = vmatpush1.bf16.xpose.msra.mxu0 0
    %2318 = vmatprep.subr.bf16.mxu0 0
    %2319 = vmatpush1.bf16.xpose.msra.mxu0 0
    %2320 = vmatprep.subr.bf16.mxu0 0
    %2321 = vmatpush1.bf16.xpose.msra.mxu0 0
    %2322 = vmatprep.subr.bf16.mxu0 0
    %2323 = vmatpush1.bf16.xpose.msra.mxu0 0
    %2324 = vmatprep.subr.bf16.mxu0 0
    %2325 = vmatpush1.bf16.xpose.msra.mxu0 0
    %2326 = vmatprep.subr.bf16.mxu0 0
    %2327 = vmatpush1.bf16.xpose.msra.mxu0 %v2310
    %2328 = vmatprep.subr.bf16.mxu0 0
    %2329 = vmatpush2.bf16.xpose.msra.mxu0 0
    %2330 = vmatprep.subr.bf16.mxu0 0
    %2331 = vmatpush2.bf16.xpose.msra.mxu0 0
    %2332 = vmatprep.subr.bf16.mxu0 0
    %2333 = vmatpush2.bf16.xpose.msra.mxu0 0
    %2334 = vmatprep.subr.bf16.mxu0 0
    %2335 = vmatpush2.bf16.xpose.msra.mxu0 0
    %2336 = vmatprep.subr.bf16.mxu0 0
    %2337 = vmatpush2.bf16.xpose.msra.mxu0 0
    %2338 = vmatprep.subr.bf16.mxu0 0
    %2339 = vmatpush2.bf16.xpose.msra.mxu0 0
    %2340 = vmatprep.subr.bf16.mxu0 0
    %2341 = vmatpush2.bf16.xpose.msra.mxu0 0
    %2342 = vmatprep.subr.bf16.mxu0 0
    %2343 = vmatpush2.bf16.xpose.msra.mxu0 0
    %2344 = vmatprep.mubr.bf16.mxu0 0
    %2345 = vmatmul.mubr.bf16.gmra.mxu0 %v2307
    %v2346 = vpop.f32.mrf.mxu0
    %v2347 = vadd.f32 0.0, %v2346
    %v2348 = vpop.f32.mrf.mxu0
    %v2349 = vpop.f32.mrf.mxu0
    %v2350 = vpop.f32.mrf.mxu0
    %2351 = vdwg.mxu0
    %2352 = vrot.lane.b32.xlu0 %v204, 112
    %v2353 = vpop.permute.xlu0 %2352
    %2354 = vrot.lane.b32.xlu0 %v204, 80
    %v2355 = vpop.permute.xlu0 %2354
    %v2357 = vsel %vm208, %v2353, 0
    %v2360 = vsel %vm208, %v2355, 0
    %2362 = vmatprep.subr.bf16.mxu0 0
    %2363 = vmatpush1.bf16.xpose.msra.mxu0 0
    %2364 = vmatprep.subr.bf16.mxu0 0
    %2365 = vmatpush1.bf16.xpose.msra.mxu0 0
    %2366 = vmatprep.subr.bf16.mxu0 0
    %2367 = vmatpush1.bf16.xpose.msra.mxu0 0
    %2368 = vmatprep.subr.bf16.mxu0 0
    %2369 = vmatpush1.bf16.xpose.msra.mxu0 0
    %2370 = vmatprep.subr.bf16.mxu0 0
    %2371 = vmatpush1.bf16.xpose.msra.mxu0 0
    %2372 = vmatprep.subr.bf16.mxu0 0
    %2373 = vmatpush1.bf16.xpose.msra.mxu0 0
    %2374 = vmatprep.subr.bf16.mxu0 0
    %2375 = vmatpush1.bf16.xpose.msra.mxu0 0
    %2376 = vmatprep.subr.bf16.mxu0 0
    %2377 = vmatpush1.bf16.xpose.msra.mxu0 %v2360
    %2378 = vmatprep.subr.bf16.mxu0 0
    %2379 = vmatpush2.bf16.xpose.msra.mxu0 0
    %2380 = vmatprep.subr.bf16.mxu0 0
    %2381 = vmatpush2.bf16.xpose.msra.mxu0 0
    %2382 = vmatprep.subr.bf16.mxu0 0
    %2383 = vmatpush2.bf16.xpose.msra.mxu0 0
    %2384 = vmatprep.subr.bf16.mxu0 0
    %2385 = vmatpush2.bf16.xpose.msra.mxu0 0
    %2386 = vmatprep.subr.bf16.mxu0 0
    %2387 = vmatpush2.bf16.xpose.msra.mxu0 0
    %2388 = vmatprep.subr.bf16.mxu0 0
    %2389 = vmatpush2.bf16.xpose.msra.mxu0 0
    %2390 = vmatprep.subr.bf16.mxu0 0
    %2391 = vmatpush2.bf16.xpose.msra.mxu0 0
    %2392 = vmatprep.subr.bf16.mxu0 0
    %2393 = vmatpush2.bf16.xpose.msra.mxu0 0
    %2394 = vmatprep.mubr.bf16.mxu0 0
    %2395 = vmatmul.mubr.bf16.gmra.mxu0 %v2357
    %v2396 = vpop.f32.mrf.mxu0
    %v2397 = vadd.f32 0.0, %v2396
    %v2398 = vpop.f32.mrf.mxu0
    %v2399 = vpop.f32.mrf.mxu0
    %v2400 = vpop.f32.mrf.mxu0
    %2401 = vdwg.mxu0
    %2402 = vrot.lane.b32.xlu0 %v205, 112
    %v2403 = vpop.permute.xlu0 %2402
    %2404 = vrot.lane.b32.xlu0 %v205, 80
    %v2405 = vpop.permute.xlu0 %2404
    %v2407 = vsel %vm208, %v2403, 0
    %v2410 = vsel %vm208, %v2405, 0
    %2412 = vmatprep.subr.bf16.mxu0 0
    %2413 = vmatpush1.bf16.xpose.msra.mxu0 0
    %2414 = vmatprep.subr.bf16.mxu0 0
    %2415 = vmatpush1.bf16.xpose.msra.mxu0 0
    %2416 = vmatprep.subr.bf16.mxu0 0
    %2417 = vmatpush1.bf16.xpose.msra.mxu0 0
    %2418 = vmatprep.subr.bf16.mxu0 0
    %2419 = vmatpush1.bf16.xpose.msra.mxu0 0
    %2420 = vmatprep.subr.bf16.mxu0 0
    %2421 = vmatpush1.bf16.xpose.msra.mxu0 0
    %2422 = vmatprep.subr.bf16.mxu0 0
    %2423 = vmatpush1.bf16.xpose.msra.mxu0 0
    %2424 = vmatprep.subr.bf16.mxu0 0
    %2425 = vmatpush1.bf16.xpose.msra.mxu0 0
    %2426 = vmatprep.subr.bf16.mxu0 0
    %2427 = vmatpush1.bf16.xpose.msra.mxu0 %v2410
    %2428 = vmatprep.subr.bf16.mxu0 0
    %2429 = vmatpush2.bf16.xpose.msra.mxu0 0
    %2430 = vmatprep.subr.bf16.mxu0 0
    %2431 = vmatpush2.bf16.xpose.msra.mxu0 0
    %2432 = vmatprep.subr.bf16.mxu0 0
    %2433 = vmatpush2.bf16.xpose.msra.mxu0 0
    %2434 = vmatprep.subr.bf16.mxu0 0
    %2435 = vmatpush2.bf16.xpose.msra.mxu0 0
    %2436 = vmatprep.subr.bf16.mxu0 0
    %2437 = vmatpush2.bf16.xpose.msra.mxu0 0
    %2438 = vmatprep.subr.bf16.mxu0 0
    %2439 = vmatpush2.bf16.xpose.msra.mxu0 0
    %2440 = vmatprep.subr.bf16.mxu0 0
    %2441 = vmatpush2.bf16.xpose.msra.mxu0 0
    %2442 = vmatprep.subr.bf16.mxu0 0
    %2443 = vmatpush2.bf16.xpose.msra.mxu0 0
    %2444 = vmatprep.mubr.bf16.mxu0 0
    %2445 = vmatmul.mubr.bf16.gmra.mxu0 %v2407
    %v2446 = vpop.f32.mrf.mxu0
    %v2447 = vadd.f32 0.0, %v2446
    %v2448 = vpop.f32.mrf.mxu0
    %v2449 = vpop.f32.mrf.mxu0
    %v2450 = vpop.f32.mrf.mxu0
    %2451 = vdwg.mxu0
    %v2452 = vsel %vm592, %v2097, -1e+30
    %v2453 = vsel %vm592, %v2147, -1e+30
    %v2454 = vsel %vm592, %v2197, -1e+30
    %v2455 = vsel %vm592, %v2247, -1e+30
    %v2456 = vsel %vm592, %v2297, -1e+30
    %v2457 = vsel %vm592, %v2347, -1e+30
    %v2458 = vsel %vm592, %v2397, -1e+30
    %v2459 = vsel %vm592, %v2447, -1e+30
    %v2460 = vsel %vm208, %v2452, -inf
    %2461 = vmax.xlane.f32.xlu0 %v2460
    %v2462 = vpop.xlane.xlu0 %2461
    %v2463 = vsel %vm208, %v2453, -inf
    %2464 = vmax.xlane.f32.xlu0 %v2463
    %v2465 = vpop.xlane.xlu0 %2464
    %v2466 = vsel %vm208, %v2454, -inf
    %2467 = vmax.xlane.f32.xlu0 %v2466
    %v2468 = vpop.xlane.xlu0 %2467
    %v2469 = vsel %vm208, %v2455, -inf
    %2470 = vmax.xlane.f32.xlu0 %v2469
    %v2471 = vpop.xlane.xlu0 %2470
    %v2472 = vsel %vm208, %v2456, -inf
    %2473 = vmax.xlane.f32.xlu0 %v2472
    %v2474 = vpop.xlane.xlu0 %2473
    %v2475 = vsel %vm208, %v2457, -inf
    %2476 = vmax.xlane.f32.xlu0 %v2475
    %v2477 = vpop.xlane.xlu0 %2476
    %v2478 = vsel %vm208, %v2458, -inf
    %2479 = vmax.xlane.f32.xlu0 %v2478
    %v2480 = vpop.xlane.xlu0 %2479
    %v2481 = vsel %vm208, %v2459, -inf
    %2482 = vmax.xlane.f32.xlu0 %v2481
    %v2483 = vpop.xlane.xlu0 %2482
    %v2484 = vsub.f32 %v2452, %v2462
    %v2485 = vsub.f32 %v2453, %v2465
    %v2486 = vsub.f32 %v2454, %v2468
    %v2487 = vsub.f32 %v2455, %v2471
    %v2488 = vsub.f32 %v2456, %v2474
    %v2489 = vsub.f32 %v2457, %v2477
    %v2490 = vsub.f32 %v2458, %v2480
    %v2491 = vsub.f32 %v2459, %v2483
    %v2492 = vmul.f32 %v2484, 1.442695
    %v2493 = vpow.pop %v2492
    %v2494 = vmul.f32 %v2485, 1.442695
    %v2495 = vpow.pop %v2494
    %v2496 = vmul.f32 %v2486, 1.442695
    %v2497 = vpow.pop %v2496
    %v2498 = vmul.f32 %v2487, 1.442695
    %v2499 = vpow.pop %v2498
    %v2500 = vmul.f32 %v2488, 1.442695
    %v2501 = vpow.pop %v2500
    %v2502 = vmul.f32 %v2489, 1.442695
    %v2503 = vpow.pop %v2502
    %v2504 = vmul.f32 %v2490, 1.442695
    %v2505 = vpow.pop %v2504
    %v2506 = vmul.f32 %v2491, 1.442695
    %v2507 = vpow.pop %v2506
    %v2508 = vsel %vm208, %v2493, 0.0
    %2509 = vadd.xlane.f32.xlu0 %v2508
    %v2510 = vpop.xlane.xlu0 %2509
    %v2511 = vsel %vm208, %v2495, 0.0
    %2512 = vadd.xlane.f32.xlu0 %v2511
    %v2513 = vpop.xlane.xlu0 %2512
    %v2514 = vsel %vm208, %v2497, 0.0
    %2515 = vadd.xlane.f32.xlu0 %v2514
    %v2516 = vpop.xlane.xlu0 %2515
    %v2517 = vsel %vm208, %v2499, 0.0
    %2518 = vadd.xlane.f32.xlu0 %v2517
    %v2519 = vpop.xlane.xlu0 %2518
    %v2520 = vsel %vm208, %v2501, 0.0
    %2521 = vadd.xlane.f32.xlu0 %v2520
    %v2522 = vpop.xlane.xlu0 %2521
    %v2523 = vsel %vm208, %v2503, 0.0
    %2524 = vadd.xlane.f32.xlu0 %v2523
    %v2525 = vpop.xlane.xlu0 %2524
    %v2526 = vsel %vm208, %v2505, 0.0
    %2527 = vadd.xlane.f32.xlu0 %v2526
    %v2528 = vpop.xlane.xlu0 %2527
    %v2529 = vsel %vm208, %v2507, 0.0
    %2530 = vadd.xlane.f32.xlu0 %v2529
    %v2531 = vpop.xlane.xlu0 %2530
    %v2532 = vpack.c.bf16 %v2493, %v2493
    %v2533 = vpack.c.bf16 %v2495, %v2495
    %v2534 = vpack.c.bf16 %v2497, %v2497
    %v2535 = vpack.c.bf16 %v2499, %v2499
    %v2536 = vpack.c.bf16 %v2501, %v2501
    %v2537 = vpack.c.bf16 %v2503, %v2503
    %v2538 = vpack.c.bf16 %v2505, %v2505
    %v2539 = vpack.c.bf16 %v2507, %v2507
    %2540 = vrot.lane.b32.xlu0 %v198, 48
    %v2541 = vpop.permute.xlu0 %2540
    %v2543 = vsel %vm208, %v2532, 0
    %v2546 = vsel %vm686, %v2541, 0
    %2548 = vmatprep.subr.bf16.mxu0 0
    %2549 = vmatpush1.bf16.msra.mxu0 0
    %2550 = vmatprep.subr.bf16.mxu0 0
    %2551 = vmatpush1.bf16.msra.mxu0 0
    %2552 = vmatprep.subr.bf16.mxu0 0
    %2553 = vmatpush1.bf16.msra.mxu0 0
    %2554 = vmatprep.subr.bf16.mxu0 0
    %2555 = vmatpush1.bf16.msra.mxu0 0
    %2556 = vmatprep.subr.bf16.mxu0 0
    %2557 = vmatpush1.bf16.msra.mxu0 0
    %2558 = vmatprep.subr.bf16.mxu0 0
    %2559 = vmatpush1.bf16.msra.mxu0 0
    %2560 = vmatprep.subr.bf16.mxu0 0
    %2561 = vmatpush1.bf16.msra.mxu0 0
    %2562 = vmatprep.subr.bf16.mxu0 0
    %2563 = vmatpush1.bf16.msra.mxu0 %v2546
    %2564 = vmatprep.subr.bf16.mxu0 0
    %2565 = vmatpush2.bf16.msra.mxu0 0
    %2566 = vmatprep.subr.bf16.mxu0 0
    %2567 = vmatpush2.bf16.msra.mxu0 0
    %2568 = vmatprep.subr.bf16.mxu0 0
    %2569 = vmatpush2.bf16.msra.mxu0 0
    %2570 = vmatprep.subr.bf16.mxu0 0
    %2571 = vmatpush2.bf16.msra.mxu0 0
    %2572 = vmatprep.subr.bf16.mxu0 0
    %2573 = vmatpush2.bf16.msra.mxu0 0
    %2574 = vmatprep.subr.bf16.mxu0 0
    %2575 = vmatpush2.bf16.msra.mxu0 0
    %2576 = vmatprep.subr.bf16.mxu0 0
    %2577 = vmatpush2.bf16.msra.mxu0 0
    %2578 = vmatprep.subr.bf16.mxu0 0
    %2579 = vmatpush2.bf16.msra.mxu0 0
    %2580 = vmatprep.mubr.bf16.mxu0 0
    %2581 = vmatmul.mubr.bf16.gmra.mxu0 %v2543
    %v2582 = vpop.f32.mrf.mxu0
    %v2583 = vadd.f32 0.0, %v2582
    %v2584 = vpop.f32.mrf.mxu0
    %v2585 = vpop.f32.mrf.mxu0
    %v2586 = vpop.f32.mrf.mxu0
    %2587 = vdwg.mxu0
    %2588 = vrot.lane.b32.xlu0 %v199, 48
    %v2589 = vpop.permute.xlu0 %2588
    %v2591 = vsel %vm208, %v2533, 0
    %v2594 = vsel %vm686, %v2589, 0
    %2596 = vmatprep.subr.bf16.mxu0 0
    %2597 = vmatpush1.bf16.msra.mxu0 0
    %2598 = vmatprep.subr.bf16.mxu0 0
    %2599 = vmatpush1.bf16.msra.mxu0 0
    %2600 = vmatprep.subr.bf16.mxu0 0
    %2601 = vmatpush1.bf16.msra.mxu0 0
    %2602 = vmatprep.subr.bf16.mxu0 0
    %2603 = vmatpush1.bf16.msra.mxu0 0
    %2604 = vmatprep.subr.bf16.mxu0 0
    %2605 = vmatpush1.bf16.msra.mxu0 0
    %2606 = vmatprep.subr.bf16.mxu0 0
    %2607 = vmatpush1.bf16.msra.mxu0 0
    %2608 = vmatprep.subr.bf16.mxu0 0
    %2609 = vmatpush1.bf16.msra.mxu0 0
    %2610 = vmatprep.subr.bf16.mxu0 0
    %2611 = vmatpush1.bf16.msra.mxu0 %v2594
    %2612 = vmatprep.subr.bf16.mxu0 0
    %2613 = vmatpush2.bf16.msra.mxu0 0
    %2614 = vmatprep.subr.bf16.mxu0 0
    %2615 = vmatpush2.bf16.msra.mxu0 0
    %2616 = vmatprep.subr.bf16.mxu0 0
    %2617 = vmatpush2.bf16.msra.mxu0 0
    %2618 = vmatprep.subr.bf16.mxu0 0
    %2619 = vmatpush2.bf16.msra.mxu0 0
    %2620 = vmatprep.subr.bf16.mxu0 0
    %2621 = vmatpush2.bf16.msra.mxu0 0
    %2622 = vmatprep.subr.bf16.mxu0 0
    %2623 = vmatpush2.bf16.msra.mxu0 0
    %2624 = vmatprep.subr.bf16.mxu0 0
    %2625 = vmatpush2.bf16.msra.mxu0 0
    %2626 = vmatprep.subr.bf16.mxu0 0
    %2627 = vmatpush2.bf16.msra.mxu0 0
    %2628 = vmatprep.mubr.bf16.mxu0 0
    %2629 = vmatmul.mubr.bf16.gmra.mxu0 %v2591
    %v2630 = vpop.f32.mrf.mxu0
    %v2631 = vadd.f32 0.0, %v2630
    %v2632 = vpop.f32.mrf.mxu0
    %v2633 = vpop.f32.mrf.mxu0
    %v2634 = vpop.f32.mrf.mxu0
    %2635 = vdwg.mxu0
    %2636 = vrot.lane.b32.xlu0 %v200, 48
    %v2637 = vpop.permute.xlu0 %2636
    %v2639 = vsel %vm208, %v2534, 0
    %v2642 = vsel %vm686, %v2637, 0
    %2644 = vmatprep.subr.bf16.mxu0 0
    %2645 = vmatpush1.bf16.msra.mxu0 0
    %2646 = vmatprep.subr.bf16.mxu0 0
    %2647 = vmatpush1.bf16.msra.mxu0 0
    %2648 = vmatprep.subr.bf16.mxu0 0
    %2649 = vmatpush1.bf16.msra.mxu0 0
    %2650 = vmatprep.subr.bf16.mxu0 0
    %2651 = vmatpush1.bf16.msra.mxu0 0
    %2652 = vmatprep.subr.bf16.mxu0 0
    %2653 = vmatpush1.bf16.msra.mxu0 0
    %2654 = vmatprep.subr.bf16.mxu0 0
    %2655 = vmatpush1.bf16.msra.mxu0 0
    %2656 = vmatprep.subr.bf16.mxu0 0
    %2657 = vmatpush1.bf16.msra.mxu0 0
    %2658 = vmatprep.subr.bf16.mxu0 0
    %2659 = vmatpush1.bf16.msra.mxu0 %v2642
    %2660 = vmatprep.subr.bf16.mxu0 0
    %2661 = vmatpush2.bf16.msra.mxu0 0
    %2662 = vmatprep.subr.bf16.mxu0 0
    %2663 = vmatpush2.bf16.msra.mxu0 0
    %2664 = vmatprep.subr.bf16.mxu0 0
    %2665 = vmatpush2.bf16.msra.mxu0 0
    %2666 = vmatprep.subr.bf16.mxu0 0
    %2667 = vmatpush2.bf16.msra.mxu0 0
    %2668 = vmatprep.subr.bf16.mxu0 0
    %2669 = vmatpush2.bf16.msra.mxu0 0
    %2670 = vmatprep.subr.bf16.mxu0 0
    %2671 = vmatpush2.bf16.msra.mxu0 0
    %2672 = vmatprep.subr.bf16.mxu0 0
    %2673 = vmatpush2.bf16.msra.mxu0 0
    %2674 = vmatprep.subr.bf16.mxu0 0
    %2675 = vmatpush2.bf16.msra.mxu0 0
    %2676 = vmatprep.mubr.bf16.mxu0 0
    %2677 = vmatmul.mubr.bf16.gmra.mxu0 %v2639
    %v2678 = vpop.f32.mrf.mxu0
    %v2679 = vadd.f32 0.0, %v2678
    %v2680 = vpop.f32.mrf.mxu0
    %v2681 = vpop.f32.mrf.mxu0
    %v2682 = vpop.f32.mrf.mxu0
    %2683 = vdwg.mxu0
    %2684 = vrot.lane.b32.xlu0 %v201, 48
    %v2685 = vpop.permute.xlu0 %2684
    %v2687 = vsel %vm208, %v2535, 0
    %v2690 = vsel %vm686, %v2685, 0
    %2692 = vmatprep.subr.bf16.mxu0 0
    %2693 = vmatpush1.bf16.msra.mxu0 0
    %2694 = vmatprep.subr.bf16.mxu0 0
    %2695 = vmatpush1.bf16.msra.mxu0 0
    %2696 = vmatprep.subr.bf16.mxu0 0
    %2697 = vmatpush1.bf16.msra.mxu0 0
    %2698 = vmatprep.subr.bf16.mxu0 0
    %2699 = vmatpush1.bf16.msra.mxu0 0
    %2700 = vmatprep.subr.bf16.mxu0 0
    %2701 = vmatpush1.bf16.msra.mxu0 0
    %2702 = vmatprep.subr.bf16.mxu0 0
    %2703 = vmatpush1.bf16.msra.mxu0 0
    %2704 = vmatprep.subr.bf16.mxu0 0
    %2705 = vmatpush1.bf16.msra.mxu0 0
    %2706 = vmatprep.subr.bf16.mxu0 0
    %2707 = vmatpush1.bf16.msra.mxu0 %v2690
    %2708 = vmatprep.subr.bf16.mxu0 0
    %2709 = vmatpush2.bf16.msra.mxu0 0
    %2710 = vmatprep.subr.bf16.mxu0 0
    %2711 = vmatpush2.bf16.msra.mxu0 0
    %2712 = vmatprep.subr.bf16.mxu0 0
    %2713 = vmatpush2.bf16.msra.mxu0 0
    %2714 = vmatprep.subr.bf16.mxu0 0
    %2715 = vmatpush2.bf16.msra.mxu0 0
    %2716 = vmatprep.subr.bf16.mxu0 0
    %2717 = vmatpush2.bf16.msra.mxu0 0
    %2718 = vmatprep.subr.bf16.mxu0 0
    %2719 = vmatpush2.bf16.msra.mxu0 0
    %2720 = vmatprep.subr.bf16.mxu0 0
    %2721 = vmatpush2.bf16.msra.mxu0 0
    %2722 = vmatprep.subr.bf16.mxu0 0
    %2723 = vmatpush2.bf16.msra.mxu0 0
    %2724 = vmatprep.mubr.bf16.mxu0 0
    %2725 = vmatmul.mubr.bf16.gmra.mxu0 %v2687
    %v2726 = vpop.f32.mrf.mxu0
    %v2727 = vadd.f32 0.0, %v2726
    %v2728 = vpop.f32.mrf.mxu0
    %v2729 = vpop.f32.mrf.mxu0
    %v2730 = vpop.f32.mrf.mxu0
    %2731 = vdwg.mxu0
    %2732 = vrot.lane.b32.xlu0 %v202, 48
    %v2733 = vpop.permute.xlu0 %2732
    %v2735 = vsel %vm208, %v2536, 0
    %v2738 = vsel %vm686, %v2733, 0
    %2740 = vmatprep.subr.bf16.mxu0 0
    %2741 = vmatpush1.bf16.msra.mxu0 0
    %2742 = vmatprep.subr.bf16.mxu0 0
    %2743 = vmatpush1.bf16.msra.mxu0 0
    %2744 = vmatprep.subr.bf16.mxu0 0
    %2745 = vmatpush1.bf16.msra.mxu0 0
    %2746 = vmatprep.subr.bf16.mxu0 0
    %2747 = vmatpush1.bf16.msra.mxu0 0
    %2748 = vmatprep.subr.bf16.mxu0 0
    %2749 = vmatpush1.bf16.msra.mxu0 0
    %2750 = vmatprep.subr.bf16.mxu0 0
    %2751 = vmatpush1.bf16.msra.mxu0 0
    %2752 = vmatprep.subr.bf16.mxu0 0
    %2753 = vmatpush1.bf16.msra.mxu0 0
    %2754 = vmatprep.subr.bf16.mxu0 0
    %2755 = vmatpush1.bf16.msra.mxu0 %v2738
    %2756 = vmatprep.subr.bf16.mxu0 0
    %2757 = vmatpush2.bf16.msra.mxu0 0
    %2758 = vmatprep.subr.bf16.mxu0 0
    %2759 = vmatpush2.bf16.msra.mxu0 0
    %2760 = vmatprep.subr.bf16.mxu0 0
    %2761 = vmatpush2.bf16.msra.mxu0 0
    %2762 = vmatprep.subr.bf16.mxu0 0
    %2763 = vmatpush2.bf16.msra.mxu0 0
    %2764 = vmatprep.subr.bf16.mxu0 0
    %2765 = vmatpush2.bf16.msra.mxu0 0
    %2766 = vmatprep.subr.bf16.mxu0 0
    %2767 = vmatpush2.bf16.msra.mxu0 0
    %2768 = vmatprep.subr.bf16.mxu0 0
    %2769 = vmatpush2.bf16.msra.mxu0 0
    %2770 = vmatprep.subr.bf16.mxu0 0
    %2771 = vmatpush2.bf16.msra.mxu0 0
    %2772 = vmatprep.mubr.bf16.mxu0 0
    %2773 = vmatmul.mubr.bf16.gmra.mxu0 %v2735
    %v2774 = vpop.f32.mrf.mxu0
    %v2775 = vadd.f32 0.0, %v2774
    %v2776 = vpop.f32.mrf.mxu0
    %v2777 = vpop.f32.mrf.mxu0
    %v2778 = vpop.f32.mrf.mxu0
    %2779 = vdwg.mxu0
    %2780 = vrot.lane.b32.xlu0 %v203, 48
    %v2781 = vpop.permute.xlu0 %2780
    %v2783 = vsel %vm208, %v2537, 0
    %v2786 = vsel %vm686, %v2781, 0
    %2788 = vmatprep.subr.bf16.mxu0 0
    %2789 = vmatpush1.bf16.msra.mxu0 0
    %2790 = vmatprep.subr.bf16.mxu0 0
    %2791 = vmatpush1.bf16.msra.mxu0 0
    %2792 = vmatprep.subr.bf16.mxu0 0
    %2793 = vmatpush1.bf16.msra.mxu0 0
    %2794 = vmatprep.subr.bf16.mxu0 0
    %2795 = vmatpush1.bf16.msra.mxu0 0
    %2796 = vmatprep.subr.bf16.mxu0 0
    %2797 = vmatpush1.bf16.msra.mxu0 0
    %2798 = vmatprep.subr.bf16.mxu0 0
    %2799 = vmatpush1.bf16.msra.mxu0 0
    %2800 = vmatprep.subr.bf16.mxu0 0
    %2801 = vmatpush1.bf16.msra.mxu0 0
    %2802 = vmatprep.subr.bf16.mxu0 0
    %2803 = vmatpush1.bf16.msra.mxu0 %v2786
    %2804 = vmatprep.subr.bf16.mxu0 0
    %2805 = vmatpush2.bf16.msra.mxu0 0
    %2806 = vmatprep.subr.bf16.mxu0 0
    %2807 = vmatpush2.bf16.msra.mxu0 0
    %2808 = vmatprep.subr.bf16.mxu0 0
    %2809 = vmatpush2.bf16.msra.mxu0 0
    %2810 = vmatprep.subr.bf16.mxu0 0
    %2811 = vmatpush2.bf16.msra.mxu0 0
    %2812 = vmatprep.subr.bf16.mxu0 0
    %2813 = vmatpush2.bf16.msra.mxu0 0
    %2814 = vmatprep.subr.bf16.mxu0 0
    %2815 = vmatpush2.bf16.msra.mxu0 0
    %2816 = vmatprep.subr.bf16.mxu0 0
    %2817 = vmatpush2.bf16.msra.mxu0 0
    %2818 = vmatprep.subr.bf16.mxu0 0
    %2819 = vmatpush2.bf16.msra.mxu0 0
    %2820 = vmatprep.mubr.bf16.mxu0 0
    %2821 = vmatmul.mubr.bf16.gmra.mxu0 %v2783
    %v2822 = vpop.f32.mrf.mxu0
    %v2823 = vadd.f32 0.0, %v2822
    %v2824 = vpop.f32.mrf.mxu0
    %v2825 = vpop.f32.mrf.mxu0
    %v2826 = vpop.f32.mrf.mxu0
    %2827 = vdwg.mxu0
    %2828 = vrot.lane.b32.xlu0 %v204, 48
    %v2829 = vpop.permute.xlu0 %2828
    %v2831 = vsel %vm208, %v2538, 0
    %v2834 = vsel %vm686, %v2829, 0
    %2836 = vmatprep.subr.bf16.mxu0 0
    %2837 = vmatpush1.bf16.msra.mxu0 0
    %2838 = vmatprep.subr.bf16.mxu0 0
    %2839 = vmatpush1.bf16.msra.mxu0 0
    %2840 = vmatprep.subr.bf16.mxu0 0
    %2841 = vmatpush1.bf16.msra.mxu0 0
    %2842 = vmatprep.subr.bf16.mxu0 0
    %2843 = vmatpush1.bf16.msra.mxu0 0
    %2844 = vmatprep.subr.bf16.mxu0 0
    %2845 = vmatpush1.bf16.msra.mxu0 0
    %2846 = vmatprep.subr.bf16.mxu0 0
    %2847 = vmatpush1.bf16.msra.mxu0 0
    %2848 = vmatprep.subr.bf16.mxu0 0
    %2849 = vmatpush1.bf16.msra.mxu0 0
    %2850 = vmatprep.subr.bf16.mxu0 0
    %2851 = vmatpush1.bf16.msra.mxu0 %v2834
    %2852 = vmatprep.subr.bf16.mxu0 0
    %2853 = vmatpush2.bf16.msra.mxu0 0
    %2854 = vmatprep.subr.bf16.mxu0 0
    %2855 = vmatpush2.bf16.msra.mxu0 0
    %2856 = vmatprep.subr.bf16.mxu0 0
    %2857 = vmatpush2.bf16.msra.mxu0 0
    %2858 = vmatprep.subr.bf16.mxu0 0
    %2859 = vmatpush2.bf16.msra.mxu0 0
    %2860 = vmatprep.subr.bf16.mxu0 0
    %2861 = vmatpush2.bf16.msra.mxu0 0
    %2862 = vmatprep.subr.bf16.mxu0 0
    %2863 = vmatpush2.bf16.msra.mxu0 0
    %2864 = vmatprep.subr.bf16.mxu0 0
    %2865 = vmatpush2.bf16.msra.mxu0 0
    %2866 = vmatprep.subr.bf16.mxu0 0
    %2867 = vmatpush2.bf16.msra.mxu0 0
    %2868 = vmatprep.mubr.bf16.mxu0 0
    %2869 = vmatmul.mubr.bf16.gmra.mxu0 %v2831
    %v2870 = vpop.f32.mrf.mxu0
    %v2871 = vadd.f32 0.0, %v2870
    %v2872 = vpop.f32.mrf.mxu0
    %v2873 = vpop.f32.mrf.mxu0
    %v2874 = vpop.f32.mrf.mxu0
    %2875 = vdwg.mxu0
    %2876 = vrot.lane.b32.xlu0 %v205, 48
    %v2877 = vpop.permute.xlu0 %2876
    %v2879 = vsel %vm208, %v2539, 0
    %v2882 = vsel %vm686, %v2877, 0
    %2884 = vmatprep.subr.bf16.mxu0 0
    %2885 = vmatpush1.bf16.msra.mxu0 0
    %2886 = vmatprep.subr.bf16.mxu0 0
    %2887 = vmatpush1.bf16.msra.mxu0 0
    %2888 = vmatprep.subr.bf16.mxu0 0
    %2889 = vmatpush1.bf16.msra.mxu0 0
    %2890 = vmatprep.subr.bf16.mxu0 0
    %2891 = vmatpush1.bf16.msra.mxu0 0
    %2892 = vmatprep.subr.bf16.mxu0 0
    %2893 = vmatpush1.bf16.msra.mxu0 0
    %2894 = vmatprep.subr.bf16.mxu0 0
    %2895 = vmatpush1.bf16.msra.mxu0 0
    %2896 = vmatprep.subr.bf16.mxu0 0
    %2897 = vmatpush1.bf16.msra.mxu0 0
    %2898 = vmatprep.subr.bf16.mxu0 0
    %2899 = vmatpush1.bf16.msra.mxu0 %v2882
    %2900 = vmatprep.subr.bf16.mxu0 0
    %2901 = vmatpush2.bf16.msra.mxu0 0
    %2902 = vmatprep.subr.bf16.mxu0 0
    %2903 = vmatpush2.bf16.msra.mxu0 0
    %2904 = vmatprep.subr.bf16.mxu0 0
    %2905 = vmatpush2.bf16.msra.mxu0 0
    %2906 = vmatprep.subr.bf16.mxu0 0
    %2907 = vmatpush2.bf16.msra.mxu0 0
    %2908 = vmatprep.subr.bf16.mxu0 0
    %2909 = vmatpush2.bf16.msra.mxu0 0
    %2910 = vmatprep.subr.bf16.mxu0 0
    %2911 = vmatpush2.bf16.msra.mxu0 0
    %2912 = vmatprep.subr.bf16.mxu0 0
    %2913 = vmatpush2.bf16.msra.mxu0 0
    %2914 = vmatprep.subr.bf16.mxu0 0
    %2915 = vmatpush2.bf16.msra.mxu0 0
    %2916 = vmatprep.mubr.bf16.mxu0 0
    %2917 = vmatmul.mubr.bf16.gmra.mxu0 %v2879
    %v2918 = vpop.f32.mrf.mxu0
    %v2919 = vadd.f32 0.0, %v2918
    %v2920 = vpop.f32.mrf.mxu0
    %v2921 = vpop.f32.mrf.mxu0
    %v2922 = vpop.f32.mrf.mxu0
    %2923 = vdwg.mxu0
    %v2924 = vrcp.pop %v2510
    %v2925 = vrcp.pop %v2513
    %v2926 = vrcp.pop %v2516
    %v2927 = vrcp.pop %v2519
    %v2928 = vrcp.pop %v2522
    %v2929 = vrcp.pop %v2525
    %v2930 = vrcp.pop %v2528
    %v2931 = vrcp.pop %v2531
    %v2932 = vmul.f32 %v2583, %v2924
    %v2933 = vmul.f32 %v2631, %v2925
    %v2934 = vmul.f32 %v2679, %v2926
    %v2935 = vmul.f32 %v2727, %v2927
    %v2936 = vmul.f32 %v2775, %v2928
    %v2937 = vmul.f32 %v2823, %v2929
    %v2938 = vmul.f32 %v2871, %v2930
    %v2939 = vmul.f32 %v2919, %v2931
    %v2940 = vpack.c.bf16 %v2932, %v2932
    %v2941 = vpack.c.bf16 %v2933, %v2933
    %v2942 = vpack.c.bf16 %v2934, %v2934
    %v2943 = vpack.c.bf16 %v2935, %v2935
    %v2944 = vpack.c.bf16 %v2936, %v2936
    %v2945 = vpack.c.bf16 %v2937, %v2937
    %v2946 = vpack.c.bf16 %v2938, %v2938
    %v2947 = vpack.c.bf16 %v2939, %v2939
    %v2956 = vunpack.c.l.b16 %v2940
    %v2957 = vunpack.c.l.b16 %v2941
    %v2958 = vunpack.c.l.b16 %v2942
    %v2959 = vunpack.c.l.b16 %v2943
    %v2960 = vunpack.c.l.b16 %v2944
    %v2961 = vunpack.c.l.b16 %v2945
    %v2962 = vunpack.c.l.b16 %v2946
    %v2963 = vunpack.c.l.b16 %v2947
    %v2964 = vpack.c.b16 %v2956, %v2956
    %v2965 = vpack.c.b16 %v2957, %v2957
    %v2966 = vpack.c.b16 %v2958, %v2958
    %v2967 = vpack.c.b16 %v2959, %v2959
    %v2968 = vpack.c.b16 %v2960, %v2960
    %v2969 = vpack.c.b16 %v2961, %v2961
    %v2970 = vpack.c.b16 %v2962, %v2962
    %v2971 = vpack.c.b16 %v2963, %v2963
    %2972 = vrot.lane.b32.xlu0 %v2964, 16
    %v2973 = vpop.permute.xlu0 %2972
    %2974 = vrot.lane.b32.xlu0 %v2965, 16
    %v2975 = vpop.permute.xlu0 %2974
    %2976 = vrot.lane.b32.xlu0 %v2966, 16
    %v2977 = vpop.permute.xlu0 %2976
    %2978 = vrot.lane.b32.xlu0 %v2967, 16
    %v2979 = vpop.permute.xlu0 %2978
    %2980 = vrot.lane.b32.xlu0 %v2968, 16
    %v2981 = vpop.permute.xlu0 %2980
    %2982 = vrot.lane.b32.xlu0 %v2969, 16
    %v2983 = vpop.permute.xlu0 %2982
    %2984 = vrot.lane.b32.xlu0 %v2970, 16
    %v2985 = vpop.permute.xlu0 %2984
    %2986 = vrot.lane.b32.xlu0 %v2971, 16
    %v2987 = vpop.permute.xlu0 %2986
    %vm2996 = vcmask 191616
    %2997 = vst.msk [vmem:[#allocation2] sm:$0xf] %vm2996, %v2973
    %2998 = vst.msk [vmem:[#allocation2 + $0x4] sm:$0xf] %vm2996, %v2975
    %2999 = vst.msk [vmem:[#allocation2 + $0x8] sm:$0xf] %vm2996, %v2977
    %3000 = vst.msk [vmem:[#allocation2 + $0xc] sm:$0xf] %vm2996, %v2979
    %3001 = vst.msk [vmem:[#allocation2 + $0x10] sm:$0xf] %vm2996, %v2981
    %3002 = vst.msk [vmem:[#allocation2 + $0x14] sm:$0xf] %vm2996, %v2983
    %3003 = vst.msk [vmem:[#allocation2 + $0x18] sm:$0xf] %vm2996, %v2985
    %3004 = vst.msk [vmem:[#allocation2 + $0x1c] sm:$0xf] %vm2996, %v2987
    %3005 = vrot.lane.b32.xlu0 %v198, 104
    %v3006 = vpop.permute.xlu0 %3005
    %3007 = vrot.lane.b32.xlu0 %v198, 72
    %v3008 = vpop.permute.xlu0 %3007
    %v3010 = vsel %vm208, %v3006, 0
    %v3013 = vsel %vm208, %v3008, 0
    %3015 = vmatprep.subr.bf16.mxu0 0
    %3016 = vmatpush1.bf16.xpose.msra.mxu0 0
    %3017 = vmatprep.subr.bf16.mxu0 0
    %3018 = vmatpush1.bf16.xpose.msra.mxu0 0
    %3019 = vmatprep.subr.bf16.mxu0 0
    %3020 = vmatpush1.bf16.xpose.msra.mxu0 0
    %3021 = vmatprep.subr.bf16.mxu0 0
    %3022 = vmatpush1.bf16.xpose.msra.mxu0 0
    %3023 = vmatprep.subr.bf16.mxu0 0
    %3024 = vmatpush1.bf16.xpose.msra.mxu0 0
    %3025 = vmatprep.subr.bf16.mxu0 0
    %3026 = vmatpush1.bf16.xpose.msra.mxu0 0
    %3027 = vmatprep.subr.bf16.mxu0 0
    %3028 = vmatpush1.bf16.xpose.msra.mxu0 0
    %3029 = vmatprep.subr.bf16.mxu0 0
    %3030 = vmatpush1.bf16.xpose.msra.mxu0 %v3013
    %3031 = vmatprep.subr.bf16.mxu0 0
    %3032 = vmatpush2.bf16.xpose.msra.mxu0 0
    %3033 = vmatprep.subr.bf16.mxu0 0
    %3034 = vmatpush2.bf16.xpose.msra.mxu0 0
    %3035 = vmatprep.subr.bf16.mxu0 0
    %3036 = vmatpush2.bf16.xpose.msra.mxu0 0
    %3037 = vmatprep.subr.bf16.mxu0 0
    %3038 = vmatpush2.bf16.xpose.msra.mxu0 0
    %3039 = vmatprep.subr.bf16.mxu0 0
    %3040 = vmatpush2.bf16.xpose.msra.mxu0 0
    %3041 = vmatprep.subr.bf16.mxu0 0
    %3042 = vmatpush2.bf16.xpose.msra.mxu0 0
    %3043 = vmatprep.subr.bf16.mxu0 0
    %3044 = vmatpush2.bf16.xpose.msra.mxu0 0
    %3045 = vmatprep.subr.bf16.mxu0 0
    %3046 = vmatpush2.bf16.xpose.msra.mxu0 0
    %3047 = vmatprep.mubr.bf16.mxu0 0
    %3048 = vmatmul.mubr.bf16.gmra.mxu0 %v3010
    %v3049 = vpop.f32.mrf.mxu0
    %v3050 = vadd.f32 0.0, %v3049
    %v3051 = vpop.f32.mrf.mxu0
    %v3052 = vpop.f32.mrf.mxu0
    %v3053 = vpop.f32.mrf.mxu0
    %3054 = vdwg.mxu0
    %3055 = vrot.lane.b32.xlu0 %v199, 104
    %v3056 = vpop.permute.xlu0 %3055
    %3057 = vrot.lane.b32.xlu0 %v199, 72
    %v3058 = vpop.permute.xlu0 %3057
    %v3060 = vsel %vm208, %v3056, 0
    %v3063 = vsel %vm208, %v3058, 0
    %3065 = vmatprep.subr.bf16.mxu0 0
    %3066 = vmatpush1.bf16.xpose.msra.mxu0 0
    %3067 = vmatprep.subr.bf16.mxu0 0
    %3068 = vmatpush1.bf16.xpose.msra.mxu0 0
    %3069 = vmatprep.subr.bf16.mxu0 0
    %3070 = vmatpush1.bf16.xpose.msra.mxu0 0
    %3071 = vmatprep.subr.bf16.mxu0 0
    %3072 = vmatpush1.bf16.xpose.msra.mxu0 0
    %3073 = vmatprep.subr.bf16.mxu0 0
    %3074 = vmatpush1.bf16.xpose.msra.mxu0 0
    %3075 = vmatprep.subr.bf16.mxu0 0
    %3076 = vmatpush1.bf16.xpose.msra.mxu0 0
    %3077 = vmatprep.subr.bf16.mxu0 0
    %3078 = vmatpush1.bf16.xpose.msra.mxu0 0
    %3079 = vmatprep.subr.bf16.mxu0 0
    %3080 = vmatpush1.bf16.xpose.msra.mxu0 %v3063
    %3081 = vmatprep.subr.bf16.mxu0 0
    %3082 = vmatpush2.bf16.xpose.msra.mxu0 0
    %3083 = vmatprep.subr.bf16.mxu0 0
    %3084 = vmatpush2.bf16.xpose.msra.mxu0 0
    %3085 = vmatprep.subr.bf16.mxu0 0
    %3086 = vmatpush2.bf16.xpose.msra.mxu0 0
    %3087 = vmatprep.subr.bf16.mxu0 0
    %3088 = vmatpush2.bf16.xpose.msra.mxu0 0
    %3089 = vmatprep.subr.bf16.mxu0 0
    %3090 = vmatpush2.bf16.xpose.msra.mxu0 0
    %3091 = vmatprep.subr.bf16.mxu0 0
    %3092 = vmatpush2.bf16.xpose.msra.mxu0 0
    %3093 = vmatprep.subr.bf16.mxu0 0
    %3094 = vmatpush2.bf16.xpose.msra.mxu0 0
    %3095 = vmatprep.subr.bf16.mxu0 0
    %3096 = vmatpush2.bf16.xpose.msra.mxu0 0
    %3097 = vmatprep.mubr.bf16.mxu0 0
    %3098 = vmatmul.mubr.bf16.gmra.mxu0 %v3060
    %v3099 = vpop.f32.mrf.mxu0
    %v3100 = vadd.f32 0.0, %v3099
    %v3101 = vpop.f32.mrf.mxu0
    %v3102 = vpop.f32.mrf.mxu0
    %v3103 = vpop.f32.mrf.mxu0
    %3104 = vdwg.mxu0
    %3105 = vrot.lane.b32.xlu0 %v200, 104
    %v3106 = vpop.permute.xlu0 %3105
    %3107 = vrot.lane.b32.xlu0 %v200, 72
    %v3108 = vpop.permute.xlu0 %3107
    %v3110 = vsel %vm208, %v3106, 0
    %v3113 = vsel %vm208, %v3108, 0
    %3115 = vmatprep.subr.bf16.mxu0 0
    %3116 = vmatpush1.bf16.xpose.msra.mxu0 0
    %3117 = vmatprep.subr.bf16.mxu0 0
    %3118 = vmatpush1.bf16.xpose.msra.mxu0 0
    %3119 = vmatprep.subr.bf16.mxu0 0
    %3120 = vmatpush1.bf16.xpose.msra.mxu0 0
    %3121 = vmatprep.subr.bf16.mxu0 0
    %3122 = vmatpush1.bf16.xpose.msra.mxu0 0
    %3123 = vmatprep.subr.bf16.mxu0 0
    %3124 = vmatpush1.bf16.xpose.msra.mxu0 0
    %3125 = vmatprep.subr.bf16.mxu0 0
    %3126 = vmatpush1.bf16.xpose.msra.mxu0 0
    %3127 = vmatprep.subr.bf16.mxu0 0
    %3128 = vmatpush1.bf16.xpose.msra.mxu0 0
    %3129 = vmatprep.subr.bf16.mxu0 0
    %3130 = vmatpush1.bf16.xpose.msra.mxu0 %v3113
    %3131 = vmatprep.subr.bf16.mxu0 0
    %3132 = vmatpush2.bf16.xpose.msra.mxu0 0
    %3133 = vmatprep.subr.bf16.mxu0 0
    %3134 = vmatpush2.bf16.xpose.msra.mxu0 0
    %3135 = vmatprep.subr.bf16.mxu0 0
    %3136 = vmatpush2.bf16.xpose.msra.mxu0 0
    %3137 = vmatprep.subr.bf16.mxu0 0
    %3138 = vmatpush2.bf16.xpose.msra.mxu0 0
    %3139 = vmatprep.subr.bf16.mxu0 0
    %3140 = vmatpush2.bf16.xpose.msra.mxu0 0
    %3141 = vmatprep.subr.bf16.mxu0 0
    %3142 = vmatpush2.bf16.xpose.msra.mxu0 0
    %3143 = vmatprep.subr.bf16.mxu0 0
    %3144 = vmatpush2.bf16.xpose.msra.mxu0 0
    %3145 = vmatprep.subr.bf16.mxu0 0
    %3146 = vmatpush2.bf16.xpose.msra.mxu0 0
    %3147 = vmatprep.mubr.bf16.mxu0 0
    %3148 = vmatmul.mubr.bf16.gmra.mxu0 %v3110
    %v3149 = vpop.f32.mrf.mxu0
    %v3150 = vadd.f32 0.0, %v3149
    %v3151 = vpop.f32.mrf.mxu0
    %v3152 = vpop.f32.mrf.mxu0
    %v3153 = vpop.f32.mrf.mxu0
    %3154 = vdwg.mxu0
    %3155 = vrot.lane.b32.xlu0 %v201, 104
    %v3156 = vpop.permute.xlu0 %3155
    %3157 = vrot.lane.b32.xlu0 %v201, 72
    %v3158 = vpop.permute.xlu0 %3157
    %v3160 = vsel %vm208, %v3156, 0
    %v3163 = vsel %vm208, %v3158, 0
    %3165 = vmatprep.subr.bf16.mxu0 0
    %3166 = vmatpush1.bf16.xpose.msra.mxu0 0
    %3167 = vmatprep.subr.bf16.mxu0 0
    %3168 = vmatpush1.bf16.xpose.msra.mxu0 0
    %3169 = vmatprep.subr.bf16.mxu0 0
    %3170 = vmatpush1.bf16.xpose.msra.mxu0 0
    %3171 = vmatprep.subr.bf16.mxu0 0
    %3172 = vmatpush1.bf16.xpose.msra.mxu0 0
    %3173 = vmatprep.subr.bf16.mxu0 0
    %3174 = vmatpush1.bf16.xpose.msra.mxu0 0
    %3175 = vmatprep.subr.bf16.mxu0 0
    %3176 = vmatpush1.bf16.xpose.msra.mxu0 0
    %3177 = vmatprep.subr.bf16.mxu0 0
    %3178 = vmatpush1.bf16.xpose.msra.mxu0 0
    %3179 = vmatprep.subr.bf16.mxu0 0
    %3180 = vmatpush1.bf16.xpose.msra.mxu0 %v3163
    %3181 = vmatprep.subr.bf16.mxu0 0
    %3182 = vmatpush2.bf16.xpose.msra.mxu0 0
    %3183 = vmatprep.subr.bf16.mxu0 0
    %3184 = vmatpush2.bf16.xpose.msra.mxu0 0
    %3185 = vmatprep.subr.bf16.mxu0 0
    %3186 = vmatpush2.bf16.xpose.msra.mxu0 0
    %3187 = vmatprep.subr.bf16.mxu0 0
    %3188 = vmatpush2.bf16.xpose.msra.mxu0 0
    %3189 = vmatprep.subr.bf16.mxu0 0
    %3190 = vmatpush2.bf16.xpose.msra.mxu0 0
    %3191 = vmatprep.subr.bf16.mxu0 0
    %3192 = vmatpush2.bf16.xpose.msra.mxu0 0
    %3193 = vmatprep.subr.bf16.mxu0 0
    %3194 = vmatpush2.bf16.xpose.msra.mxu0 0
    %3195 = vmatprep.subr.bf16.mxu0 0
    %3196 = vmatpush2.bf16.xpose.msra.mxu0 0
    %3197 = vmatprep.mubr.bf16.mxu0 0
    %3198 = vmatmul.mubr.bf16.gmra.mxu0 %v3160
    %v3199 = vpop.f32.mrf.mxu0
    %v3200 = vadd.f32 0.0, %v3199
    %v3201 = vpop.f32.mrf.mxu0
    %v3202 = vpop.f32.mrf.mxu0
    %v3203 = vpop.f32.mrf.mxu0
    %3204 = vdwg.mxu0
    %3205 = vrot.lane.b32.xlu0 %v202, 104
    %v3206 = vpop.permute.xlu0 %3205
    %3207 = vrot.lane.b32.xlu0 %v202, 72
    %v3208 = vpop.permute.xlu0 %3207
    %v3210 = vsel %vm208, %v3206, 0
    %v3213 = vsel %vm208, %v3208, 0
    %3215 = vmatprep.subr.bf16.mxu0 0
    %3216 = vmatpush1.bf16.xpose.msra.mxu0 0
    %3217 = vmatprep.subr.bf16.mxu0 0
    %3218 = vmatpush1.bf16.xpose.msra.mxu0 0
    %3219 = vmatprep.subr.bf16.mxu0 0
    %3220 = vmatpush1.bf16.xpose.msra.mxu0 0
    %3221 = vmatprep.subr.bf16.mxu0 0
    %3222 = vmatpush1.bf16.xpose.msra.mxu0 0
    %3223 = vmatprep.subr.bf16.mxu0 0
    %3224 = vmatpush1.bf16.xpose.msra.mxu0 0
    %3225 = vmatprep.subr.bf16.mxu0 0
    %3226 = vmatpush1.bf16.xpose.msra.mxu0 0
    %3227 = vmatprep.subr.bf16.mxu0 0
    %3228 = vmatpush1.bf16.xpose.msra.mxu0 0
    %3229 = vmatprep.subr.bf16.mxu0 0
    %3230 = vmatpush1.bf16.xpose.msra.mxu0 %v3213
    %3231 = vmatprep.subr.bf16.mxu0 0
    %3232 = vmatpush2.bf16.xpose.msra.mxu0 0
    %3233 = vmatprep.subr.bf16.mxu0 0
    %3234 = vmatpush2.bf16.xpose.msra.mxu0 0
    %3235 = vmatprep.subr.bf16.mxu0 0
    %3236 = vmatpush2.bf16.xpose.msra.mxu0 0
    %3237 = vmatprep.subr.bf16.mxu0 0
    %3238 = vmatpush2.bf16.xpose.msra.mxu0 0
    %3239 = vmatprep.subr.bf16.mxu0 0
    %3240 = vmatpush2.bf16.xpose.msra.mxu0 0
    %3241 = vmatprep.subr.bf16.mxu0 0
    %3242 = vmatpush2.bf16.xpose.msra.mxu0 0
    %3243 = vmatprep.subr.bf16.mxu0 0
    %3244 = vmatpush2.bf16.xpose.msra.mxu0 0
    %3245 = vmatprep.subr.bf16.mxu0 0
    %3246 = vmatpush2.bf16.xpose.msra.mxu0 0
    %3247 = vmatprep.mubr.bf16.mxu0 0
    %3248 = vmatmul.mubr.bf16.gmra.mxu0 %v3210
    %v3249 = vpop.f32.mrf.mxu0
    %v3250 = vadd.f32 0.0, %v3249
    %v3251 = vpop.f32.mrf.mxu0
    %v3252 = vpop.f32.mrf.mxu0
    %v3253 = vpop.f32.mrf.mxu0
    %3254 = vdwg.mxu0
    %3255 = vrot.lane.b32.xlu0 %v203, 104
    %v3256 = vpop.permute.xlu0 %3255
    %3257 = vrot.lane.b32.xlu0 %v203, 72
    %v3258 = vpop.permute.xlu0 %3257
    %v3260 = vsel %vm208, %v3256, 0
    %v3263 = vsel %vm208, %v3258, 0
    %3265 = vmatprep.subr.bf16.mxu0 0
    %3266 = vmatpush1.bf16.xpose.msra.mxu0 0
    %3267 = vmatprep.subr.bf16.mxu0 0
    %3268 = vmatpush1.bf16.xpose.msra.mxu0 0
    %3269 = vmatprep.subr.bf16.mxu0 0
    %3270 = vmatpush1.bf16.xpose.msra.mxu0 0
    %3271 = vmatprep.subr.bf16.mxu0 0
    %3272 = vmatpush1.bf16.xpose.msra.mxu0 0
    %3273 = vmatprep.subr.bf16.mxu0 0
    %3274 = vmatpush1.bf16.xpose.msra.mxu0 0
    %3275 = vmatprep.subr.bf16.mxu0 0
    %3276 = vmatpush1.bf16.xpose.msra.mxu0 0
    %3277 = vmatprep.subr.bf16.mxu0 0
    %3278 = vmatpush1.bf16.xpose.msra.mxu0 0
    %3279 = vmatprep.subr.bf16.mxu0 0
    %3280 = vmatpush1.bf16.xpose.msra.mxu0 %v3263
    %3281 = vmatprep.subr.bf16.mxu0 0
    %3282 = vmatpush2.bf16.xpose.msra.mxu0 0
    %3283 = vmatprep.subr.bf16.mxu0 0
    %3284 = vmatpush2.bf16.xpose.msra.mxu0 0
    %3285 = vmatprep.subr.bf16.mxu0 0
    %3286 = vmatpush2.bf16.xpose.msra.mxu0 0
    %3287 = vmatprep.subr.bf16.mxu0 0
    %3288 = vmatpush2.bf16.xpose.msra.mxu0 0
    %3289 = vmatprep.subr.bf16.mxu0 0
    %3290 = vmatpush2.bf16.xpose.msra.mxu0 0
    %3291 = vmatprep.subr.bf16.mxu0 0
    %3292 = vmatpush2.bf16.xpose.msra.mxu0 0
    %3293 = vmatprep.subr.bf16.mxu0 0
    %3294 = vmatpush2.bf16.xpose.msra.mxu0 0
    %3295 = vmatprep.subr.bf16.mxu0 0
    %3296 = vmatpush2.bf16.xpose.msra.mxu0 0
    %3297 = vmatprep.mubr.bf16.mxu0 0
    %3298 = vmatmul.mubr.bf16.gmra.mxu0 %v3260
    %v3299 = vpop.f32.mrf.mxu0
    %v3300 = vadd.f32 0.0, %v3299
    %v3301 = vpop.f32.mrf.mxu0
    %v3302 = vpop.f32.mrf.mxu0
    %v3303 = vpop.f32.mrf.mxu0
    %3304 = vdwg.mxu0
    %3305 = vrot.lane.b32.xlu0 %v204, 104
    %v3306 = vpop.permute.xlu0 %3305
    %3307 = vrot.lane.b32.xlu0 %v204, 72
    %v3308 = vpop.permute.xlu0 %3307
    %v3310 = vsel %vm208, %v3306, 0
    %v3313 = vsel %vm208, %v3308, 0
    %3315 = vmatprep.subr.bf16.mxu0 0
    %3316 = vmatpush1.bf16.xpose.msra.mxu0 0
    %3317 = vmatprep.subr.bf16.mxu0 0
    %3318 = vmatpush1.bf16.xpose.msra.mxu0 0
    %3319 = vmatprep.subr.bf16.mxu0 0
    %3320 = vmatpush1.bf16.xpose.msra.mxu0 0
    %3321 = vmatprep.subr.bf16.mxu0 0
    %3322 = vmatpush1.bf16.xpose.msra.mxu0 0
    %3323 = vmatprep.subr.bf16.mxu0 0
    %3324 = vmatpush1.bf16.xpose.msra.mxu0 0
    %3325 = vmatprep.subr.bf16.mxu0 0
    %3326 = vmatpush1.bf16.xpose.msra.mxu0 0
    %3327 = vmatprep.subr.bf16.mxu0 0
    %3328 = vmatpush1.bf16.xpose.msra.mxu0 0
    %3329 = vmatprep.subr.bf16.mxu0 0
    %3330 = vmatpush1.bf16.xpose.msra.mxu0 %v3313
    %3331 = vmatprep.subr.bf16.mxu0 0
    %3332 = vmatpush2.bf16.xpose.msra.mxu0 0
    %3333 = vmatprep.subr.bf16.mxu0 0
    %3334 = vmatpush2.bf16.xpose.msra.mxu0 0
    %3335 = vmatprep.subr.bf16.mxu0 0
    %3336 = vmatpush2.bf16.xpose.msra.mxu0 0
    %3337 = vmatprep.subr.bf16.mxu0 0
    %3338 = vmatpush2.bf16.xpose.msra.mxu0 0
    %3339 = vmatprep.subr.bf16.mxu0 0
    %3340 = vmatpush2.bf16.xpose.msra.mxu0 0
    %3341 = vmatprep.subr.bf16.mxu0 0
    %3342 = vmatpush2.bf16.xpose.msra.mxu0 0
    %3343 = vmatprep.subr.bf16.mxu0 0
    %3344 = vmatpush2.bf16.xpose.msra.mxu0 0
    %3345 = vmatprep.subr.bf16.mxu0 0
    %3346 = vmatpush2.bf16.xpose.msra.mxu0 0
    %3347 = vmatprep.mubr.bf16.mxu0 0
    %3348 = vmatmul.mubr.bf16.gmra.mxu0 %v3310
    %v3349 = vpop.f32.mrf.mxu0
    %v3350 = vadd.f32 0.0, %v3349
    %v3351 = vpop.f32.mrf.mxu0
    %v3352 = vpop.f32.mrf.mxu0
    %v3353 = vpop.f32.mrf.mxu0
    %3354 = vdwg.mxu0
    %3355 = vrot.lane.b32.xlu0 %v205, 104
    %v3356 = vpop.permute.xlu0 %3355
    %3357 = vrot.lane.b32.xlu0 %v205, 72
    %v3358 = vpop.permute.xlu0 %3357
    %v3360 = vsel %vm208, %v3356, 0
    %v3363 = vsel %vm208, %v3358, 0
    %3365 = vmatprep.subr.bf16.mxu0 0
    %3366 = vmatpush1.bf16.xpose.msra.mxu0 0
    %3367 = vmatprep.subr.bf16.mxu0 0
    %3368 = vmatpush1.bf16.xpose.msra.mxu0 0
    %3369 = vmatprep.subr.bf16.mxu0 0
    %3370 = vmatpush1.bf16.xpose.msra.mxu0 0
    %3371 = vmatprep.subr.bf16.mxu0 0
    %3372 = vmatpush1.bf16.xpose.msra.mxu0 0
    %3373 = vmatprep.subr.bf16.mxu0 0
    %3374 = vmatpush1.bf16.xpose.msra.mxu0 0
    %3375 = vmatprep.subr.bf16.mxu0 0
    %3376 = vmatpush1.bf16.xpose.msra.mxu0 0
    %3377 = vmatprep.subr.bf16.mxu0 0
    %3378 = vmatpush1.bf16.xpose.msra.mxu0 0
    %3379 = vmatprep.subr.bf16.mxu0 0
    %3380 = vmatpush1.bf16.xpose.msra.mxu0 %v3363
    %3381 = vmatprep.subr.bf16.mxu0 0
    %3382 = vmatpush2.bf16.xpose.msra.mxu0 0
    %3383 = vmatprep.subr.bf16.mxu0 0
    %3384 = vmatpush2.bf16.xpose.msra.mxu0 0
    %3385 = vmatprep.subr.bf16.mxu0 0
    %3386 = vmatpush2.bf16.xpose.msra.mxu0 0
    %3387 = vmatprep.subr.bf16.mxu0 0
    %3388 = vmatpush2.bf16.xpose.msra.mxu0 0
    %3389 = vmatprep.subr.bf16.mxu0 0
    %3390 = vmatpush2.bf16.xpose.msra.mxu0 0
    %3391 = vmatprep.subr.bf16.mxu0 0
    %3392 = vmatpush2.bf16.xpose.msra.mxu0 0
    %3393 = vmatprep.subr.bf16.mxu0 0
    %3394 = vmatpush2.bf16.xpose.msra.mxu0 0
    %3395 = vmatprep.subr.bf16.mxu0 0
    %3396 = vmatpush2.bf16.xpose.msra.mxu0 0
    %3397 = vmatprep.mubr.bf16.mxu0 0
    %3398 = vmatmul.mubr.bf16.gmra.mxu0 %v3360
    %v3399 = vpop.f32.mrf.mxu0
    %v3400 = vadd.f32 0.0, %v3399
    %v3401 = vpop.f32.mrf.mxu0
    %v3402 = vpop.f32.mrf.mxu0
    %v3403 = vpop.f32.mrf.mxu0
    %3404 = vdwg.mxu0
    %v3405 = vsel %vm592, %v3050, -1e+30
    %v3406 = vsel %vm592, %v3100, -1e+30
    %v3407 = vsel %vm592, %v3150, -1e+30
    %v3408 = vsel %vm592, %v3200, -1e+30
    %v3409 = vsel %vm592, %v3250, -1e+30
    %v3410 = vsel %vm592, %v3300, -1e+30
    %v3411 = vsel %vm592, %v3350, -1e+30
    %v3412 = vsel %vm592, %v3400, -1e+30
    %v3413 = vsel %vm208, %v3405, -inf
    %3414 = vmax.xlane.f32.xlu0 %v3413
    %v3415 = vpop.xlane.xlu0 %3414
    %v3416 = vsel %vm208, %v3406, -inf
    %3417 = vmax.xlane.f32.xlu0 %v3416
    %v3418 = vpop.xlane.xlu0 %3417
    %v3419 = vsel %vm208, %v3407, -inf
    %3420 = vmax.xlane.f32.xlu0 %v3419
    %v3421 = vpop.xlane.xlu0 %3420
    %v3422 = vsel %vm208, %v3408, -inf
    %3423 = vmax.xlane.f32.xlu0 %v3422
    %v3424 = vpop.xlane.xlu0 %3423
    %v3425 = vsel %vm208, %v3409, -inf
    %3426 = vmax.xlane.f32.xlu0 %v3425
    %v3427 = vpop.xlane.xlu0 %3426
    %v3428 = vsel %vm208, %v3410, -inf
    %3429 = vmax.xlane.f32.xlu0 %v3428
    %v3430 = vpop.xlane.xlu0 %3429
    %v3431 = vsel %vm208, %v3411, -inf
    %3432 = vmax.xlane.f32.xlu0 %v3431
    %v3433 = vpop.xlane.xlu0 %3432
    %v3434 = vsel %vm208, %v3412, -inf
    %3435 = vmax.xlane.f32.xlu0 %v3434
    %v3436 = vpop.xlane.xlu0 %3435
    %v3437 = vsub.f32 %v3405, %v3415
    %v3438 = vsub.f32 %v3406, %v3418
    %v3439 = vsub.f32 %v3407, %v3421
    %v3440 = vsub.f32 %v3408, %v3424
    %v3441 = vsub.f32 %v3409, %v3427
    %v3442 = vsub.f32 %v3410, %v3430
    %v3443 = vsub.f32 %v3411, %v3433
    %v3444 = vsub.f32 %v3412, %v3436
    %v3445 = vmul.f32 %v3437, 1.442695
    %v3446 = vpow.pop %v3445
    %v3447 = vmul.f32 %v3438, 1.442695
    %v3448 = vpow.pop %v3447
    %v3449 = vmul.f32 %v3439, 1.442695
    %v3450 = vpow.pop %v3449
    %v3451 = vmul.f32 %v3440, 1.442695
    %v3452 = vpow.pop %v3451
    %v3453 = vmul.f32 %v3441, 1.442695
    %v3454 = vpow.pop %v3453
    %v3455 = vmul.f32 %v3442, 1.442695
    %v3456 = vpow.pop %v3455
    %v3457 = vmul.f32 %v3443, 1.442695
    %v3458 = vpow.pop %v3457
    %v3459 = vmul.f32 %v3444, 1.442695
    %v3460 = vpow.pop %v3459
    %v3461 = vsel %vm208, %v3446, 0.0
    %3462 = vadd.xlane.f32.xlu0 %v3461
    %v3463 = vpop.xlane.xlu0 %3462
    %v3464 = vsel %vm208, %v3448, 0.0
    %3465 = vadd.xlane.f32.xlu0 %v3464
    %v3466 = vpop.xlane.xlu0 %3465
    %v3467 = vsel %vm208, %v3450, 0.0
    %3468 = vadd.xlane.f32.xlu0 %v3467
    %v3469 = vpop.xlane.xlu0 %3468
    %v3470 = vsel %vm208, %v3452, 0.0
    %3471 = vadd.xlane.f32.xlu0 %v3470
    %v3472 = vpop.xlane.xlu0 %3471
    %v3473 = vsel %vm208, %v3454, 0.0
    %3474 = vadd.xlane.f32.xlu0 %v3473
    %v3475 = vpop.xlane.xlu0 %3474
    %v3476 = vsel %vm208, %v3456, 0.0
    %3477 = vadd.xlane.f32.xlu0 %v3476
    %v3478 = vpop.xlane.xlu0 %3477
    %v3479 = vsel %vm208, %v3458, 0.0
    %3480 = vadd.xlane.f32.xlu0 %v3479
    %v3481 = vpop.xlane.xlu0 %3480
    %v3482 = vsel %vm208, %v3460, 0.0
    %3483 = vadd.xlane.f32.xlu0 %v3482
    %v3484 = vpop.xlane.xlu0 %3483
    %v3485 = vpack.c.bf16 %v3446, %v3446
    %v3486 = vpack.c.bf16 %v3448, %v3448
    %v3487 = vpack.c.bf16 %v3450, %v3450
    %v3488 = vpack.c.bf16 %v3452, %v3452
    %v3489 = vpack.c.bf16 %v3454, %v3454
    %v3490 = vpack.c.bf16 %v3456, %v3456
    %v3491 = vpack.c.bf16 %v3458, %v3458
    %v3492 = vpack.c.bf16 %v3460, %v3460
    %3493 = vrot.lane.b32.xlu0 %v198, 40
    %v3494 = vpop.permute.xlu0 %3493
    %v3496 = vsel %vm208, %v3485, 0
    %v3499 = vsel %vm686, %v3494, 0
    %3501 = vmatprep.subr.bf16.mxu0 0
    %3502 = vmatpush1.bf16.msra.mxu0 0
    %3503 = vmatprep.subr.bf16.mxu0 0
    %3504 = vmatpush1.bf16.msra.mxu0 0
    %3505 = vmatprep.subr.bf16.mxu0 0
    %3506 = vmatpush1.bf16.msra.mxu0 0
    %3507 = vmatprep.subr.bf16.mxu0 0
    %3508 = vmatpush1.bf16.msra.mxu0 0
    %3509 = vmatprep.subr.bf16.mxu0 0
    %3510 = vmatpush1.bf16.msra.mxu0 0
    %3511 = vmatprep.subr.bf16.mxu0 0
    %3512 = vmatpush1.bf16.msra.mxu0 0
    %3513 = vmatprep.subr.bf16.mxu0 0
    %3514 = vmatpush1.bf16.msra.mxu0 0
    %3515 = vmatprep.subr.bf16.mxu0 0
    %3516 = vmatpush1.bf16.msra.mxu0 %v3499
    %3517 = vmatprep.subr.bf16.mxu0 0
    %3518 = vmatpush2.bf16.msra.mxu0 0
    %3519 = vmatprep.subr.bf16.mxu0 0
    %3520 = vmatpush2.bf16.msra.mxu0 0
    %3521 = vmatprep.subr.bf16.mxu0 0
    %3522 = vmatpush2.bf16.msra.mxu0 0
    %3523 = vmatprep.subr.bf16.mxu0 0
    %3524 = vmatpush2.bf16.msra.mxu0 0
    %3525 = vmatprep.subr.bf16.mxu0 0
    %3526 = vmatpush2.bf16.msra.mxu0 0
    %3527 = vmatprep.subr.bf16.mxu0 0
    %3528 = vmatpush2.bf16.msra.mxu0 0
    %3529 = vmatprep.subr.bf16.mxu0 0
    %3530 = vmatpush2.bf16.msra.mxu0 0
    %3531 = vmatprep.subr.bf16.mxu0 0
    %3532 = vmatpush2.bf16.msra.mxu0 0
    %3533 = vmatprep.mubr.bf16.mxu0 0
    %3534 = vmatmul.mubr.bf16.gmra.mxu0 %v3496
    %v3535 = vpop.f32.mrf.mxu0
    %v3536 = vadd.f32 0.0, %v3535
    %v3537 = vpop.f32.mrf.mxu0
    %v3538 = vpop.f32.mrf.mxu0
    %v3539 = vpop.f32.mrf.mxu0
    %3540 = vdwg.mxu0
    %3541 = vrot.lane.b32.xlu0 %v199, 40
    %v3542 = vpop.permute.xlu0 %3541
    %v3544 = vsel %vm208, %v3486, 0
    %v3547 = vsel %vm686, %v3542, 0
    %3549 = vmatprep.subr.bf16.mxu0 0
    %3550 = vmatpush1.bf16.msra.mxu0 0
    %3551 = vmatprep.subr.bf16.mxu0 0
    %3552 = vmatpush1.bf16.msra.mxu0 0
    %3553 = vmatprep.subr.bf16.mxu0 0
    %3554 = vmatpush1.bf16.msra.mxu0 0
    %3555 = vmatprep.subr.bf16.mxu0 0
    %3556 = vmatpush1.bf16.msra.mxu0 0
    %3557 = vmatprep.subr.bf16.mxu0 0
    %3558 = vmatpush1.bf16.msra.mxu0 0
    %3559 = vmatprep.subr.bf16.mxu0 0
    %3560 = vmatpush1.bf16.msra.mxu0 0
    %3561 = vmatprep.subr.bf16.mxu0 0
    %3562 = vmatpush1.bf16.msra.mxu0 0
    %3563 = vmatprep.subr.bf16.mxu0 0
    %3564 = vmatpush1.bf16.msra.mxu0 %v3547
    %3565 = vmatprep.subr.bf16.mxu0 0
    %3566 = vmatpush2.bf16.msra.mxu0 0
    %3567 = vmatprep.subr.bf16.mxu0 0
    %3568 = vmatpush2.bf16.msra.mxu0 0
    %3569 = vmatprep.subr.bf16.mxu0 0
    %3570 = vmatpush2.bf16.msra.mxu0 0
    %3571 = vmatprep.subr.bf16.mxu0 0
    %3572 = vmatpush2.bf16.msra.mxu0 0
    %3573 = vmatprep.subr.bf16.mxu0 0
    %3574 = vmatpush2.bf16.msra.mxu0 0
    %3575 = vmatprep.subr.bf16.mxu0 0
    %3576 = vmatpush2.bf16.msra.mxu0 0
    %3577 = vmatprep.subr.bf16.mxu0 0
    %3578 = vmatpush2.bf16.msra.mxu0 0
    %3579 = vmatprep.subr.bf16.mxu0 0
    %3580 = vmatpush2.bf16.msra.mxu0 0
    %3581 = vmatprep.mubr.bf16.mxu0 0
    %3582 = vmatmul.mubr.bf16.gmra.mxu0 %v3544
    %v3583 = vpop.f32.mrf.mxu0
    %v3584 = vadd.f32 0.0, %v3583
    %v3585 = vpop.f32.mrf.mxu0
    %v3586 = vpop.f32.mrf.mxu0
    %v3587 = vpop.f32.mrf.mxu0
    %3588 = vdwg.mxu0
    %3589 = vrot.lane.b32.xlu0 %v200, 40
    %v3590 = vpop.permute.xlu0 %3589
    %v3592 = vsel %vm208, %v3487, 0
    %v3595 = vsel %vm686, %v3590, 0
    %3597 = vmatprep.subr.bf16.mxu0 0
    %3598 = vmatpush1.bf16.msra.mxu0 0
    %3599 = vmatprep.subr.bf16.mxu0 0
    %3600 = vmatpush1.bf16.msra.mxu0 0
    %3601 = vmatprep.subr.bf16.mxu0 0
    %3602 = vmatpush1.bf16.msra.mxu0 0
    %3603 = vmatprep.subr.bf16.mxu0 0
    %3604 = vmatpush1.bf16.msra.mxu0 0
    %3605 = vmatprep.subr.bf16.mxu0 0
    %3606 = vmatpush1.bf16.msra.mxu0 0
    %3607 = vmatprep.subr.bf16.mxu0 0
    %3608 = vmatpush1.bf16.msra.mxu0 0
    %3609 = vmatprep.subr.bf16.mxu0 0
    %3610 = vmatpush1.bf16.msra.mxu0 0
    %3611 = vmatprep.subr.bf16.mxu0 0
    %3612 = vmatpush1.bf16.msra.mxu0 %v3595
    %3613 = vmatprep.subr.bf16.mxu0 0
    %3614 = vmatpush2.bf16.msra.mxu0 0
    %3615 = vmatprep.subr.bf16.mxu0 0
    %3616 = vmatpush2.bf16.msra.mxu0 0
    %3617 = vmatprep.subr.bf16.mxu0 0
    %3618 = vmatpush2.bf16.msra.mxu0 0
    %3619 = vmatprep.subr.bf16.mxu0 0
    %3620 = vmatpush2.bf16.msra.mxu0 0
    %3621 = vmatprep.subr.bf16.mxu0 0
    %3622 = vmatpush2.bf16.msra.mxu0 0
    %3623 = vmatprep.subr.bf16.mxu0 0
    %3624 = vmatpush2.bf16.msra.mxu0 0
    %3625 = vmatprep.subr.bf16.mxu0 0
    %3626 = vmatpush2.bf16.msra.mxu0 0
    %3627 = vmatprep.subr.bf16.mxu0 0
    %3628 = vmatpush2.bf16.msra.mxu0 0
    %3629 = vmatprep.mubr.bf16.mxu0 0
    %3630 = vmatmul.mubr.bf16.gmra.mxu0 %v3592
    %v3631 = vpop.f32.mrf.mxu0
    %v3632 = vadd.f32 0.0, %v3631
    %v3633 = vpop.f32.mrf.mxu0
    %v3634 = vpop.f32.mrf.mxu0
    %v3635 = vpop.f32.mrf.mxu0
    %3636 = vdwg.mxu0
    %3637 = vrot.lane.b32.xlu0 %v201, 40
    %v3638 = vpop.permute.xlu0 %3637
    %v3640 = vsel %vm208, %v3488, 0
    %v3643 = vsel %vm686, %v3638, 0
    %3645 = vmatprep.subr.bf16.mxu0 0
    %3646 = vmatpush1.bf16.msra.mxu0 0
    %3647 = vmatprep.subr.bf16.mxu0 0
    %3648 = vmatpush1.bf16.msra.mxu0 0
    %3649 = vmatprep.subr.bf16.mxu0 0
    %3650 = vmatpush1.bf16.msra.mxu0 0
    %3651 = vmatprep.subr.bf16.mxu0 0
    %3652 = vmatpush1.bf16.msra.mxu0 0
    %3653 = vmatprep.subr.bf16.mxu0 0
    %3654 = vmatpush1.bf16.msra.mxu0 0
    %3655 = vmatprep.subr.bf16.mxu0 0
    %3656 = vmatpush1.bf16.msra.mxu0 0
    %3657 = vmatprep.subr.bf16.mxu0 0
    %3658 = vmatpush1.bf16.msra.mxu0 0
    %3659 = vmatprep.subr.bf16.mxu0 0
    %3660 = vmatpush1.bf16.msra.mxu0 %v3643
    %3661 = vmatprep.subr.bf16.mxu0 0
    %3662 = vmatpush2.bf16.msra.mxu0 0
    %3663 = vmatprep.subr.bf16.mxu0 0
    %3664 = vmatpush2.bf16.msra.mxu0 0
    %3665 = vmatprep.subr.bf16.mxu0 0
    %3666 = vmatpush2.bf16.msra.mxu0 0
    %3667 = vmatprep.subr.bf16.mxu0 0
    %3668 = vmatpush2.bf16.msra.mxu0 0
    %3669 = vmatprep.subr.bf16.mxu0 0
    %3670 = vmatpush2.bf16.msra.mxu0 0
    %3671 = vmatprep.subr.bf16.mxu0 0
    %3672 = vmatpush2.bf16.msra.mxu0 0
    %3673 = vmatprep.subr.bf16.mxu0 0
    %3674 = vmatpush2.bf16.msra.mxu0 0
    %3675 = vmatprep.subr.bf16.mxu0 0
    %3676 = vmatpush2.bf16.msra.mxu0 0
    %3677 = vmatprep.mubr.bf16.mxu0 0
    %3678 = vmatmul.mubr.bf16.gmra.mxu0 %v3640
    %v3679 = vpop.f32.mrf.mxu0
    %v3680 = vadd.f32 0.0, %v3679
    %v3681 = vpop.f32.mrf.mxu0
    %v3682 = vpop.f32.mrf.mxu0
    %v3683 = vpop.f32.mrf.mxu0
    %3684 = vdwg.mxu0
    %3685 = vrot.lane.b32.xlu0 %v202, 40
    %v3686 = vpop.permute.xlu0 %3685
    %v3688 = vsel %vm208, %v3489, 0
    %v3691 = vsel %vm686, %v3686, 0
    %3693 = vmatprep.subr.bf16.mxu0 0
    %3694 = vmatpush1.bf16.msra.mxu0 0
    %3695 = vmatprep.subr.bf16.mxu0 0
    %3696 = vmatpush1.bf16.msra.mxu0 0
    %3697 = vmatprep.subr.bf16.mxu0 0
    %3698 = vmatpush1.bf16.msra.mxu0 0
    %3699 = vmatprep.subr.bf16.mxu0 0
    %3700 = vmatpush1.bf16.msra.mxu0 0
    %3701 = vmatprep.subr.bf16.mxu0 0
    %3702 = vmatpush1.bf16.msra.mxu0 0
    %3703 = vmatprep.subr.bf16.mxu0 0
    %3704 = vmatpush1.bf16.msra.mxu0 0
    %3705 = vmatprep.subr.bf16.mxu0 0
    %3706 = vmatpush1.bf16.msra.mxu0 0
    %3707 = vmatprep.subr.bf16.mxu0 0
    %3708 = vmatpush1.bf16.msra.mxu0 %v3691
    %3709 = vmatprep.subr.bf16.mxu0 0
    %3710 = vmatpush2.bf16.msra.mxu0 0
    %3711 = vmatprep.subr.bf16.mxu0 0
    %3712 = vmatpush2.bf16.msra.mxu0 0
    %3713 = vmatprep.subr.bf16.mxu0 0
    %3714 = vmatpush2.bf16.msra.mxu0 0
    %3715 = vmatprep.subr.bf16.mxu0 0
    %3716 = vmatpush2.bf16.msra.mxu0 0
    %3717 = vmatprep.subr.bf16.mxu0 0
    %3718 = vmatpush2.bf16.msra.mxu0 0
    %3719 = vmatprep.subr.bf16.mxu0 0
    %3720 = vmatpush2.bf16.msra.mxu0 0
    %3721 = vmatprep.subr.bf16.mxu0 0
    %3722 = vmatpush2.bf16.msra.mxu0 0
    %3723 = vmatprep.subr.bf16.mxu0 0
    %3724 = vmatpush2.bf16.msra.mxu0 0
    %3725 = vmatprep.mubr.bf16.mxu0 0
    %3726 = vmatmul.mubr.bf16.gmra.mxu0 %v3688
    %v3727 = vpop.f32.mrf.mxu0
    %v3728 = vadd.f32 0.0, %v3727
    %v3729 = vpop.f32.mrf.mxu0
    %v3730 = vpop.f32.mrf.mxu0
    %v3731 = vpop.f32.mrf.mxu0
    %3732 = vdwg.mxu0
    %3733 = vrot.lane.b32.xlu0 %v203, 40
    %v3734 = vpop.permute.xlu0 %3733
    %v3736 = vsel %vm208, %v3490, 0
    %v3739 = vsel %vm686, %v3734, 0
    %3741 = vmatprep.subr.bf16.mxu0 0
    %3742 = vmatpush1.bf16.msra.mxu0 0
    %3743 = vmatprep.subr.bf16.mxu0 0
    %3744 = vmatpush1.bf16.msra.mxu0 0
    %3745 = vmatprep.subr.bf16.mxu0 0
    %3746 = vmatpush1.bf16.msra.mxu0 0
    %3747 = vmatprep.subr.bf16.mxu0 0
    %3748 = vmatpush1.bf16.msra.mxu0 0
    %3749 = vmatprep.subr.bf16.mxu0 0
    %3750 = vmatpush1.bf16.msra.mxu0 0
    %3751 = vmatprep.subr.bf16.mxu0 0
    %3752 = vmatpush1.bf16.msra.mxu0 0
    %3753 = vmatprep.subr.bf16.mxu0 0
    %3754 = vmatpush1.bf16.msra.mxu0 0
    %3755 = vmatprep.subr.bf16.mxu0 0
    %3756 = vmatpush1.bf16.msra.mxu0 %v3739
    %3757 = vmatprep.subr.bf16.mxu0 0
    %3758 = vmatpush2.bf16.msra.mxu0 0
    %3759 = vmatprep.subr.bf16.mxu0 0
    %3760 = vmatpush2.bf16.msra.mxu0 0
    %3761 = vmatprep.subr.bf16.mxu0 0
    %3762 = vmatpush2.bf16.msra.mxu0 0
    %3763 = vmatprep.subr.bf16.mxu0 0
    %3764 = vmatpush2.bf16.msra.mxu0 0
    %3765 = vmatprep.subr.bf16.mxu0 0
    %3766 = vmatpush2.bf16.msra.mxu0 0
    %3767 = vmatprep.subr.bf16.mxu0 0
    %3768 = vmatpush2.bf16.msra.mxu0 0
    %3769 = vmatprep.subr.bf16.mxu0 0
    %3770 = vmatpush2.bf16.msra.mxu0 0
    %3771 = vmatprep.subr.bf16.mxu0 0
    %3772 = vmatpush2.bf16.msra.mxu0 0
    %3773 = vmatprep.mubr.bf16.mxu0 0
    %3774 = vmatmul.mubr.bf16.gmra.mxu0 %v3736
    %v3775 = vpop.f32.mrf.mxu0
    %v3776 = vadd.f32 0.0, %v3775
    %v3777 = vpop.f32.mrf.mxu0
    %v3778 = vpop.f32.mrf.mxu0
    %v3779 = vpop.f32.mrf.mxu0
    %3780 = vdwg.mxu0
    %3781 = vrot.lane.b32.xlu0 %v204, 40
    %v3782 = vpop.permute.xlu0 %3781
    %v3784 = vsel %vm208, %v3491, 0
    %v3787 = vsel %vm686, %v3782, 0
    %3789 = vmatprep.subr.bf16.mxu0 0
    %3790 = vmatpush1.bf16.msra.mxu0 0
    %3791 = vmatprep.subr.bf16.mxu0 0
    %3792 = vmatpush1.bf16.msra.mxu0 0
    %3793 = vmatprep.subr.bf16.mxu0 0
    %3794 = vmatpush1.bf16.msra.mxu0 0
    %3795 = vmatprep.subr.bf16.mxu0 0
    %3796 = vmatpush1.bf16.msra.mxu0 0
    %3797 = vmatprep.subr.bf16.mxu0 0
    %3798 = vmatpush1.bf16.msra.mxu0 0
    %3799 = vmatprep.subr.bf16.mxu0 0
    %3800 = vmatpush1.bf16.msra.mxu0 0
    %3801 = vmatprep.subr.bf16.mxu0 0
    %3802 = vmatpush1.bf16.msra.mxu0 0
    %3803 = vmatprep.subr.bf16.mxu0 0
    %3804 = vmatpush1.bf16.msra.mxu0 %v3787
    %3805 = vmatprep.subr.bf16.mxu0 0
    %3806 = vmatpush2.bf16.msra.mxu0 0
    %3807 = vmatprep.subr.bf16.mxu0 0
    %3808 = vmatpush2.bf16.msra.mxu0 0
    %3809 = vmatprep.subr.bf16.mxu0 0
    %3810 = vmatpush2.bf16.msra.mxu0 0
    %3811 = vmatprep.subr.bf16.mxu0 0
    %3812 = vmatpush2.bf16.msra.mxu0 0
    %3813 = vmatprep.subr.bf16.mxu0 0
    %3814 = vmatpush2.bf16.msra.mxu0 0
    %3815 = vmatprep.subr.bf16.mxu0 0
    %3816 = vmatpush2.bf16.msra.mxu0 0
    %3817 = vmatprep.subr.bf16.mxu0 0
    %3818 = vmatpush2.bf16.msra.mxu0 0
    %3819 = vmatprep.subr.bf16.mxu0 0
    %3820 = vmatpush2.bf16.msra.mxu0 0
    %3821 = vmatprep.mubr.bf16.mxu0 0
    %3822 = vmatmul.mubr.bf16.gmra.mxu0 %v3784
    %v3823 = vpop.f32.mrf.mxu0
    %v3824 = vadd.f32 0.0, %v3823
    %v3825 = vpop.f32.mrf.mxu0
    %v3826 = vpop.f32.mrf.mxu0
    %v3827 = vpop.f32.mrf.mxu0
    %3828 = vdwg.mxu0
    %3829 = vrot.lane.b32.xlu0 %v205, 40
    %v3830 = vpop.permute.xlu0 %3829
    %v3832 = vsel %vm208, %v3492, 0
    %v3835 = vsel %vm686, %v3830, 0
    %3837 = vmatprep.subr.bf16.mxu0 0
    %3838 = vmatpush1.bf16.msra.mxu0 0
    %3839 = vmatprep.subr.bf16.mxu0 0
    %3840 = vmatpush1.bf16.msra.mxu0 0
    %3841 = vmatprep.subr.bf16.mxu0 0
    %3842 = vmatpush1.bf16.msra.mxu0 0
    %3843 = vmatprep.subr.bf16.mxu0 0
    %3844 = vmatpush1.bf16.msra.mxu0 0
    %3845 = vmatprep.subr.bf16.mxu0 0
    %3846 = vmatpush1.bf16.msra.mxu0 0
    %3847 = vmatprep.subr.bf16.mxu0 0
    %3848 = vmatpush1.bf16.msra.mxu0 0
    %3849 = vmatprep.subr.bf16.mxu0 0
    %3850 = vmatpush1.bf16.msra.mxu0 0
    %3851 = vmatprep.subr.bf16.mxu0 0
    %3852 = vmatpush1.bf16.msra.mxu0 %v3835
    %3853 = vmatprep.subr.bf16.mxu0 0
    %3854 = vmatpush2.bf16.msra.mxu0 0
    %3855 = vmatprep.subr.bf16.mxu0 0
    %3856 = vmatpush2.bf16.msra.mxu0 0
    %3857 = vmatprep.subr.bf16.mxu0 0
    %3858 = vmatpush2.bf16.msra.mxu0 0
    %3859 = vmatprep.subr.bf16.mxu0 0
    %3860 = vmatpush2.bf16.msra.mxu0 0
    %3861 = vmatprep.subr.bf16.mxu0 0
    %3862 = vmatpush2.bf16.msra.mxu0 0
    %3863 = vmatprep.subr.bf16.mxu0 0
    %3864 = vmatpush2.bf16.msra.mxu0 0
    %3865 = vmatprep.subr.bf16.mxu0 0
    %3866 = vmatpush2.bf16.msra.mxu0 0
    %3867 = vmatprep.subr.bf16.mxu0 0
    %3868 = vmatpush2.bf16.msra.mxu0 0
    %3869 = vmatprep.mubr.bf16.mxu0 0
    %3870 = vmatmul.mubr.bf16.gmra.mxu0 %v3832
    %v3871 = vpop.f32.mrf.mxu0
    %v3872 = vadd.f32 0.0, %v3871
    %v3873 = vpop.f32.mrf.mxu0
    %v3874 = vpop.f32.mrf.mxu0
    %v3875 = vpop.f32.mrf.mxu0
    %3876 = vdwg.mxu0
    %v3877 = vrcp.pop %v3463
    %v3878 = vrcp.pop %v3466
    %v3879 = vrcp.pop %v3469
    %v3880 = vrcp.pop %v3472
    %v3881 = vrcp.pop %v3475
    %v3882 = vrcp.pop %v3478
    %v3883 = vrcp.pop %v3481
    %v3884 = vrcp.pop %v3484
    %v3885 = vmul.f32 %v3536, %v3877
    %v3886 = vmul.f32 %v3584, %v3878
    %v3887 = vmul.f32 %v3632, %v3879
    %v3888 = vmul.f32 %v3680, %v3880
    %v3889 = vmul.f32 %v3728, %v3881
    %v3890 = vmul.f32 %v3776, %v3882
    %v3891 = vmul.f32 %v3824, %v3883
    %v3892 = vmul.f32 %v3872, %v3884
    %v3893 = vpack.c.bf16 %v3885, %v3885
    %v3894 = vpack.c.bf16 %v3886, %v3886
    %v3895 = vpack.c.bf16 %v3887, %v3887
    %v3896 = vpack.c.bf16 %v3888, %v3888
    %v3897 = vpack.c.bf16 %v3889, %v3889
    %v3898 = vpack.c.bf16 %v3890, %v3890
    %v3899 = vpack.c.bf16 %v3891, %v3891
    %v3900 = vpack.c.bf16 %v3892, %v3892
    %v3909 = vunpack.c.l.b16 %v3893
    %v3910 = vunpack.c.l.b16 %v3894
    %v3911 = vunpack.c.l.b16 %v3895
    %v3912 = vunpack.c.l.b16 %v3896
    %v3913 = vunpack.c.l.b16 %v3897
    %v3914 = vunpack.c.l.b16 %v3898
    %v3915 = vunpack.c.l.b16 %v3899
    %v3916 = vunpack.c.l.b16 %v3900
    %v3917 = vpack.c.b16 %v3909, %v3909
    %v3918 = vpack.c.b16 %v3910, %v3910
    %v3919 = vpack.c.b16 %v3911, %v3911
    %v3920 = vpack.c.b16 %v3912, %v3912
    %v3921 = vpack.c.b16 %v3913, %v3913
    %v3922 = vpack.c.b16 %v3914, %v3914
    %v3923 = vpack.c.b16 %v3915, %v3915
    %v3924 = vpack.c.b16 %v3916, %v3916
    %3925 = vrot.lane.b32.xlu0 %v3917, 24
    %v3926 = vpop.permute.xlu0 %3925
    %3927 = vrot.lane.b32.xlu0 %v3918, 24
    %v3928 = vpop.permute.xlu0 %3927
    %3929 = vrot.lane.b32.xlu0 %v3919, 24
    %v3930 = vpop.permute.xlu0 %3929
    %3931 = vrot.lane.b32.xlu0 %v3920, 24
    %v3932 = vpop.permute.xlu0 %3931
    %3933 = vrot.lane.b32.xlu0 %v3921, 24
    %v3934 = vpop.permute.xlu0 %3933
    %3935 = vrot.lane.b32.xlu0 %v3922, 24
    %v3936 = vpop.permute.xlu0 %3935
    %3937 = vrot.lane.b32.xlu0 %v3923, 24
    %v3938 = vpop.permute.xlu0 %3937
    %3939 = vrot.lane.b32.xlu0 %v3924, 24
    %v3940 = vpop.permute.xlu0 %3939
    %vm3949 = vcmask 257216
    %3950 = vst.msk [vmem:[#allocation2] sm:$0xf] %vm3949, %v3926
    %3951 = vst.msk [vmem:[#allocation2 + $0x4] sm:$0xf] %vm3949, %v3928
    %3952 = vst.msk [vmem:[#allocation2 + $0x8] sm:$0xf] %vm3949, %v3930
    %3953 = vst.msk [vmem:[#allocation2 + $0xc] sm:$0xf] %vm3949, %v3932
    %3954 = vst.msk [vmem:[#allocation2 + $0x10] sm:$0xf] %vm3949, %v3934
    %3955 = vst.msk [vmem:[#allocation2 + $0x14] sm:$0xf] %vm3949, %v3936
    %3956 = vst.msk [vmem:[#allocation2 + $0x18] sm:$0xf] %vm3949, %v3938
    %3957 = vst.msk [vmem:[#allocation2 + $0x1c] sm:$0xf] %vm3949, %v3940
    %v3958 = vld [vmem:[#allocation2] sm:$0xf]
    %v3959 = vld [vmem:[#allocation2 + $0x4] sm:$0xf]
    %v3960 = vld [vmem:[#allocation2 + $0x8] sm:$0xf]
    %v3961 = vld [vmem:[#allocation2 + $0xc] sm:$0xf]
    %v3962 = vld [vmem:[#allocation2 + $0x10] sm:$0xf]
    %v3963 = vld [vmem:[#allocation2 + $0x14] sm:$0xf]
    %v3964 = vld [vmem:[#allocation2 + $0x18] sm:$0xf]
    %v3965 = vld [vmem:[#allocation2 + $0x1c] sm:$0xf]
    %v3966 = vld [vmem:[#allocation8] sm:$0xf]
    %v3967 = vld [vmem:[#allocation8 + $0x4] sm:$0xf]
    %v3968 = vld [vmem:[#allocation8 + $0x8] sm:$0xf]
    %v3969 = vld [vmem:[#allocation8 + $0xc] sm:$0xf]
    %v3978 = vunpack.c.l.b16 %v3958
    %v3979 = vunpack.c.l.b16 %v3959
    %v3980 = vunpack.c.l.b16 %v3960
    %v3981 = vunpack.c.l.b16 %v3961
    %v3982 = vunpack.c.l.b16 %v3962
    %v3983 = vunpack.c.l.b16 %v3963
    %v3984 = vunpack.c.l.b16 %v3964
    %v3985 = vunpack.c.l.b16 %v3965
    %v3986 = vpack.c.b16 %v3979, %v3978
    %v3987 = vpack.c.b16 %v3981, %v3980
    %v3988 = vpack.c.b16 %v3983, %v3982
    %v3989 = vpack.c.b16 %v3985, %v3984
    %v3994 = vunpack.c.l.b16 %v3966
    %v3995 = vunpack.c.l.b16 %v3967
    %v3996 = vunpack.c.l.b16 %v3968
    %v3997 = vunpack.c.l.b16 %v3969
    %v3998 = vpack.c.b16 %v3995, %v3994
    %v3999 = vpack.c.b16 %v3997, %v3996
    %v4003 = vsel %vm101, %v3986, 0
    %v4006 = vsel %vm101, %v3987, 0
    %v4009 = vsel %vm101, %v3988, 0
    %v4012 = vsel %vm101, %v3989, 0
    %4014 = vmatprep.subr.bf16.mxu0 0
    %4015 = vmatpush1.bf16.msra.mxu0 0
    %4016 = vmatprep.subr.bf16.mxu0 0
    %4017 = vmatpush1.bf16.msra.mxu0 0
    %4018 = vmatprep.subr.bf16.mxu0 0
    %4019 = vmatpush1.bf16.msra.mxu0 0
    %4020 = vmatprep.subr.bf16.mxu0 0
    %4021 = vmatpush1.bf16.msra.mxu0 0
    %4022 = vmatprep.subr.bf16.mxu0 0
    %4023 = vmatpush1.bf16.msra.mxu0 0
    %4024 = vmatprep.subr.bf16.mxu0 0
    %4025 = vmatpush1.bf16.msra.mxu0 0
    %4026 = vmatprep.subr.bf16.mxu0 0
    %4027 = vmatpush1.bf16.msra.mxu0 %v3999
    %4028 = vmatprep.subr.bf16.mxu0 0
    %4029 = vmatpush1.bf16.msra.mxu0 %v3998
    %4030 = vmatprep.subr.bf16.mxu0 0
    %4031 = vmatpush2.bf16.msra.mxu0 0
    %4032 = vmatprep.subr.bf16.mxu0 0
    %4033 = vmatpush2.bf16.msra.mxu0 0
    %4034 = vmatprep.subr.bf16.mxu0 0
    %4035 = vmatpush2.bf16.msra.mxu0 0
    %4036 = vmatprep.subr.bf16.mxu0 0
    %4037 = vmatpush2.bf16.msra.mxu0 0
    %4038 = vmatprep.subr.bf16.mxu0 0
    %4039 = vmatpush2.bf16.msra.mxu0 0
    %4040 = vmatprep.subr.bf16.mxu0 0
    %4041 = vmatpush2.bf16.msra.mxu0 0
    %4042 = vmatprep.subr.bf16.mxu0 0
    %4043 = vmatpush2.bf16.msra.mxu0 0
    %4044 = vmatprep.subr.bf16.mxu0 0
    %4045 = vmatpush2.bf16.msra.mxu0 0
    %4046 = vmatprep.mubr.bf16.mxu0 0
    %4047 = vmatmul.mubr.bf16.gmra.mxu0 %v4003
    %v4048 = vpop.f32.mrf.mxu0
    %v4049 = vadd.f32 0.0, %v4048
    %v4050 = vpop.f32.mrf.mxu0
    %v4051 = vpop.f32.mrf.mxu0
    %v4052 = vadd.f32 0.0, %v4051
    %v4053 = vpop.f32.mrf.mxu0
    %4054 = vmatprep.mubr.bf16.mxu0 0
    %4055 = vmatmul.mubr.bf16.gmra.mxu0 %v4006
    %v4056 = vpop.f32.mrf.mxu0
    %v4057 = vadd.f32 0.0, %v4056
    %v4058 = vpop.f32.mrf.mxu0
    %v4059 = vpop.f32.mrf.mxu0
    %v4060 = vadd.f32 0.0, %v4059
    %v4061 = vpop.f32.mrf.mxu0
    %4062 = vmatprep.mubr.bf16.mxu0 0
    %4063 = vmatmul.mubr.bf16.gmra.mxu0 %v4009
    %v4064 = vpop.f32.mrf.mxu0
    %v4065 = vadd.f32 0.0, %v4064
    %v4066 = vpop.f32.mrf.mxu0
    %v4067 = vpop.f32.mrf.mxu0
    %v4068 = vadd.f32 0.0, %v4067
    %v4069 = vpop.f32.mrf.mxu0
    %4070 = vmatprep.mubr.bf16.mxu0 0
    %4071 = vmatmul.mubr.bf16.gmra.mxu0 %v4012
    %v4072 = vpop.f32.mrf.mxu0
    %v4073 = vadd.f32 0.0, %v4072
    %v4074 = vpop.f32.mrf.mxu0
    %v4075 = vpop.f32.mrf.mxu0
    %v4076 = vadd.f32 0.0, %v4075
    %v4077 = vpop.f32.mrf.mxu0
    %4078 = vdwg.mxu0
    %v4079 = vpack.c.bf16 %v4052, %v4049
    %v4080 = vpack.c.bf16 %v4060, %v4057
    %v4081 = vpack.c.bf16 %v4068, %v4065
    %v4082 = vpack.c.bf16 %v4076, %v4073
    %v4087 = vunpack.c.l.b16 %v4079
    %v4088 = vunpack.c.h.b16 %v4079
    %v4089 = vunpack.c.l.b16 %v4080
    %v4090 = vunpack.c.h.b16 %v4080
    %v4091 = vunpack.c.l.b16 %v4081
    %v4092 = vunpack.c.h.b16 %v4081
    %v4093 = vunpack.c.l.b16 %v4082
    %v4094 = vunpack.c.h.b16 %v4082
    %v4095 = vpack.c.b16 %v4087, %v4087
    %v4096 = vpack.c.b16 %v4088, %v4088
    %v4097 = vpack.c.b16 %v4089, %v4089
    %v4098 = vpack.c.b16 %v4090, %v4090
    %v4099 = vpack.c.b16 %v4091, %v4091
    %v4100 = vpack.c.b16 %v4092, %v4092
    %v4101 = vpack.c.b16 %v4093, %v4093
    %v4102 = vpack.c.b16 %v4094, %v4094
    %vm4111 = vcmask 257024
    %4112 = vst.msk [vmem:[#allocation9] sm:$0xf] %vm4111, %v4095
    %4113 = vst.msk [vmem:[#allocation9 + $0x4] sm:$0xf] %vm4111, %v4096
    %4114 = vst.msk [vmem:[#allocation9 + $0x8] sm:$0xf] %vm4111, %v4097
    %4115 = vst.msk [vmem:[#allocation9 + $0xc] sm:$0xf] %vm4111, %v4098
    %4116 = vst.msk [vmem:[#allocation9 + $0x10] sm:$0xf] %vm4111, %v4099
    %4117 = vst.msk [vmem:[#allocation9 + $0x14] sm:$0xf] %vm4111, %v4100
    %4118 = vst.msk [vmem:[#allocation9 + $0x18] sm:$0xf] %vm4111, %v4101
    %4119 = vst.msk [vmem:[#allocation9 + $0x1c] sm:$0xf] %vm4111, %v4102
    // Predicated region
    $region26: #{tpu_custom_call.1} parent=1 // pred_check
      _
    $region27: #{tpu_custom_call.1} parent=1 // pred_check_branch
      %4121 = sbr.rel (0) target = $region29
    $region28: #{tpu_custom_call.1} parent=1 // pred_region
      %s4123 = ssub.s32 512, 512
      %4124 = vsyncadd [#allocation5], %s4123
      %s4125 = sshll.u32 [#allocation9], 4
      %s4126 = int_to_ptr.vmem [resolvable:$true] %s4125
      %4131 = dma.vmem_to_hbm [thread:$0]  %s4126, 512, %s3, [#allocation5], 64, 64, 4
    $region29: #{tpu_custom_call.1} parent=1 // pred_fallthru
      _
    // Predicated region
    $region30: #{tpu_custom_call.1} parent=1 // pred_check
      _
    $region31: #{tpu_custom_call.1} parent=1 // pred_check_branch
      %4133 = sbr.rel (0) target = $region33
    $region32: #{tpu_custom_call.1} parent=1 // pred_region
      %4134 = dma.done [#allocation5], 512
    $region33: #{tpu_custom_call.1} parent=1 // pred_fallthru
      _
    %4135 = vsyncpa [#allocation4], 1
    %4136 = vsyncpa [#allocation7], 1
    %4137 = vsyncpa [#allocation5], 1

</llo_original>
